<compile_context>
chip_gen: v6e
topology: v6e:2x2x1
jax: 0.10.0
libtpu: 0.0.40
codegen_flags: <defaults>
</compile_context>

<pallas_src>
import functools

import jax
import jax.numpy as jnp
from jax.experimental import pallas as pl
from jax.experimental.pallas import tpu as pltpu


# ----------------------------------------------------------------------------
# Small helpers: padding / per-gate weight packing.
# ----------------------------------------------------------------------------
def _round_up(x, m):
    return ((x + m - 1) // m) * m


def _pick_tile(dim, cap):
    """Tile size that always satisfies the (8,128)/full-dim BlockSpec rule."""
    if dim <= cap:
        return dim
    if dim % cap == 0:
        return cap
    return dim  # fall back to full dim (always legal; fine at these sizes)


def _pack_gate_matrix(w, hidden, hidden_p, din, din_p):
    """w: (4*hidden, din) PyTorch layout -> (din_p, 4*hidden_p).

    Each gate block is padded to `hidden_p` lanes so gate slices inside the
    kernel land on 128-lane boundaries.  Padded rows/cols are zero.
    """
    w4 = w.reshape(4, hidden, din)
    w4 = jnp.pad(w4, ((0, 0), (0, hidden_p - hidden), (0, din_p - din)))
    return jnp.transpose(w4.reshape(4 * hidden_p, din_p))


def _pack_gate_bias(b_ih, b_hh, hidden, hidden_p):
    b = (b_ih + b_hh).reshape(4, hidden)
    b = jnp.pad(b, ((0, 0), (0, hidden_p - hidden)))
    return b.reshape(4 * hidden_p)


# ----------------------------------------------------------------------------
# Tiled matmul + bias kernel (input projections and decoder).
# ----------------------------------------------------------------------------
def _linear_kernel(x_ref, w_ref, b_ref, o_ref, acc_ref):
    @pl.when(pl.program_id(2) == 0)
    def _():
        acc_ref[...] = jnp.zeros_like(acc_ref)

    acc_ref[...] += jnp.dot(x_ref[...], w_ref[...],
                            preferred_element_type=jnp.float32)

    @pl.when(pl.program_id(2) == pl.num_programs(2) - 1)
    def _():
        o_ref[...] = (acc_ref[...] + b_ref[...]).astype(o_ref.dtype)


def linear(x, w_t, b, *, tm_cap=256, tn_cap=256, tk_cap=512):
    """x: (M, K) f32; w_t: (K, N) f32; b: (N,) f32 -> (M, N) f32."""
    M, K = x.shape
    _, N = w_t.shape
    tm = _pick_tile(M, tm_cap)
    tn = _pick_tile(N, tn_cap)
    tk = _pick_tile(K, tk_cap)
    b2 = b.reshape(1, N)
    return pl.pallas_call(
        _linear_kernel,
        out_shape=jax.ShapeDtypeStruct((M, N), jnp.float32),
        grid_spec=pltpu.PrefetchScalarGridSpec(
            num_scalar_prefetch=0,
            grid=(M // tm, N // tn, K // tk),
            in_specs=[
                pl.BlockSpec((tm, tk), lambda i, j, k: (i, k)),
                pl.BlockSpec((tk, tn), lambda i, j, k: (k, j)),
                pl.BlockSpec((1, tn), lambda i, j, k: (0, j)),
            ],
            out_specs=pl.BlockSpec((tm, tn), lambda i, j, k: (i, j)),
            scratch_shapes=[pltpu.VMEM((tm, tn), jnp.float32)],
        ),
        compiler_params=pltpu.CompilerParams(
            dimension_semantics=("parallel", "parallel", "arbitrary")),
    )(x, w_t, b2)


# ----------------------------------------------------------------------------
# LSTM recurrence kernel: gates_x precomputed; only h @ Whh inside the loop.
# Grid over time blocks of Tt steps; h/c carried in vregs within a block and
# in the grid-resident hn/cn output blocks across blocks.
# ----------------------------------------------------------------------------
def _lstm_recurrent_kernel(gx_ref, h0_ref, c0_ref, whh_ref,
                           out_ref, hn_ref, cn_ref, *, seq_len, padded_len):
    tb = pl.program_id(0)
    time_block = gx_ref.shape[0]
    hp = hn_ref.shape[-1]
    ragged = padded_len != seq_len  # static Python bool

    @pl.when(tb == 0)
    def _():
        hn_ref[...] = h0_ref[...]
        cn_ref[...] = c0_ref[...]

    whh = whh_ref[...]           # (Hp, 4*Hp), hoisted out of the time loop
    h = hn_ref[...]              # (Bp, Hp)
    c = cn_ref[...]              # (Bp, Hp)

    # Statically unrolled time-block loop (equivalent to fori_loop unroll=True):
    # h/c stay in vregs; only one hn/cn store per grid step.
    for i in range(time_block):
        gates = gx_ref[i] + jnp.dot(h, whh, preferred_element_type=jnp.float32)
        # lane-aligned 128-wide gate slices (PyTorch order i, f, g, o)
        i_g = jax.nn.sigmoid(gates[:, 0 * hp:1 * hp])
        f_g = jax.nn.sigmoid(gates[:, 1 * hp:2 * hp])
        g_g = jnp.tanh(gates[:, 2 * hp:3 * hp])
        o_g = jax.nn.sigmoid(gates[:, 3 * hp:4 * hp])
        c_new = f_g * c + i_g * g_g
        h_new = o_g * jnp.tanh(c_new)
        if ragged:
            valid = (tb * time_block + i) < seq_len
            h_new = jnp.where(valid, h_new, h)
            c_new = jnp.where(valid, c_new, c)
        out_ref[i] = h_new       # staged in the VMEM output block
        h, c = h_new, c_new

    hn_ref[...] = h
    cn_ref[...] = c


def lstm_recurrence(gx, h0p, c0p, whh_packed, seq_len, time_block):
    """gx: (S_pad, Bp, 4*Hp) precomputed input gates (incl. bias).
    Returns (out (S_pad,Bp,Hp), h_n (Bp,Hp), c_n (Bp,Hp))."""
    s_pad, bp, g = gx.shape
    hp = g // 4
    kernel = functools.partial(_lstm_recurrent_kernel,
                               seq_len=seq_len, padded_len=s_pad)
    out, h_n, c_n = pl.pallas_call(
        kernel,
        out_shape=(
            jax.ShapeDtypeStruct((s_pad, bp, hp), jnp.float32),
            jax.ShapeDtypeStruct((bp, hp), jnp.float32),
            jax.ShapeDtypeStruct((bp, hp), jnp.float32),
        ),
        grid_spec=pltpu.PrefetchScalarGridSpec(
            num_scalar_prefetch=0,
            grid=(s_pad // time_block,),
            in_specs=[
                pl.BlockSpec((time_block, bp, g), lambda t: (t, 0, 0)),
                pl.BlockSpec((bp, hp), lambda t: (0, 0)),
                pl.BlockSpec((bp, hp), lambda t: (0, 0)),
                pl.BlockSpec((hp, g), lambda t: (0, 0)),
            ],
            out_specs=[
                pl.BlockSpec((time_block, bp, hp), lambda t: (t, 0, 0)),
                pl.BlockSpec((bp, hp), lambda t: (0, 0)),
                pl.BlockSpec((bp, hp), lambda t: (0, 0)),
            ],
        ),
        compiler_params=pltpu.CompilerParams(
            dimension_semantics=("arbitrary",)),
    )(gx, h0p, c0p, whh_packed)
    return out, h_n, c_n


# ----------------------------------------------------------------------------
# Full RNN forward (embedding lookup + reshapes/padding are plain-JAX glue).
# ----------------------------------------------------------------------------
@jax.jit
def rnn_forward(input_seq, h0, c0, params):
    # Embedding lookup (gather) -- glue.
    emb = jnp.take(params["embedding"], input_seq, axis=0)   # (B, S, E) f32
    B, S, E = emb.shape
    L, _, H = h0.shape

    Bp = _round_up(B, 8)          # sublane tile
    Hp = _round_up(H, 128)        # lane tile
    Tt = min(S, 16)               # timesteps per grid step
    S_pad = _round_up(S, Tt)

    x = jnp.transpose(emb, (1, 0, 2))                          # (S, B, E)
    x = jnp.pad(x, ((0, S_pad - S), (0, Bp - B), (0, 0)))      # (S_pad, Bp, E)

    h0p = jnp.pad(h0, ((0, 0), (0, Bp - B), (0, Hp - H)))      # (L, Bp, Hp)
    c0p = jnp.pad(c0, ((0, 0), (0, Bp - B), (0, Hp - H)))

    h_finals, c_finals = [], []
    for layer in range(L):
        w_ih = params[f"w_ih_l{layer}"]                        # (4H, Din)
        w_hh = params[f"w_hh_l{layer}"]                        # (4H, H)
        din = w_ih.shape[1]
        din_p = x.shape[-1]                                    # E (l0) / Hp (l>0)
        wih_packed = _pack_gate_matrix(w_ih, H, Hp, din, din_p)  # (din_p, 4Hp)
        whh_packed = _pack_gate_matrix(w_hh, H, Hp, H, Hp)       # (Hp, 4Hp)
        bias_packed = _pack_gate_bias(params[f"b_ih_l{layer}"],
                                      params[f"b_hh_l{layer}"], H, Hp)

        # (1) hoisted input projection: one big MXU matmul over all timesteps.
        gx = linear(x.reshape(S_pad * Bp, din_p), wih_packed, bias_packed)
        gx = gx.reshape(S_pad, Bp, 4 * Hp)

        # (2) recurrence: only h @ Whh per step, Tt steps per grid iteration.
        x, h_n, c_n = lstm_recurrence(gx, h0p[layer], c0p[layer],
                                      whh_packed, S, Tt)
        h_finals.append(h_n[:B, :H])
        c_finals.append(c_n[:B, :H])

    out = x[:S, :B, :H]                                        # (S, B, H)
    out_bf = jnp.transpose(out, (1, 0, 2)).reshape(B * S, H)   # (B*S, H)

    logits = linear(out_bf, jnp.transpose(params["w_dec"]), params["b_dec"])
    logits = logits.reshape(B, S, -1)
    return logits, (jnp.stack(h_finals), jnp.stack(c_finals))


# ----------------------------------------------------------------------------
# Pure-JAX reference (for correctness check of the Pallas kernels).
# ----------------------------------------------------------------------------
def _ref_forward(input_seq, h0, c0, params):
    emb = jnp.take(params["embedding"], input_seq, axis=0)
    x = jnp.transpose(emb, (1, 0, 2))     # (S, B, E)
    num_layers = h0.shape[0]
    h_fin, c_fin = [], []
    for layer in range(num_layers):
        w_ih = params[f"w_ih_l{layer}"]
        w_hh = params[f"w_hh_l{layer}"]
        b = params[f"b_ih_l{layer}"] + params[f"b_hh_l{layer}"]
        H = w_hh.shape[1]

        def step(carry, x_t):
            h, c = carry
            gates = x_t @ w_ih.T + h @ w_hh.T + b
            i_g = jax.nn.sigmoid(gates[:, 0 * H:1 * H])
            f_g = jax.nn.sigmoid(gates[:, 1 * H:2 * H])
            g_g = jnp.tanh(gates[:, 2 * H:3 * H])
            o_g = jax.nn.sigmoid(gates[:, 3 * H:4 * H])
            c_new = f_g * c + i_g * g_g
            h_new = o_g * jnp.tanh(c_new)
            return (h_new, c_new), h_new

        (h_n, c_n), x = jax.lax.scan(step, (h0[layer], c0[layer]), x)
        h_fin.append(h_n)
        c_fin.append(c_n)
    out_bf = jnp.transpose(x, (1, 0, 2))
    logits = out_bf @ params["w_dec"].T + params["b_dec"]
    return logits, (jnp.stack(h_fin), jnp.stack(c_fin))


# ----------------------------------------------------------------------------
# Deterministic parameter construction (PyTorch-style init, synthetic).
# ----------------------------------------------------------------------------
def make_params(key, input_size, output_size, hidden_size, num_layers):
    k = 1.0 / jnp.sqrt(hidden_size)
    params = {}
    keys = jax.random.split(key, 3 + 4 * num_layers)
    params["embedding"] = jax.random.normal(
        keys[0], (input_size, input_size), jnp.float32)
    idx = 1
    for layer in range(num_layers):
        din = input_size if layer == 0 else hidden_size
        params[f"w_ih_l{layer}"] = jax.random.uniform(
            keys[idx], (4 * hidden_size, din), jnp.float32, -k, k); idx += 1
        params[f"w_hh_l{layer}"] = jax.random.uniform(
            keys[idx], (4 * hidden_size, hidden_size), jnp.float32, -k, k); idx += 1
        params[f"b_ih_l{layer}"] = jax.random.uniform(
            keys[idx], (4 * hidden_size,), jnp.float32, -k, k); idx += 1
        params[f"b_hh_l{layer}"] = jax.random.uniform(
            keys[idx], (4 * hidden_size,), jnp.float32, -k, k); idx += 1
    params["w_dec"] = jax.random.uniform(
        keys[idx], (output_size, hidden_size), jnp.float32, -k, k); idx += 1
    params["b_dec"] = jax.random.uniform(
        keys[idx], (output_size,), jnp.float32, -k, k)
    return params


if __name__ == "__main__":
    # Small shapes consistent with the module: vocab=16, hidden=32, 2 layers.
    INPUT_SIZE = 16      # vocab / embedding dim
    OUTPUT_SIZE = 16
    HIDDEN_SIZE = 32
    NUM_LAYERS = 2
    BATCH = 2
    SEQ = 8

    root = jax.random.PRNGKey(0)
    k_par, k_seq, k_h, k_c = jax.random.split(root, 4)

    params = make_params(k_par, INPUT_SIZE, OUTPUT_SIZE, HIDDEN_SIZE, NUM_LAYERS)
    input_seq = jax.random.randint(k_seq, (BATCH, SEQ), 0, INPUT_SIZE, jnp.int32)
    h0 = jax.random.normal(k_h, (NUM_LAYERS, BATCH, HIDDEN_SIZE), jnp.float32)
    c0 = jax.random.normal(k_c, (NUM_LAYERS, BATCH, HIDDEN_SIZE), jnp.float32)

    logits, (h_n, c_n) = rnn_forward(input_seq, h0, c0, params)
    jax.block_until_ready((logits, h_n, c_n))

    # Correctness vs. pure-JAX reference.
    ref_logits, (ref_h, ref_c) = _ref_forward(input_seq, h0, c0, params)
    assert logits.shape == (BATCH, SEQ, OUTPUT_SIZE)
    assert h_n.shape == (NUM_LAYERS, BATCH, HIDDEN_SIZE)
    assert c_n.shape == (NUM_LAYERS, BATCH, HIDDEN_SIZE)
    assert jnp.allclose(logits, ref_logits, atol=1e-4, rtol=1e-4)
    assert jnp.allclose(h_n, ref_h, atol=1e-4, rtol=1e-4)
    assert jnp.allclose(c_n, ref_c, atol=1e-4, rtol=1e-4)

    print("KERNEL_OK")
</pallas_src>

<mosaic_0001>
module attributes {stable_mosaic.version = 11 : i64} {
  func.func @_linear_kernel(%arg0: i32, %arg1: i32, %arg2: i32, %arg3: memref<64x16xf32, #tpu.memory_space<vmem>>, %arg4: memref<16x256xf32, #tpu.memory_space<vmem>>, %arg5: memref<1x256xf32, #tpu.memory_space<vmem>>, %arg6: memref<64x256xf32, #tpu.memory_space<vmem>>, %arg7: memref<64x256xf32, #tpu.memory_space<vmem>>) attributes {dimension_semantics = [#tpu.dimension_semantics<parallel>, #tpu.dimension_semantics<parallel>, #tpu.dimension_semantics<arbitrary>], iteration_bounds = array<i64: 1, 2, 1>, scalar_prefetch = 0 : i64, scratch_operands = 1 : i64, tpu.core_type = #tpu.core_type<tc>, window_params = [{transform_indices = @transform_0, window_bounds = array<i64: 64, 16>}, {transform_indices = @transform_1, window_bounds = array<i64: 16, 256>}, {transform_indices = @transform_2, window_bounds = array<i64: 1, 256>}, {transform_indices = @transform_3, window_bounds = array<i64: 64, 256>}]} {
    %c0_i32 = arith.constant 0 : i32
    %0 = arith.cmpi eq, %arg2, %c0_i32 : i32
    %1 = arith.extui %0 : i1 to i32
    %c0_i32_0 = arith.constant 0 : i32
    %2 = arith.cmpi ne, %1, %c0_i32_0 : i32
    scf.if %2 {
      %cst_10 = arith.constant 0.000000e+00 : f32
      %12 = vector.broadcast %cst_10 : f32 to vector<64x256xf32>
      %c0_11 = arith.constant 0 : index
      %c0_12 = arith.constant 0 : index
      %13 = vector.load %arg7[%c0_11, %c0_12] : memref<64x256xf32, #tpu.memory_space<vmem>>, vector<64x256xf32>
      tpu.vector_store %arg7[%c0_11, %c0_12], %12 {strides = array<i32>} : memref<64x256xf32, #tpu.memory_space<vmem>>, vector<64x256xf32>,
    } else {
    }
    %c0 = arith.constant 0 : index
    %c0_1 = arith.constant 0 : index
    %3 = vector.load %arg7[%c0, %c0_1] : memref<64x256xf32, #tpu.memory_space<vmem>>, vector<64x256xf32>
    %c0_2 = arith.constant 0 : index
    %c0_3 = arith.constant 0 : index
    %4 = vector.load %arg3[%c0_2, %c0_3] : memref<64x16xf32, #tpu.memory_space<vmem>>, vector<64x16xf32>
    %c0_4 = arith.constant 0 : index
    %c0_5 = arith.constant 0 : index
    %5 = vector.load %arg4[%c0_4, %c0_5] : memref<16x256xf32, #tpu.memory_space<vmem>>, vector<16x256xf32>
    %cst = arith.constant dense<0.000000e+00> : vector<64x256xf32>
    %6 = tpu.matmul %4, %5, %cst {dimension_numbers = #tpu.dot_dimension_numbers<[1], [0], [0], [1], [0, 0, 1, 1], [], []>} : vector<64x16xf32>, vector<16x256xf32>, vector<64x256xf32> -> vector<64x256xf32>
    %7 = arith.addf %3, %6 : vector<64x256xf32>
    %c0_6 = arith.constant 0 : index
    %c0_7 = arith.constant 0 : index
    %8 = vector.load %arg7[%c0_6, %c0_7] : memref<64x256xf32, #tpu.memory_space<vmem>>, vector<64x256xf32>
    tpu.vector_store %arg7[%c0_6, %c0_7], %7 {strides = array<i32>} : memref<64x256xf32, #tpu.memory_space<vmem>>, vector<64x256xf32>,
    %c0_i32_8 = arith.constant 0 : i32
    %9 = arith.cmpi eq, %arg2, %c0_i32_8 : i32
    %10 = arith.extui %9 : i1 to i32
    %c0_i32_9 = arith.constant 0 : i32
    %11 = arith.cmpi ne, %10, %c0_i32_9 : i32
    scf.if %11 {
      %c0_10 = arith.constant 0 : index
      %c0_11 = arith.constant 0 : index
      %12 = vector.load %arg7[%c0_10, %c0_11] : memref<64x256xf32, #tpu.memory_space<vmem>>, vector<64x256xf32>
      %c0_12 = arith.constant 0 : index
      %c0_13 = arith.constant 0 : index
      %13 = vector.load %arg5[%c0_12, %c0_13] : memref<1x256xf32, #tpu.memory_space<vmem>>, vector<1x256xf32>
      %14 = vector.broadcast %13 : vector<1x256xf32> to vector<64x256xf32>
      %15 = arith.addf %12, %14 : vector<64x256xf32>
      %c0_14 = arith.constant 0 : index
      %c0_15 = arith.constant 0 : index
      %16 = vector.load %arg6[%c0_14, %c0_15] : memref<64x256xf32, #tpu.memory_space<vmem>>, vector<64x256xf32>
      tpu.vector_store %arg6[%c0_14, %c0_15], %15 {strides = array<i32>} : memref<64x256xf32, #tpu.memory_space<vmem>>, vector<64x256xf32>,
    } else {
    }
    return
  }
  func.func @transform_0(%arg0: i32, %arg1: i32, %arg2: i32) -> (i32, i32) {
    %c0_i32 = arith.constant 0 : i32
    return %arg0, %arg2 : i32, i32
  }
  func.func @transform_1(%arg0: i32, %arg1: i32, %arg2: i32) -> (i32, i32) {
    %c0_i32 = arith.constant 0 : i32
    return %arg2, %arg1 : i32, i32
  }
  func.func @transform_2(%arg0: i32, %arg1: i32, %arg2: i32) -> (i32, i32) {
    %c0_i32 = arith.constant 0 : i32
    %c0_i32_0 = arith.constant 0 : i32
    return %c0_i32, %arg1 : i32, i32
  }
  func.func @transform_3(%arg0: i32, %arg1: i32, %arg2: i32) -> (i32, i32) {
    %c0_i32 = arith.constant 0 : i32
    return %arg0, %arg1 : i32, i32
  }
}

module attributes {stable_mosaic.version = 11 : i64} {
  func.func @_linear_kernel(%arg0: i32, %arg1: i32, %arg2: i32, %arg3: memref<16x32xf32, #tpu.memory_space<vmem>>, %arg4: memref<32x16xf32, #tpu.memory_space<vmem>>, %arg5: memref<1x16xf32, #tpu.memory_space<vmem>>, %arg6: memref<16x16xf32, #tpu.memory_space<vmem>>, %arg7: memref<16x16xf32, #tpu.memory_space<vmem>>) attributes {dimension_semantics = [#tpu.dimension_semantics<parallel>, #tpu.dimension_semantics<parallel>, #tpu.dimension_semantics<arbitrary>], iteration_bounds = array<i64: 1, 1, 1>, scalar_prefetch = 0 : i64, scratch_operands = 1 : i64, tpu.core_type = #tpu.core_type<tc>, window_params = [{transform_indices = @transform_0, window_bounds = array<i64: 16, 32>}, {transform_indices = @transform_1, window_bounds = array<i64: 32, 16>}, {transform_indices = @transform_2, window_bounds = array<i64: 1, 16>}, {transform_indices = @transform_3, window_bounds = array<i64: 16, 16>}]} {
    %c0_i32 = arith.constant 0 : i32
    %0 = arith.cmpi eq, %arg2, %c0_i32 : i32
    %1 = arith.extui %0 : i1 to i32
    %c0_i32_0 = arith.constant 0 : i32
    %2 = arith.cmpi ne, %1, %c0_i32_0 : i32
    scf.if %2 {
      %cst_10 = arith.constant 0.000000e+00 : f32
      %12 = vector.broadcast %cst_10 : f32 to vector<16x16xf32>
      %c0_11 = arith.constant 0 : index
      %c0_12 = arith.constant 0 : index
      %13 = vector.load %arg7[%c0_11, %c0_12] : memref<16x16xf32, #tpu.memory_space<vmem>>, vector<16x16xf32>
      tpu.vector_store %arg7[%c0_11, %c0_12], %12 {strides = array<i32>} : memref<16x16xf32, #tpu.memory_space<vmem>>, vector<16x16xf32>,
    } else {
    }
    %c0 = arith.constant 0 : index
    %c0_1 = arith.constant 0 : index
    %3 = vector.load %arg7[%c0, %c0_1] : memref<16x16xf32, #tpu.memory_space<vmem>>, vector<16x16xf32>
    %c0_2 = arith.constant 0 : index
    %c0_3 = arith.constant 0 : index
    %4 = vector.load %arg3[%c0_2, %c0_3] : memref<16x32xf32, #tpu.memory_space<vmem>>, vector<16x32xf32>
    %c0_4 = arith.constant 0 : index
    %c0_5 = arith.constant 0 : index
    %5 = vector.load %arg4[%c0_4, %c0_5] : memref<32x16xf32, #tpu.memory_space<vmem>>, vector<32x16xf32>
    %cst = arith.constant dense<0.000000e+00> : vector<16x16xf32>
    %6 = tpu.matmul %4, %5, %cst {dimension_numbers = #tpu.dot_dimension_numbers<[1], [0], [0], [1], [0, 0, 1, 1], [], []>} : vector<16x32xf32>, vector<32x16xf32>, vector<16x16xf32> -> vector<16x16xf32>
    %7 = arith.addf %3, %6 : vector<16x16xf32>
    %c0_6 = arith.constant 0 : index
    %c0_7 = arith.constant 0 : index
    %8 = vector.load %arg7[%c0_6, %c0_7] : memref<16x16xf32, #tpu.memory_space<vmem>>, vector<16x16xf32>
    tpu.vector_store %arg7[%c0_6, %c0_7], %7 {strides = array<i32>} : memref<16x16xf32, #tpu.memory_space<vmem>>, vector<16x16xf32>,
    %c0_i32_8 = arith.constant 0 : i32
    %9 = arith.cmpi eq, %arg2, %c0_i32_8 : i32
    %10 = arith.extui %9 : i1 to i32
    %c0_i32_9 = arith.constant 0 : i32
    %11 = arith.cmpi ne, %10, %c0_i32_9 : i32
    scf.if %11 {
      %c0_10 = arith.constant 0 : index
      %c0_11 = arith.constant 0 : index
      %12 = vector.load %arg7[%c0_10, %c0_11] : memref<16x16xf32, #tpu.memory_space<vmem>>, vector<16x16xf32>
      %c0_12 = arith.constant 0 : index
      %c0_13 = arith.constant 0 : index
      %13 = vector.load %arg5[%c0_12, %c0_13] : memref<1x16xf32, #tpu.memory_space<vmem>>, vector<1x16xf32>
      %14 = vector.broadcast %13 : vector<1x16xf32> to vector<16x16xf32>
      %15 = arith.addf %12, %14 : vector<16x16xf32>
      %c0_14 = arith.constant 0 : index
      %c0_15 = arith.constant 0 : index
      %16 = vector.load %arg6[%c0_14, %c0_15] : memref<16x16xf32, #tpu.memory_space<vmem>>, vector<16x16xf32>
      tpu.vector_store %arg6[%c0_14, %c0_15], %15 {strides = array<i32>} : memref<16x16xf32, #tpu.memory_space<vmem>>, vector<16x16xf32>,
    } else {
    }
    return
  }
  func.func @transform_0(%arg0: i32, %arg1: i32, %arg2: i32) -> (i32, i32) {
    %c0_i32 = arith.constant 0 : i32
    return %arg0, %arg2 : i32, i32
  }
  func.func @transform_1(%arg0: i32, %arg1: i32, %arg2: i32) -> (i32, i32) {
    %c0_i32 = arith.constant 0 : i32
    return %arg2, %arg1 : i32, i32
  }
  func.func @transform_2(%arg0: i32, %arg1: i32, %arg2: i32) -> (i32, i32) {
    %c0_i32 = arith.constant 0 : i32
    %c0_i32_0 = arith.constant 0 : i32
    return %c0_i32, %arg1 : i32, i32
  }
  func.func @transform_3(%arg0: i32, %arg1: i32, %arg2: i32) -> (i32, i32) {
    %c0_i32 = arith.constant 0 : i32
    return %arg0, %arg1 : i32, i32
  }
}

module attributes {stable_mosaic.version = 11 : i64} {
  func.func @_linear_kernel(%arg0: i32, %arg1: i32, %arg2: i32, %arg3: memref<64x128xf32, #tpu.memory_space<vmem>>, %arg4: memref<128x256xf32, #tpu.memory_space<vmem>>, %arg5: memref<1x256xf32, #tpu.memory_space<vmem>>, %arg6: memref<64x256xf32, #tpu.memory_space<vmem>>, %arg7: memref<64x256xf32, #tpu.memory_space<vmem>>) attributes {dimension_semantics = [#tpu.dimension_semantics<parallel>, #tpu.dimension_semantics<parallel>, #tpu.dimension_semantics<arbitrary>], iteration_bounds = array<i64: 1, 2, 1>, scalar_prefetch = 0 : i64, scratch_operands = 1 : i64, tpu.core_type = #tpu.core_type<tc>, window_params = [{transform_indices = @transform_0, window_bounds = array<i64: 64, 128>}, {transform_indices = @transform_1, window_bounds = array<i64: 128, 256>}, {transform_indices = @transform_2, window_bounds = array<i64: 1, 256>}, {transform_indices = @transform_3, window_bounds = array<i64: 64, 256>}]} {
    %c0_i32 = arith.constant 0 : i32
    %0 = arith.cmpi eq, %arg2, %c0_i32 : i32
    %1 = arith.extui %0 : i1 to i32
    %c0_i32_0 = arith.constant 0 : i32
    %2 = arith.cmpi ne, %1, %c0_i32_0 : i32
    scf.if %2 {
      %cst_10 = arith.constant 0.000000e+00 : f32
      %12 = vector.broadcast %cst_10 : f32 to vector<64x256xf32>
      %c0_11 = arith.constant 0 : index
      %c0_12 = arith.constant 0 : index
      %13 = vector.load %arg7[%c0_11, %c0_12] : memref<64x256xf32, #tpu.memory_space<vmem>>, vector<64x256xf32>
      tpu.vector_store %arg7[%c0_11, %c0_12], %12 {strides = array<i32>} : memref<64x256xf32, #tpu.memory_space<vmem>>, vector<64x256xf32>,
    } else {
    }
    %c0 = arith.constant 0 : index
    %c0_1 = arith.constant 0 : index
    %3 = vector.load %arg7[%c0, %c0_1] : memref<64x256xf32, #tpu.memory_space<vmem>>, vector<64x256xf32>
    %c0_2 = arith.constant 0 : index
    %c0_3 = arith.constant 0 : index
    %4 = vector.load %arg3[%c0_2, %c0_3] : memref<64x128xf32, #tpu.memory_space<vmem>>, vector<64x128xf32>
    %c0_4 = arith.constant 0 : index
    %c0_5 = arith.constant 0 : index
    %5 = vector.load %arg4[%c0_4, %c0_5] : memref<128x256xf32, #tpu.memory_space<vmem>>, vector<128x256xf32>
    %cst = arith.constant dense<0.000000e+00> : vector<64x256xf32>
    %6 = tpu.matmul %4, %5, %cst {dimension_numbers = #tpu.dot_dimension_numbers<[1], [0], [0], [1], [0, 0, 1, 1], [], []>} : vector<64x128xf32>, vector<128x256xf32>, vector<64x256xf32> -> vector<64x256xf32>
    %7 = arith.addf %3, %6 : vector<64x256xf32>
    %c0_6 = arith.constant 0 : index
    %c0_7 = arith.constant 0 : index
    %8 = vector.load %arg7[%c0_6, %c0_7] : memref<64x256xf32, #tpu.memory_space<vmem>>, vector<64x256xf32>
    tpu.vector_store %arg7[%c0_6, %c0_7], %7 {strides = array<i32>} : memref<64x256xf32, #tpu.memory_space<vmem>>, vector<64x256xf32>,
    %c0_i32_8 = arith.constant 0 : i32
    %9 = arith.cmpi eq, %arg2, %c0_i32_8 : i32
    %10 = arith.extui %9 : i1 to i32
    %c0_i32_9 = arith.constant 0 : i32
    %11 = arith.cmpi ne, %10, %c0_i32_9 : i32
    scf.if %11 {
      %c0_10 = arith.constant 0 : index
      %c0_11 = arith.constant 0 : index
      %12 = vector.load %arg7[%c0_10, %c0_11] : memref<64x256xf32, #tpu.memory_space<vmem>>, vector<64x256xf32>
      %c0_12 = arith.constant 0 : index
      %c0_13 = arith.constant 0 : index
      %13 = vector.load %arg5[%c0_12, %c0_13] : memref<1x256xf32, #tpu.memory_space<vmem>>, vector<1x256xf32>
      %14 = vector.broadcast %13 : vector<1x256xf32> to vector<64x256xf32>
      %15 = arith.addf %12, %14 : vector<64x256xf32>
      %c0_14 = arith.constant 0 : index
      %c0_15 = arith.constant 0 : index
      %16 = vector.load %arg6[%c0_14, %c0_15] : memref<64x256xf32, #tpu.memory_space<vmem>>, vector<64x256xf32>
      tpu.vector_store %arg6[%c0_14, %c0_15], %15 {strides = array<i32>} : memref<64x256xf32, #tpu.memory_space<vmem>>, vector<64x256xf32>,
    } else {
    }
    return
  }
  func.func @transform_0(%arg0: i32, %arg1: i32, %arg2: i32) -> (i32, i32) {
    %c0_i32 = arith.constant 0 : i32
    return %arg0, %arg2 : i32, i32
  }
  func.func @transform_1(%arg0: i32, %arg1: i32, %arg2: i32) -> (i32, i32) {
    %c0_i32 = arith.constant 0 : i32
    return %arg2, %arg1 : i32, i32
  }
  func.func @transform_2(%arg0: i32, %arg1: i32, %arg2: i32) -> (i32, i32) {
    %c0_i32 = arith.constant 0 : i32
    %c0_i32_0 = arith.constant 0 : i32
    return %c0_i32, %arg1 : i32, i32
  }
  func.func @transform_3(%arg0: i32, %arg1: i32, %arg2: i32) -> (i32, i32) {
    %c0_i32 = arith.constant 0 : i32
    return %arg0, %arg1 : i32, i32
  }
}

module attributes {stable_mosaic.version = 11 : i64} {
  func.func @_lstm_recurrent_kernel(%arg0: i32, %arg1: memref<8x8x512xf32, #tpu.memory_space<vmem>>, %arg2: memref<8x128xf32, #tpu.memory_space<vmem>>, %arg3: memref<8x128xf32, #tpu.memory_space<vmem>>, %arg4: memref<128x512xf32, #tpu.memory_space<vmem>>, %arg5: memref<8x8x128xf32, #tpu.memory_space<vmem>>, %arg6: memref<8x128xf32, #tpu.memory_space<vmem>>, %arg7: memref<8x128xf32, #tpu.memory_space<vmem>>) attributes {dimension_semantics = [#tpu.dimension_semantics<arbitrary>], iteration_bounds = array<i64: 1>, scalar_prefetch = 0 : i64, scratch_operands = 0 : i64, tpu.core_type = #tpu.core_type<tc>, window_params = [{transform_indices = @transform_0, window_bounds = array<i64: 8, 8, 512>}, {pipeline_mode = #tpu.pipeline_mode<synchronous>, transform_indices = @transform_1, window_bounds = array<i64: 8, 128>}, {pipeline_mode = #tpu.pipeline_mode<synchronous>, transform_indices = @transform_2, window_bounds = array<i64: 8, 128>}, {pipeline_mode = #tpu.pipeline_mode<synchronous>, transform_indices = @transform_3, window_bounds = array<i64: 128, 512>}, {transform_indices = @transform_4, window_bounds = array<i64: 8, 8, 128>}, {pipeline_mode = #tpu.pipeline_mode<synchronous>, transform_indices = @transform_5, window_bounds = array<i64: 8, 128>}, {pipeline_mode = #tpu.pipeline_mode<synchronous>, transform_indices = @transform_6, window_bounds = array<i64: 8, 128>}]} {
    %c0_i32 = arith.constant 0 : i32
    %0 = arith.cmpi eq, %arg0, %c0_i32 : i32
    %1 = arith.extui %0 : i1 to i32
    %c0_i32_0 = arith.constant 0 : i32
    %2 = arith.cmpi ne, %1, %c0_i32_0 : i32
    scf.if %2 {
      %c0_82 = arith.constant 0 : index
      %c0_83 = arith.constant 0 : index
      %264 = vector.load %arg2[%c0_82, %c0_83] : memref<8x128xf32, #tpu.memory_space<vmem>>, vector<8x128xf32>
      %c0_84 = arith.constant 0 : index
      %c0_85 = arith.constant 0 : index
      %265 = vector.load %arg6[%c0_84, %c0_85] : memref<8x128xf32, #tpu.memory_space<vmem>>, vector<8x128xf32>
      tpu.vector_store %arg6[%c0_84, %c0_85], %264 {strides = array<i32>} : memref<8x128xf32, #tpu.memory_space<vmem>>, vector<8x128xf32>,
      %c0_86 = arith.constant 0 : index
      %c0_87 = arith.constant 0 : index
      %266 = vector.load %arg3[%c0_86, %c0_87] : memref<8x128xf32, #tpu.memory_space<vmem>>, vector<8x128xf32>
      %c0_88 = arith.constant 0 : index
      %c0_89 = arith.constant 0 : index
      %267 = vector.load %arg7[%c0_88, %c0_89] : memref<8x128xf32, #tpu.memory_space<vmem>>, vector<8x128xf32>
      tpu.vector_store %arg7[%c0_88, %c0_89], %266 {strides = array<i32>} : memref<8x128xf32, #tpu.memory_space<vmem>>, vector<8x128xf32>,
    } else {
    }
    %c0 = arith.constant 0 : index
    %c0_1 = arith.constant 0 : index
    %3 = vector.load %arg4[%c0, %c0_1] : memref<128x512xf32, #tpu.memory_space<vmem>>, vector<128x512xf32>
    %c0_2 = arith.constant 0 : index
    %c0_3 = arith.constant 0 : index
    %4 = vector.load %arg6[%c0_2, %c0_3] : memref<8x128xf32, #tpu.memory_space<vmem>>, vector<8x128xf32>
    %c0_4 = arith.constant 0 : index
    %c0_5 = arith.constant 0 : index
    %5 = vector.load %arg7[%c0_4, %c0_5] : memref<8x128xf32, #tpu.memory_space<vmem>>, vector<8x128xf32>
    %c0_6 = arith.constant 0 : index
    %c0_7 = arith.constant 0 : index
    %c0_8 = arith.constant 0 : index
    %6 = vector.load %arg1[%c0_6, %c0_7, %c0_8] : memref<8x8x512xf32, #tpu.memory_space<vmem>>, vector<1x8x512xf32>
    %7 = vector.shape_cast %6 : vector<1x8x512xf32> to vector<8x512xf32>
    %cst = arith.constant dense<0.000000e+00> : vector<8x512xf32>
    %8 = tpu.matmul %4, %3, %cst {dimension_numbers = #tpu.dot_dimension_numbers<[1], [0], [0], [1], [0, 0, 1, 1], [], []>} : vector<8x128xf32>, vector<128x512xf32>, vector<8x512xf32> -> vector<8x512xf32>
    %9 = arith.addf %7, %8 : vector<8x512xf32>
    %10 = vector.extract_strided_slice %9 {offsets = [0, 0], sizes = [8, 128], strides = [1, 1]} : vector<8x512xf32> to vector<8x128xf32>
    %11 = arith.negf %10 : vector<8x128xf32>
    %12 = math.exp %11 : vector<8x128xf32>
    %cst_9 = arith.constant 1.000000e+00 : f32
    %13 = vector.broadcast %cst_9 : f32 to vector<8x128xf32>
    %14 = arith.addf %13, %12 : vector<8x128xf32>
    %15 = arith.divf %13, %14 : vector<8x128xf32>
    %16 = vector.extract_strided_slice %9 {offsets = [0, 128], sizes = [8, 128], strides = [1, 1]} : vector<8x512xf32> to vector<8x128xf32>
    %17 = arith.negf %16 : vector<8x128xf32>
    %18 = math.exp %17 : vector<8x128xf32>
    %cst_10 = arith.constant 1.000000e+00 : f32
    %19 = vector.broadcast %cst_10 : f32 to vector<8x128xf32>
    %20 = arith.addf %19, %18 : vector<8x128xf32>
    %21 = arith.divf %19, %20 : vector<8x128xf32>
    %22 = vector.extract_strided_slice %9 {offsets = [0, 256], sizes = [8, 128], strides = [1, 1]} : vector<8x512xf32> to vector<8x128xf32>
    %23 = math.tanh %22 : vector<8x128xf32>
    %24 = vector.extract_strided_slice %9 {offsets = [0, 384], sizes = [8, 128], strides = [1, 1]} : vector<8x512xf32> to vector<8x128xf32>
    %25 = arith.negf %24 : vector<8x128xf32>
    %26 = math.exp %25 : vector<8x128xf32>
    %cst_11 = arith.constant 1.000000e+00 : f32
    %27 = vector.broadcast %cst_11 : f32 to vector<8x128xf32>
    %28 = arith.addf %27, %26 : vector<8x128xf32>
    %29 = arith.divf %27, %28 : vector<8x128xf32>
    %30 = arith.mulf %21, %5 : vector<8x128xf32>
    %31 = arith.mulf %15, %23 : vector<8x128xf32>
    %32 = arith.addf %30, %31 : vector<8x128xf32>
    %33 = math.tanh %32 : vector<8x128xf32>
    %34 = arith.mulf %29, %33 : vector<8x128xf32>
    %c0_12 = arith.constant 0 : index
    %c0_13 = arith.constant 0 : index
    %c0_14 = arith.constant 0 : index
    %35 = vector.load %arg5[%c0_12, %c0_13, %c0_14] : memref<8x8x128xf32, #tpu.memory_space<vmem>>, vector<1x8x128xf32>
    %36 = vector.shape_cast %35 : vector<1x8x128xf32> to vector<8x128xf32>
    %37 = vector.shape_cast %34 : vector<8x128xf32> to vector<1x8x128xf32>
    tpu.vector_store %arg5[%c0_12, %c0_13, %c0_14], %37 {strides = array<i32>} : memref<8x8x128xf32, #tpu.memory_space<vmem>>, vector<1x8x128xf32>,
    %c1 = arith.constant 1 : index
    %c0_15 = arith.constant 0 : index
    %c0_16 = arith.constant 0 : index
    %38 = vector.load %arg1[%c1, %c0_15, %c0_16] : memref<8x8x512xf32, #tpu.memory_space<vmem>>, vector<1x8x512xf32>
    %39 = vector.shape_cast %38 : vector<1x8x512xf32> to vector<8x512xf32>
    %cst_17 = arith.constant dense<0.000000e+00> : vector<8x512xf32>
    %40 = tpu.matmul %34, %3, %cst_17 {dimension_numbers = #tpu.dot_dimension_numbers<[1], [0], [0], [1], [0, 0, 1, 1], [], []>} : vector<8x128xf32>, vector<128x512xf32>, vector<8x512xf32> -> vector<8x512xf32>
    %41 = arith.addf %39, %40 : vector<8x512xf32>
    %42 = vector.extract_strided_slice %41 {offsets = [0, 0], sizes = [8, 128], strides = [1, 1]} : vector<8x512xf32> to vector<8x128xf32>
    %43 = arith.negf %42 : vector<8x128xf32>
    %44 = math.exp %43 : vector<8x128xf32>
    %cst_18 = arith.constant 1.000000e+00 : f32
    %45 = vector.broadcast %cst_18 : f32 to vector<8x128xf32>
    %46 = arith.addf %45, %44 : vector<8x128xf32>
    %47 = arith.divf %45, %46 : vector<8x128xf32>
    %48 = vector.extract_strided_slice %41 {offsets = [0, 128], sizes = [8, 128], strides = [1, 1]} : vector<8x512xf32> to vector<8x128xf32>
    %49 = arith.negf %48 : vector<8x128xf32>
    %50 = math.exp %49 : vector<8x128xf32>
    %cst_19 = arith.constant 1.000000e+00 : f32
    %51 = vector.broadcast %cst_19 : f32 to vector<8x128xf32>
    %52 = arith.addf %51, %50 : vector<8x128xf32>
    %53 = arith.divf %51, %52 : vector<8x128xf32>
    %54 = vector.extract_strided_slice %41 {offsets = [0, 256], sizes = [8, 128], strides = [1, 1]} : vector<8x512xf32> to vector<8x128xf32>
    %55 = math.tanh %54 : vector<8x128xf32>
    %56 = vector.extract_strided_slice %41 {offsets = [0, 384], sizes = [8, 128], strides = [1, 1]} : vector<8x512xf32> to vector<8x128xf32>
    %57 = arith.negf %56 : vector<8x128xf32>
    %58 = math.exp %57 : vector<8x128xf32>
    %cst_20 = arith.constant 1.000000e+00 : f32
    %59 = vector.broadcast %cst_20 : f32 to vector<8x128xf32>
    %60 = arith.addf %59, %58 : vector<8x128xf32>
    %61 = arith.divf %59, %60 : vector<8x128xf32>
    %62 = arith.mulf %53, %32 : vector<8x128xf32>
    %63 = arith.mulf %47, %55 : vector<8x128xf32>
    %64 = arith.addf %62, %63 : vector<8x128xf32>
    %65 = math.tanh %64 : vector<8x128xf32>
    %66 = arith.mulf %61, %65 : vector<8x128xf32>
    %c1_21 = arith.constant 1 : index
    %c0_22 = arith.constant 0 : index
    %c0_23 = arith.constant 0 : index
    %67 = vector.load %arg5[%c1_21, %c0_22, %c0_23] : memref<8x8x128xf32, #tpu.memory_space<vmem>>, vector<1x8x128xf32>
    %68 = vector.shape_cast %67 : vector<1x8x128xf32> to vector<8x128xf32>
    %69 = vector.shape_cast %66 : vector<8x128xf32> to vector<1x8x128xf32>
    tpu.vector_store %arg5[%c1_21, %c0_22, %c0_23], %69 {strides = array<i32>} : memref<8x8x128xf32, #tpu.memory_space<vmem>>, vector<1x8x128xf32>,
    %c2 = arith.constant 2 : index
    %c0_24 = arith.constant 0 : index
    %c0_25 = arith.constant 0 : index
    %70 = vector.load %arg1[%c2, %c0_24, %c0_25] : memref<8x8x512xf32, #tpu.memory_space<vmem>>, vector<1x8x512xf32>
    %71 = vector.shape_cast %70 : vector<1x8x512xf32> to vector<8x512xf32>
    %cst_26 = arith.constant dense<0.000000e+00> : vector<8x512xf32>
    %72 = tpu.matmul %66, %3, %cst_26 {dimension_numbers = #tpu.dot_dimension_numbers<[1], [0], [0], [1], [0, 0, 1, 1], [], []>} : vector<8x128xf32>, vector<128x512xf32>, vector<8x512xf32> -> vector<8x512xf32>
    %73 = arith.addf %71, %72 : vector<8x512xf32>
    %74 = vector.extract_strided_slice %73 {offsets = [0, 0], sizes = [8, 128], strides = [1, 1]} : vector<8x512xf32> to vector<8x128xf32>
    %75 = arith.negf %74 : vector<8x128xf32>
    %76 = math.exp %75 : vector<8x128xf32>
    %cst_27 = arith.constant 1.000000e+00 : f32
    %77 = vector.broadcast %cst_27 : f32 to vector<8x128xf32>
    %78 = arith.addf %77, %76 : vector<8x128xf32>
    %79 = arith.divf %77, %78 : vector<8x128xf32>
    %80 = vector.extract_strided_slice %73 {offsets = [0, 128], sizes = [8, 128], strides = [1, 1]} : vector<8x512xf32> to vector<8x128xf32>
    %81 = arith.negf %80 : vector<8x128xf32>
    %82 = math.exp %81 : vector<8x128xf32>
    %cst_28 = arith.constant 1.000000e+00 : f32
    %83 = vector.broadcast %cst_28 : f32 to vector<8x128xf32>
    %84 = arith.addf %83, %82 : vector<8x128xf32>
    %85 = arith.divf %83, %84 : vector<8x128xf32>
    %86 = vector.extract_strided_slice %73 {offsets = [0, 256], sizes = [8, 128], strides = [1, 1]} : vector<8x512xf32> to vector<8x128xf32>
    %87 = math.tanh %86 : vector<8x128xf32>
    %88 = vector.extract_strided_slice %73 {offsets = [0, 384], sizes = [8, 128], strides = [1, 1]} : vector<8x512xf32> to vector<8x128xf32>
    %89 = arith.negf %88 : vector<8x128xf32>
    %90 = math.exp %89 : vector<8x128xf32>
    %cst_29 = arith.constant 1.000000e+00 : f32
    %91 = vector.broadcast %cst_29 : f32 to vector<8x128xf32>
    %92 = arith.addf %91, %90 : vector<8x128xf32>
    %93 = arith.divf %91, %92 : vector<8x128xf32>
    %94 = arith.mulf %85, %64 : vector<8x128xf32>
    %95 = arith.mulf %79, %87 : vector<8x128xf32>
    %96 = arith.addf %94, %95 : vector<8x128xf32>
    %97 = math.tanh %96 : vector<8x128xf32>
    %98 = arith.mulf %93, %97 : vector<8x128xf32>
    %c2_30 = arith.constant 2 : index
    %c0_31 = arith.constant 0 : index
    %c0_32 = arith.constant 0 : index
    %99 = vector.load %arg5[%c2_30, %c0_31, %c0_32] : memref<8x8x128xf32, #tpu.memory_space<vmem>>, vector<1x8x128xf32>
    %100 = vector.shape_cast %99 : vector<1x8x128xf32> to vector<8x128xf32>
    %101 = vector.shape_cast %98 : vector<8x128xf32> to vector<1x8x128xf32>
    tpu.vector_store %arg5[%c2_30, %c0_31, %c0_32], %101 {strides = array<i32>} : memref<8x8x128xf32, #tpu.memory_space<vmem>>, vector<1x8x128xf32>,
    %c3 = arith.constant 3 : index
    %c0_33 = arith.constant 0 : index
    %c0_34 = arith.constant 0 : index
    %102 = vector.load %arg1[%c3, %c0_33, %c0_34] : memref<8x8x512xf32, #tpu.memory_space<vmem>>, vector<1x8x512xf32>
    %103 = vector.shape_cast %102 : vector<1x8x512xf32> to vector<8x512xf32>
    %cst_35 = arith.constant dense<0.000000e+00> : vector<8x512xf32>
    %104 = tpu.matmul %98, %3, %cst_35 {dimension_numbers = #tpu.dot_dimension_numbers<[1], [0], [0], [1], [0, 0, 1, 1], [], []>} : vector<8x128xf32>, vector<128x512xf32>, vector<8x512xf32> -> vector<8x512xf32>
    %105 = arith.addf %103, %104 : vector<8x512xf32>
    %106 = vector.extract_strided_slice %105 {offsets = [0, 0], sizes = [8, 128], strides = [1, 1]} : vector<8x512xf32> to vector<8x128xf32>
    %107 = arith.negf %106 : vector<8x128xf32>
    %108 = math.exp %107 : vector<8x128xf32>
    %cst_36 = arith.constant 1.000000e+00 : f32
    %109 = vector.broadcast %cst_36 : f32 to vector<8x128xf32>
    %110 = arith.addf %109, %108 : vector<8x128xf32>
    %111 = arith.divf %109, %110 : vector<8x128xf32>
    %112 = vector.extract_strided_slice %105 {offsets = [0, 128], sizes = [8, 128], strides = [1, 1]} : vector<8x512xf32> to vector<8x128xf32>
    %113 = arith.negf %112 : vector<8x128xf32>
    %114 = math.exp %113 : vector<8x128xf32>
    %cst_37 = arith.constant 1.000000e+00 : f32
    %115 = vector.broadcast %cst_37 : f32 to vector<8x128xf32>
    %116 = arith.addf %115, %114 : vector<8x128xf32>
    %117 = arith.divf %115, %116 : vector<8x128xf32>
    %118 = vector.extract_strided_slice %105 {offsets = [0, 256], sizes = [8, 128], strides = [1, 1]} : vector<8x512xf32> to vector<8x128xf32>
    %119 = math.tanh %118 : vector<8x128xf32>
    %120 = vector.extract_strided_slice %105 {offsets = [0, 384], sizes = [8, 128], strides = [1, 1]} : vector<8x512xf32> to vector<8x128xf32>
    %121 = arith.negf %120 : vector<8x128xf32>
    %122 = math.exp %121 : vector<8x128xf32>
    %cst_38 = arith.constant 1.000000e+00 : f32
    %123 = vector.broadcast %cst_38 : f32 to vector<8x128xf32>
    %124 = arith.addf %123, %122 : vector<8x128xf32>
    %125 = arith.divf %123, %124 : vector<8x128xf32>
    %126 = arith.mulf %117, %96 : vector<8x128xf32>
    %127 = arith.mulf %111, %119 : vector<8x128xf32>
    %128 = arith.addf %126, %127 : vector<8x128xf32>
    %129 = math.tanh %128 : vector<8x128xf32>
    %130 = arith.mulf %125, %129 : vector<8x128xf32>
    %c3_39 = arith.constant 3 : index
    %c0_40 = arith.constant 0 : index
    %c0_41 = arith.constant 0 : index
    %131 = vector.load %arg5[%c3_39, %c0_40, %c0_41] : memref<8x8x128xf32, #tpu.memory_space<vmem>>, vector<1x8x128xf32>
    %132 = vector.shape_cast %131 : vector<1x8x128xf32> to vector<8x128xf32>
    %133 = vector.shape_cast %130 : vector<8x128xf32> to vector<1x8x128xf32>
    tpu.vector_store %arg5[%c3_39, %c0_40, %c0_41], %133 {strides = array<i32>} : memref<8x8x128xf32, #tpu.memory_space<vmem>>, vector<1x8x128xf32>,
    %c4 = arith.constant 4 : index
    %c0_42 = arith.constant 0 : index
    %c0_43 = arith.constant 0 : index
    %134 = vector.load %arg1[%c4, %c0_42, %c0_43] : memref<8x8x512xf32, #tpu.memory_space<vmem>>, vector<1x8x512xf32>
    %135 = vector.shape_cast %134 : vector<1x8x512xf32> to vector<8x512xf32>
    %cst_44 = arith.constant dense<0.000000e+00> : vector<8x512xf32>
    %136 = tpu.matmul %130, %3, %cst_44 {dimension_numbers = #tpu.dot_dimension_numbers<[1], [0], [0], [1], [0, 0, 1, 1], [], []>} : vector<8x128xf32>, vector<128x512xf32>, vector<8x512xf32> -> vector<8x512xf32>
    %137 = arith.addf %135, %136 : vector<8x512xf32>
    %138 = vector.extract_strided_slice %137 {offsets = [0, 0], sizes = [8, 128], strides = [1, 1]} : vector<8x512xf32> to vector<8x128xf32>
    %139 = arith.negf %138 : vector<8x128xf32>
    %140 = math.exp %139 : vector<8x128xf32>
    %cst_45 = arith.constant 1.000000e+00 : f32
    %141 = vector.broadcast %cst_45 : f32 to vector<8x128xf32>
    %142 = arith.addf %141, %140 : vector<8x128xf32>
    %143 = arith.divf %141, %142 : vector<8x128xf32>
    %144 = vector.extract_strided_slice %137 {offsets = [0, 128], sizes = [8, 128], strides = [1, 1]} : vector<8x512xf32> to vector<8x128xf32>
    %145 = arith.negf %144 : vector<8x128xf32>
    %146 = math.exp %145 : vector<8x128xf32>
    %cst_46 = arith.constant 1.000000e+00 : f32
    %147 = vector.broadcast %cst_46 : f32 to vector<8x128xf32>
    %148 = arith.addf %147, %146 : vector<8x128xf32>
    %149 = arith.divf %147, %148 : vector<8x128xf32>
    %150 = vector.extract_strided_slice %137 {offsets = [0, 256], sizes = [8, 128], strides = [1, 1]} : vector<8x512xf32> to vector<8x128xf32>
    %151 = math.tanh %150 : vector<8x128xf32>
    %152 = vector.extract_strided_slice %137 {offsets = [0, 384], sizes = [8, 128], strides = [1, 1]} : vector<8x512xf32> to vector<8x128xf32>
    %153 = arith.negf %152 : vector<8x128xf32>
    %154 = math.exp %153 : vector<8x128xf32>
    %cst_47 = arith.constant 1.000000e+00 : f32
    %155 = vector.broadcast %cst_47 : f32 to vector<8x128xf32>
    %156 = arith.addf %155, %154 : vector<8x128xf32>
    %157 = arith.divf %155, %156 : vector<8x128xf32>
    %158 = arith.mulf %149, %128 : vector<8x128xf32>
    %159 = arith.mulf %143, %151 : vector<8x128xf32>
    %160 = arith.addf %158, %159 : vector<8x128xf32>
    %161 = math.tanh %160 : vector<8x128xf32>
    %162 = arith.mulf %157, %161 : vector<8x128xf32>
    %c4_48 = arith.constant 4 : index
    %c0_49 = arith.constant 0 : index
    %c0_50 = arith.constant 0 : index
    %163 = vector.load %arg5[%c4_48, %c0_49, %c0_50] : memref<8x8x128xf32, #tpu.memory_space<vmem>>, vector<1x8x128xf32>
    %164 = vector.shape_cast %163 : vector<1x8x128xf32> to vector<8x128xf32>
    %165 = vector.shape_cast %162 : vector<8x128xf32> to vector<1x8x128xf32>
    tpu.vector_store %arg5[%c4_48, %c0_49, %c0_50], %165 {strides = array<i32>} : memref<8x8x128xf32, #tpu.memory_space<vmem>>, vector<1x8x128xf32>,
    %c5 = arith.constant 5 : index
    %c0_51 = arith.constant 0 : index
    %c0_52 = arith.constant 0 : index
    %166 = vector.load %arg1[%c5, %c0_51, %c0_52] : memref<8x8x512xf32, #tpu.memory_space<vmem>>, vector<1x8x512xf32>
    %167 = vector.shape_cast %166 : vector<1x8x512xf32> to vector<8x512xf32>
    %cst_53 = arith.constant dense<0.000000e+00> : vector<8x512xf32>
    %168 = tpu.matmul %162, %3, %cst_53 {dimension_numbers = #tpu.dot_dimension_numbers<[1], [0], [0], [1], [0, 0, 1, 1], [], []>} : vector<8x128xf32>, vector<128x512xf32>, vector<8x512xf32> -> vector<8x512xf32>
    %169 = arith.addf %167, %168 : vector<8x512xf32>
    %170 = vector.extract_strided_slice %169 {offsets = [0, 0], sizes = [8, 128], strides = [1, 1]} : vector<8x512xf32> to vector<8x128xf32>
    %171 = arith.negf %170 : vector<8x128xf32>
    %172 = math.exp %171 : vector<8x128xf32>
    %cst_54 = arith.constant 1.000000e+00 : f32
    %173 = vector.broadcast %cst_54 : f32 to vector<8x128xf32>
    %174 = arith.addf %173, %172 : vector<8x128xf32>
    %175 = arith.divf %173, %174 : vector<8x128xf32>
    %176 = vector.extract_strided_slice %169 {offsets = [0, 128], sizes = [8, 128], strides = [1, 1]} : vector<8x512xf32> to vector<8x128xf32>
    %177 = arith.negf %176 : vector<8x128xf32>
    %178 = math.exp %177 : vector<8x128xf32>
    %cst_55 = arith.constant 1.000000e+00 : f32
    %179 = vector.broadcast %cst_55 : f32 to vector<8x128xf32>
    %180 = arith.addf %179, %178 : vector<8x128xf32>
    %181 = arith.divf %179, %180 : vector<8x128xf32>
    %182 = vector.extract_strided_slice %169 {offsets = [0, 256], sizes = [8, 128], strides = [1, 1]} : vector<8x512xf32> to vector<8x128xf32>
    %183 = math.tanh %182 : vector<8x128xf32>
    %184 = vector.extract_strided_slice %169 {offsets = [0, 384], sizes = [8, 128], strides = [1, 1]} : vector<8x512xf32> to vector<8x128xf32>
    %185 = arith.negf %184 : vector<8x128xf32>
    %186 = math.exp %185 : vector<8x128xf32>
    %cst_56 = arith.constant 1.000000e+00 : f32
    %187 = vector.broadcast %cst_56 : f32 to vector<8x128xf32>
    %188 = arith.addf %187, %186 : vector<8x128xf32>
    %189 = arith.divf %187, %188 : vector<8x128xf32>
    %190 = arith.mulf %181, %160 : vector<8x128xf32>
    %191 = arith.mulf %175, %183 : vector<8x128xf32>
    %192 = arith.addf %190, %191 : vector<8x128xf32>
    %193 = math.tanh %192 : vector<8x128xf32>
    %194 = arith.mulf %189, %193 : vector<8x128xf32>
    %c5_57 = arith.constant 5 : index
    %c0_58 = arith.constant 0 : index
    %c0_59 = arith.constant 0 : index
    %195 = vector.load %arg5[%c5_57, %c0_58, %c0_59] : memref<8x8x128xf32, #tpu.memory_space<vmem>>, vector<1x8x128xf32>
    %196 = vector.shape_cast %195 : vector<1x8x128xf32> to vector<8x128xf32>
    %197 = vector.shape_cast %194 : vector<8x128xf32> to vector<1x8x128xf32>
    tpu.vector_store %arg5[%c5_57, %c0_58, %c0_59], %197 {strides = array<i32>} : memref<8x8x128xf32, #tpu.memory_space<vmem>>, vector<1x8x128xf32>,
    %c6 = arith.constant 6 : index
    %c0_60 = arith.constant 0 : index
    %c0_61 = arith.constant 0 : index
    %198 = vector.load %arg1[%c6, %c0_60, %c0_61] : memref<8x8x512xf32, #tpu.memory_space<vmem>>, vector<1x8x512xf32>
    %199 = vector.shape_cast %198 : vector<1x8x512xf32> to vector<8x512xf32>
    %cst_62 = arith.constant dense<0.000000e+00> : vector<8x512xf32>
    %200 = tpu.matmul %194, %3, %cst_62 {dimension_numbers = #tpu.dot_dimension_numbers<[1], [0], [0], [1], [0, 0, 1, 1], [], []>} : vector<8x128xf32>, vector<128x512xf32>, vector<8x512xf32> -> vector<8x512xf32>
    %201 = arith.addf %199, %200 : vector<8x512xf32>
    %202 = vector.extract_strided_slice %201 {offsets = [0, 0], sizes = [8, 128], strides = [1, 1]} : vector<8x512xf32> to vector<8x128xf32>
    %203 = arith.negf %202 : vector<8x128xf32>
    %204 = math.exp %203 : vector<8x128xf32>
    %cst_63 = arith.constant 1.000000e+00 : f32
    %205 = vector.broadcast %cst_63 : f32 to vector<8x128xf32>
    %206 = arith.addf %205, %204 : vector<8x128xf32>
    %207 = arith.divf %205, %206 : vector<8x128xf32>
    %208 = vector.extract_strided_slice %201 {offsets = [0, 128], sizes = [8, 128], strides = [1, 1]} : vector<8x512xf32> to vector<8x128xf32>
    %209 = arith.negf %208 : vector<8x128xf32>
    %210 = math.exp %209 : vector<8x128xf32>
    %cst_64 = arith.constant 1.000000e+00 : f32
    %211 = vector.broadcast %cst_64 : f32 to vector<8x128xf32>
    %212 = arith.addf %211, %210 : vector<8x128xf32>
    %213 = arith.divf %211, %212 : vector<8x128xf32>
    %214 = vector.extract_strided_slice %201 {offsets = [0, 256], sizes = [8, 128], strides = [1, 1]} : vector<8x512xf32> to vector<8x128xf32>
    %215 = math.tanh %214 : vector<8x128xf32>
    %216 = vector.extract_strided_slice %201 {offsets = [0, 384], sizes = [8, 128], strides = [1, 1]} : vector<8x512xf32> to vector<8x128xf32>
    %217 = arith.negf %216 : vector<8x128xf32>
    %218 = math.exp %217 : vector<8x128xf32>
    %cst_65 = arith.constant 1.000000e+00 : f32
    %219 = vector.broadcast %cst_65 : f32 to vector<8x128xf32>
    %220 = arith.addf %219, %218 : vector<8x128xf32>
    %221 = arith.divf %219, %220 : vector<8x128xf32>
    %222 = arith.mulf %213, %192 : vector<8x128xf32>
    %223 = arith.mulf %207, %215 : vector<8x128xf32>
    %224 = arith.addf %222, %223 : vector<8x128xf32>
    %225 = math.tanh %224 : vector<8x128xf32>
    %226 = arith.mulf %221, %225 : vector<8x128xf32>
    %c6_66 = arith.constant 6 : index
    %c0_67 = arith.constant 0 : index
    %c0_68 = arith.constant 0 : index
    %227 = vector.load %arg5[%c6_66, %c0_67, %c0_68] : memref<8x8x128xf32, #tpu.memory_space<vmem>>, vector<1x8x128xf32>
    %228 = vector.shape_cast %227 : vector<1x8x128xf32> to vector<8x128xf32>
    %229 = vector.shape_cast %226 : vector<8x128xf32> to vector<1x8x128xf32>
    tpu.vector_store %arg5[%c6_66, %c0_67, %c0_68], %229 {strides = array<i32>} : memref<8x8x128xf32, #tpu.memory_space<vmem>>, vector<1x8x128xf32>,
    %c7 = arith.constant 7 : index
    %c0_69 = arith.constant 0 : index
    %c0_70 = arith.constant 0 : index
    %230 = vector.load %arg1[%c7, %c0_69, %c0_70] : memref<8x8x512xf32, #tpu.memory_space<vmem>>, vector<1x8x512xf32>
    %231 = vector.shape_cast %230 : vector<1x8x512xf32> to vector<8x512xf32>
    %cst_71 = arith.constant dense<0.000000e+00> : vector<8x512xf32>
    %232 = tpu.matmul %226, %3, %cst_71 {dimension_numbers = #tpu.dot_dimension_numbers<[1], [0], [0], [1], [0, 0, 1, 1], [], []>} : vector<8x128xf32>, vector<128x512xf32>, vector<8x512xf32> -> vector<8x512xf32>
    %233 = arith.addf %231, %232 : vector<8x512xf32>
    %234 = vector.extract_strided_slice %233 {offsets = [0, 0], sizes = [8, 128], strides = [1, 1]} : vector<8x512xf32> to vector<8x128xf32>
    %235 = arith.negf %234 : vector<8x128xf32>
    %236 = math.exp %235 : vector<8x128xf32>
    %cst_72 = arith.constant 1.000000e+00 : f32
    %237 = vector.broadcast %cst_72 : f32 to vector<8x128xf32>
    %238 = arith.addf %237, %236 : vector<8x128xf32>
    %239 = arith.divf %237, %238 : vector<8x128xf32>
    %240 = vector.extract_strided_slice %233 {offsets = [0, 128], sizes = [8, 128], strides = [1, 1]} : vector<8x512xf32> to vector<8x128xf32>
    %241 = arith.negf %240 : vector<8x128xf32>
    %242 = math.exp %241 : vector<8x128xf32>
    %cst_73 = arith.constant 1.000000e+00 : f32
    %243 = vector.broadcast %cst_73 : f32 to vector<8x128xf32>
    %244 = arith.addf %243, %242 : vector<8x128xf32>
    %245 = arith.divf %243, %244 : vector<8x128xf32>
    %246 = vector.extract_strided_slice %233 {offsets = [0, 256], sizes = [8, 128], strides = [1, 1]} : vector<8x512xf32> to vector<8x128xf32>
    %247 = math.tanh %246 : vector<8x128xf32>
    %248 = vector.extract_strided_slice %233 {offsets = [0, 384], sizes = [8, 128], strides = [1, 1]} : vector<8x512xf32> to vector<8x128xf32>
    %249 = arith.negf %248 : vector<8x128xf32>
    %250 = math.exp %249 : vector<8x128xf32>
    %cst_74 = arith.constant 1.000000e+00 : f32
    %251 = vector.broadcast %cst_74 : f32 to vector<8x128xf32>
    %252 = arith.addf %251, %250 : vector<8x128xf32>
    %253 = arith.divf %251, %252 : vector<8x128xf32>
    %254 = arith.mulf %245, %224 : vector<8x128xf32>
    %255 = arith.mulf %239, %247 : vector<8x128xf32>
    %256 = arith.addf %254, %255 : vector<8x128xf32>
    %257 = math.tanh %256 : vector<8x128xf32>
    %258 = arith.mulf %253, %257 : vector<8x128xf32>
    %c7_75 = arith.constant 7 : index
    %c0_76 = arith.constant 0 : index
    %c0_77 = arith.constant 0 : index
    %259 = vector.load %arg5[%c7_75, %c0_76, %c0_77] : memref<8x8x128xf32, #tpu.memory_space<vmem>>, vector<1x8x128xf32>
    %260 = vector.shape_cast %259 : vector<1x8x128xf32> to vector<8x128xf32>
    %261 = vector.shape_cast %258 : vector<8x128xf32> to vector<1x8x128xf32>
    tpu.vector_store %arg5[%c7_75, %c0_76, %c0_77], %261 {strides = array<i32>} : memref<8x8x128xf32, #tpu.memory_space<vmem>>, vector<1x8x128xf32>,
    %c0_78 = arith.constant 0 : index
    %c0_79 = arith.constant 0 : index
    %262 = vector.load %arg6[%c0_78, %c0_79] : memref<8x128xf32, #tpu.memory_space<vmem>>, vector<8x128xf32>
    tpu.vector_store %arg6[%c0_78, %c0_79], %258 {strides = array<i32>} : memref<8x128xf32, #tpu.memory_space<vmem>>, vector<8x128xf32>,
    %c0_80 = arith.constant 0 : index
    %c0_81 = arith.constant 0 : index
    %263 = vector.load %arg7[%c0_80, %c0_81] : memref<8x128xf32, #tpu.memory_space<vmem>>, vector<8x128xf32>
    tpu.vector_store %arg7[%c0_80, %c0_81], %256 {strides = array<i32>} : memref<8x128xf32, #tpu.memory_space<vmem>>, vector<8x128xf32>,
    return
  }
  func.func @transform_0(%arg0: i32) -> (i32, i32, i32) {
    %c0_i32 = arith.constant 0 : i32
    %c0_i32_0 = arith.constant 0 : i32
    %c0_i32_1 = arith.constant 0 : i32
    return %arg0, %c0_i32, %c0_i32_0 : i32, i32, i32
  }
  func.func @transform_1(%arg0: i32) -> (i32, i32) {
    %c0_i32 = arith.constant 0 : i32
    %c0_i32_0 = arith.constant 0 : i32
    %c0_i32_1 = arith.constant 0 : i32
    return %c0_i32, %c0_i32_0 : i32, i32
  }
  func.func @transform_2(%arg0: i32) -> (i32, i32) {
    %c0_i32 = arith.constant 0 : i32
    %c0_i32_0 = arith.constant 0 : i32
    %c0_i32_1 = arith.constant 0 : i32
    return %c0_i32, %c0_i32_0 : i32, i32
  }
  func.func @transform_3(%arg0: i32) -> (i32, i32) {
    %c0_i32 = arith.constant 0 : i32
    %c0_i32_0 = arith.constant 0 : i32
    %c0_i32_1 = arith.constant 0 : i32
    return %c0_i32, %c0_i32_0 : i32, i32
  }
  func.func @transform_4(%arg0: i32) -> (i32, i32, i32) {
    %c0_i32 = arith.constant 0 : i32
    %c0_i32_0 = arith.constant 0 : i32
    %c0_i32_1 = arith.constant 0 : i32
    return %arg0, %c0_i32, %c0_i32_0 : i32, i32, i32
  }
  func.func @transform_5(%arg0: i32) -> (i32, i32) {
    %c0_i32 = arith.constant 0 : i32
    %c0_i32_0 = arith.constant 0 : i32
    %c0_i32_1 = arith.constant 0 : i32
    return %c0_i32, %c0_i32_0 : i32, i32
  }
  func.func @transform_6(%arg0: i32) -> (i32, i32) {
    %c0_i32 = arith.constant 0 : i32
    %c0_i32_0 = arith.constant 0 : i32
    %c0_i32_1 = arith.constant 0 : i32
    return %c0_i32, %c0_i32_0 : i32, i32
  }
}

</mosaic_0001>

<llo_original>
// kernel: rnn_forward.9
$region0: #{rnn_forward.9}
  #allocation0 [shape = 'u32[]', space=smem, size = 0x4, offset = 0x4, fixed_abs, tag = 'smem constant byte address 0x4 - core index']
  #allocation1 [shape = 'u32[144,128]{1,0:T(1,128)}', space=vmem, size = 0x12000, scoped, tag = 'internal scratch']
  #allocation2 [shape = 'f32[16,16]{1,0:T(8,128)}', space=vmem, size = 0x2000, scoped, tag = 'scratch operand']
  %s0 = inlined_call_operand.vmem [shape: f32[16,32], index: 0, kind: input, shape index: {}]
  %s1 = inlined_call_operand.vmem [shape: f32[32,16], index: 1, kind: input, shape index: {}]
  %s2 = inlined_call_operand.vmem [shape: f32[1,16], index: 2, kind: input, shape index: {}]
  %s3 = inlined_call_operand.hbm [shape: f32[16,16], index: 3, kind: output, shape index: {}]
  %s4 = sld [smem:[#allocation0]]
  $region30: #{rnn_forward.9} parent=0
    _
  %s6 = ssub.s32 1, %s4
  %s7 = scalar_select 0, %s6, %s4
  $region1: #{rnn_forward.9} parent=0
    #allocation3 [shape = 'u8[8192]{0}', space=vmem, size = 0x2000, scoped, tag = 'output window, operand 0, single buffered']
    #allocation4 [shape = 's32[1]{0}', space=sflag, size = 0x4, scoped, tag = 'scoped memory for rnn_forward.9']
    %8 = vsyncpa [#allocation4], 0
    // Predicated region
    $region2: #{rnn_forward.9} parent=1 // pred_check
      _
    $region3: #{rnn_forward.9} parent=1 // pred_check_branch
      %10 = sbr.rel (0) target = $region5
    $region4: #{rnn_forward.9} parent=1 // pred_region
      _
    $region5: #{rnn_forward.9} parent=1 // pred_fallthru
      _
    // Predicated region
    $region6: #{rnn_forward.9} parent=1 // pred_check
      _
    $region7: #{rnn_forward.9} parent=1 // pred_check_branch
      %12 = sbr.rel (0) target = $region9
    $region8: #{rnn_forward.9} parent=1 // pred_region
      _
    $region9: #{rnn_forward.9} parent=1 // pred_fallthru
      _
    // Predicated region
    $region10: #{rnn_forward.9} parent=1 // pred_check
      _
    $region11: #{rnn_forward.9} parent=1 // pred_check_branch
      %14 = sbr.rel (0) target = $region13
    $region12: #{rnn_forward.9} parent=1 // pred_region
      _
    $region13: #{rnn_forward.9} parent=1 // pred_fallthru
      _
    %p15 = scmp.eq.s32.totalorder 0, 0
    // Predicated region
    $region14: #{rnn_forward.9} parent=1 // pred_check
      %p16 = pneg %p15
    $region15: #{rnn_forward.9} parent=1 // pred_check_branch
      %18 = sbr.rel (%p16) target = $region17
    $region16: #{rnn_forward.9} parent=1 // pred_region
      %vm19 = vcmask 130048
      %20 = vst.msk [vmem:[#allocation2] sm:$0xff] %vm19, 0.0
      %21 = vst.msk [vmem:[#allocation2 + $0x8] sm:$0xff] %vm19, 0.0
    $region17: #{rnn_forward.9} parent=1 // pred_fallthru
      _
    %v22 = vld [vmem:[#allocation2] sm:$0xff]
    %v23 = vld [vmem:[#allocation2 + $0x8] sm:$0xff]
    %v24 = vld [vmem:[%s0] sm:$0xff]
    %v25 = vld [vmem:[%s0 + $0x8] sm:$0xff]
    %v26 = vld [vmem:[%s1] sm:$0xff]
    %v27 = vld [vmem:[%s1 + $0x8] sm:$0xff]
    %v28 = vld [vmem:[%s1 + $0x10] sm:$0xff]
    %v29 = vld [vmem:[%s1 + $0x18] sm:$0xff]
    %vm30 = vcmask 261120
    %v32 = vsel %vm30, %v24, 0
    %v35 = vsel %vm30, %v25, 0
    %37 = vmatprep.subr.mxu0 0.0
    %38 = vmatpush1.msra.mxu0 0.0
    %39 = vmatprep.subr.mxu0 0.0
    %40 = vmatpush1.msra.mxu0 0.0
    %41 = vmatprep.subr.mxu0 0.0
    %42 = vmatpush1.msra.mxu0 0.0
    %43 = vmatprep.subr.mxu0 0.0
    %44 = vmatpush1.msra.mxu0 0.0
    %45 = vmatprep.subr.mxu0 0.0
    %46 = vmatpush1.msra.mxu0 0.0
    %47 = vmatprep.subr.mxu0 0.0
    %48 = vmatpush1.msra.mxu0 0.0
    %49 = vmatprep.subr.mxu0 0.0
    %50 = vmatpush1.msra.mxu0 0.0
    %51 = vmatprep.subr.mxu0 0.0
    %52 = vmatpush1.msra.mxu0 0.0
    %53 = vmatprep.subr.mxu0 0.0
    %54 = vmatpush1.msra.mxu0 0.0
    %55 = vmatprep.subr.mxu0 0.0
    %56 = vmatpush1.msra.mxu0 0.0
    %57 = vmatprep.subr.mxu0 0.0
    %58 = vmatpush1.msra.mxu0 0.0
    %59 = vmatprep.subr.mxu0 0.0
    %60 = vmatpush1.msra.mxu0 0.0
    %61 = vmatprep.subr.mxu0 0.0
    %62 = vmatpush1.msra.mxu0 %v29
    %63 = vmatprep.subr.mxu0 0.0
    %64 = vmatpush1.msra.mxu0 %v28
    %65 = vmatprep.subr.mxu0 0.0
    %66 = vmatpush1.msra.mxu0 %v27
    %67 = vmatprep.subr.mxu0 0.0
    %68 = vmatpush1.msra.mxu0 %v26
    %69 = vmatprep.subr.mxu0 0.0
    %70 = vmatpush2.msra.mxu0 0.0
    %71 = vmatprep.subr.mxu0 0.0
    %72 = vmatpush2.msra.mxu0 0.0
    %73 = vmatprep.subr.mxu0 0.0
    %74 = vmatpush2.msra.mxu0 0.0
    %75 = vmatprep.subr.mxu0 0.0
    %76 = vmatpush2.msra.mxu0 0.0
    %77 = vmatprep.subr.mxu0 0.0
    %78 = vmatpush2.msra.mxu0 0.0
    %79 = vmatprep.subr.mxu0 0.0
    %80 = vmatpush2.msra.mxu0 0.0
    %81 = vmatprep.subr.mxu0 0.0
    %82 = vmatpush2.msra.mxu0 0.0
    %83 = vmatprep.subr.mxu0 0.0
    %84 = vmatpush2.msra.mxu0 0.0
    %85 = vmatprep.subr.mxu0 0.0
    %86 = vmatpush2.msra.mxu0 0.0
    %87 = vmatprep.subr.mxu0 0.0
    %88 = vmatpush2.msra.mxu0 0.0
    %89 = vmatprep.subr.mxu0 0.0
    %90 = vmatpush2.msra.mxu0 0.0
    %91 = vmatprep.subr.mxu0 0.0
    %92 = vmatpush2.msra.mxu0 0.0
    %93 = vmatprep.subr.mxu0 0.0
    %94 = vmatpush2.msra.mxu0 0.0
    %95 = vmatprep.subr.mxu0 0.0
    %96 = vmatpush2.msra.mxu0 0.0
    %97 = vmatprep.subr.mxu0 0.0
    %98 = vmatpush2.msra.mxu0 0.0
    %99 = vmatprep.subr.mxu0 0.0
    %100 = vmatpush2.msra.mxu0 0.0
    %101 = vmatprep.mubr.f32.mxu0 0.0
    %102 = vmatmul.mubr.f32.gmra.mxu0 %v32
    %v103 = vpop.f32.mrf.mxu0
    %v104 = vadd.f32 0.0, %v103
    %v105 = vpop.f32.mrf.mxu0
    %106 = vmatprep.mubr.f32.mxu0 0.0
    %107 = vmatmul.mubr.f32.gmra.mxu0 %v35
    %v108 = vpop.f32.mrf.mxu0
    %v109 = vadd.f32 0.0, %v108
    %v110 = vpop.f32.mrf.mxu0
    %111 = vdwg.mxu0
    %v112 = vadd.f32 %v22, %v104
    %v113 = vadd.f32 %v23, %v109
    %vm114 = vcmask 130048
    %115 = vst.msk [vmem:[#allocation2] sm:$0xff] %vm114, %v112
    %116 = vst.msk [vmem:[#allocation2 + $0x8] sm:$0xff] %vm114, %v113
    // Predicated region
    $region18: #{rnn_forward.9} parent=1 // pred_check
      %p117 = pneg %p15
    $region19: #{rnn_forward.9} parent=1 // pred_check_branch
      %119 = sbr.rel (%p117) target = $region21
    $region20: #{rnn_forward.9} parent=1 // pred_region
      %v120 = vld [vmem:[#allocation2] sm:$0xff]
      %v121 = vld [vmem:[#allocation2 + $0x8] sm:$0xff]
      %v122 = vld [vmem:[%s2] sm:$0x1]
      %v124 = vlaneseq
      %v125 = vshrl.u32 %v124, 7
      %v126 = vsub.s32 0, %v125
      %v127 = vrot.slane %v122, %v126
      %v129 = vadd.f32 %v120, %v127
      %v130 = vadd.f32 %v121, %v127
      %131 = vst.msk [vmem:[#allocation3] sm:$0xff] %vm114, %v129
      %132 = vst.msk [vmem:[#allocation3 + $0x8] sm:$0xff] %vm114, %v130
    $region21: #{rnn_forward.9} parent=1 // pred_fallthru
      _
    // Predicated region
    $region22: #{rnn_forward.9} parent=1 // pred_check
      _
    $region23: #{rnn_forward.9} parent=1 // pred_check_branch
      %134 = sbr.rel (0) target = $region25
    $region24: #{rnn_forward.9} parent=1 // pred_region
      %s136 = ssub.s32 256, 256
      %137 = vsyncadd [#allocation4], %s136
      %s138 = sshll.u32 [#allocation3], 4
      %s139 = int_to_ptr.vmem [resolvable:$true] %s138
      %144 = dma.vmem_to_hbm [thread:$0]  %s139, 256, %s3, [#allocation4], 128, 128, 8
    $region25: #{rnn_forward.9} parent=1 // pred_fallthru
      _
    // Predicated region
    $region26: #{rnn_forward.9} parent=1 // pred_check
      _
    $region27: #{rnn_forward.9} parent=1 // pred_check_branch
      %146 = sbr.rel (0) target = $region29
    $region28: #{rnn_forward.9} parent=1 // pred_region
      %147 = dma.done [#allocation4], 256
    $region29: #{rnn_forward.9} parent=1 // pred_fallthru
      _
    %148 = vsyncpa [#allocation4], 1

// kernel: rnn_forward.7
$region0: #{rnn_forward.7}
  #allocation0 [shape = 'u32[]', space=smem, size = 0x4, offset = 0x4, fixed_abs, tag = 'smem constant byte address 0x4 - core index']
  #allocation1 [shape = 'u32[144,128]{1,0:T(1,128)}', space=vmem, size = 0x12000, scoped, tag = 'internal scratch']
  #allocation2 [shape = 'f32[64,256]{1,0:T(8,128)}', space=vmem, size = 0x10000, scoped, tag = 'scratch operand']
  %s0 = inlined_call_operand.vmem [shape: f32[64,128], index: 0, kind: input, shape index: {}]
  %s1 = inlined_call_operand.vmem [shape: f32[128,512], index: 1, kind: input, shape index: {}]
  %s2 = inlined_call_operand.vmem [shape: f32[1,512], index: 2, kind: input, shape index: {}]
  %s3 = inlined_call_operand.vmem [shape: f32[64,512], index: 3, kind: output, shape index: {}]
  %s4 = sld [smem:[#allocation0]]
  $region95: #{rnn_forward.7} parent=0
    _
  %s6 = ssub.s32 1, %s4
  %s7 = scalar_select 0, %s6, %s4
  $region1: #{rnn_forward.7} parent=0
    #allocation3 [shape = 'u8[262144]{0}', space=vmem, size = 0x40000, scoped, tag = 'input window, operand 1']
    #allocation4 [shape = 'u8[131072]{0}', space=vmem, size = 0x20000, scoped, tag = 'output window, operand 0']
    loop: start=0, step=1, limit=4
    $region2: #{rnn_forward.7} parent=1 // loop_pre_header
      _
    $region3: #{rnn_forward.7} parent=1 // loop_header
      %s9 = sphi 0, %s13
      %p10 = scmp.ge.s32.totalorder %s9, 4
      %s16 = sphi 0, %s35
      %s17 = sphi 0, %s31
      %s18 = sphi 0, %s27
      %s19 = sphi 0, %s16
      %s20 = sphi 0, %s17
      %s21 = sphi 0, %s18
      %s22 = sphi 0, %s19
      %s23 = sphi 0, %s20
      %s24 = sphi 0, %s21
      %s40 = sphi 0, %s42
      %s43 = sphi 0, %s40
      %s44 = sphi 0, %s43
      %s60 = sphi 0, %s44
      %s68 = sphi 0, %s70
      %s71 = sphi 0, %s68
      %s72 = sphi 0, %s71
      %s88 = sphi 0, %s72
      %s94 = sphi 0, %s96
      %s97 = sphi 0, %s94
      %s98 = sphi 0, %s97
      %s114 = sphi 0, %s98
      %s122 = sphi 0, %s124
      %s125 = sphi 0, %s122
      %s126 = sphi 0, %s125
      %s142 = sphi 0, %s126
    $region4: #{rnn_forward.7} parent=1 // loop_header_branch
      %12 = sbr.rel (%p10) target = $region8
    $region5: #{rnn_forward.7} parent=1 // loop_body
      %s14 = ssub.s32 %s9, 1
      %s15 = ssub.s32 %s9, 2
      %s25 = sadd.s32 1, %s18
      %p26 = scmp.ge.s32.totalorder %s25, 1
      %s27 = scalar_select %p26, 0, %s25
      %s28 = sadd.s32 1, %s17
      %s29 = scalar_select %p26, %s28, %s17
      %p30 = scmp.ge.s32.totalorder %s29, 2
      %s31 = scalar_select %p30, 0, %s29
      %s32 = sadd.s32 1, %s16
      %s33 = scalar_select %p30, %s32, %s16
      %p34 = scmp.ge.s32.totalorder %s33, 1
      %s35 = scalar_select %p34, 0, %s33
      %s36 = ssub.s32 %s16, %s35
      %s37 = ssub.s32 %s18, %s27
      %s38 = sor.u32 %s36, %s37
      %p39 = scmp.eq.s32.totalorder %s38, 0
      %s41 = sadd.s32 %s40, 1
      %s42 = scalar_select %p39, %s40, %s41
      %p45 = pneg %p39
      %p46 = scmp.eq.s32.totalorder %s9, 1
      %p47 = por %p45, %p46
      %p48 = scmp.ne.s32.totalorder %s40, %s43
      %p49 = scmp.eq.s32.totalorder %s9, 0
      %p50 = por %p48, %p49
      %p51 = scmp.ne.s32.totalorder %s40, %s43
      %p52 = scmp.eq.s32.totalorder %s14, 1
      %p53 = por %p51, %p52
      %p54 = scmp.ne.s32.totalorder %s43, %s44
      %p55 = scmp.eq.s32.totalorder %s14, 0
      %p56 = por %p54, %p55
      %p57 = scmp.ne.s32.totalorder %s43, %s44
      %p58 = scmp.eq.s32.totalorder %s15, 1
      %p59 = por %p57, %p58
      %p61 = scmp.ne.s32.totalorder %s44, %s60
      %p62 = scmp.eq.s32.totalorder %s15, 0
      %p63 = por %p61, %p62
      %s64 = ssub.s32 %s18, %s27
      %s65 = ssub.s32 %s17, %s31
      %s66 = sor.u32 %s64, %s65
      %p67 = scmp.eq.s32.totalorder %s66, 0
      %s69 = sadd.s32 %s68, 1
      %s70 = scalar_select %p67, %s68, %s69
      %p73 = pneg %p67
      %p74 = scmp.eq.s32.totalorder %s9, 1
      %p75 = por %p73, %p74
      %p76 = scmp.ne.s32.totalorder %s68, %s71
      %p77 = scmp.eq.s32.totalorder %s9, 0
      %p78 = por %p76, %p77
      %p79 = scmp.ne.s32.totalorder %s68, %s71
      %p80 = scmp.eq.s32.totalorder %s14, 1
      %p81 = por %p79, %p80
      %p82 = scmp.ne.s32.totalorder %s71, %s72
      %p83 = scmp.eq.s32.totalorder %s14, 0
      %p84 = por %p82, %p83
      %p85 = scmp.ne.s32.totalorder %s71, %s72
      %p86 = scmp.eq.s32.totalorder %s15, 1
      %p87 = por %p85, %p86
      %p89 = scmp.ne.s32.totalorder %s72, %s88
      %p90 = scmp.eq.s32.totalorder %s15, 0
      %p91 = por %p89, %p90
      %s92 = ssub.s32 %s17, %s31
      %p93 = scmp.eq.s32.totalorder %s92, 0
      %s95 = sadd.s32 %s94, 1
      %s96 = scalar_select %p93, %s94, %s95
      %p99 = pneg %p93
      %p100 = scmp.eq.s32.totalorder %s9, 1
      %p101 = por %p99, %p100
      %p102 = scmp.ne.s32.totalorder %s94, %s97
      %p103 = scmp.eq.s32.totalorder %s9, 0
      %p104 = por %p102, %p103
      %p105 = scmp.ne.s32.totalorder %s94, %s97
      %p106 = scmp.eq.s32.totalorder %s14, 1
      %p107 = por %p105, %p106
      %p108 = scmp.ne.s32.totalorder %s97, %s98
      %p109 = scmp.eq.s32.totalorder %s14, 0
      %p110 = por %p108, %p109
      %p111 = scmp.ne.s32.totalorder %s97, %s98
      %p112 = scmp.eq.s32.totalorder %s15, 1
      %p113 = por %p111, %p112
      %p115 = scmp.ne.s32.totalorder %s98, %s114
      %p116 = scmp.eq.s32.totalorder %s15, 0
      %p117 = por %p115, %p116
      %s118 = ssub.s32 %s16, %s35
      %s119 = ssub.s32 %s17, %s31
      %s120 = sor.u32 %s118, %s119
      %p121 = scmp.eq.s32.totalorder %s120, 0
      %s123 = sadd.s32 %s122, 1
      %s124 = scalar_select %p121, %s122, %s123
      %p127 = pneg %p121
      %p128 = scmp.eq.s32.totalorder %s9, 1
      %p129 = por %p127, %p128
      %p130 = scmp.ne.s32.totalorder %s122, %s125
      %p131 = scmp.eq.s32.totalorder %s9, 0
      %p132 = por %p130, %p131
      %p133 = scmp.ne.s32.totalorder %s122, %s125
      %p134 = scmp.eq.s32.totalorder %s14, 1
      %p135 = por %p133, %p134
      %p136 = scmp.ne.s32.totalorder %s125, %s126
      %p137 = scmp.eq.s32.totalorder %s14, 0
      %p138 = por %p136, %p137
      %p139 = scmp.ne.s32.totalorder %s125, %s126
      %p140 = scmp.eq.s32.totalorder %s15, 1
      %p141 = por %p139, %p140
      %p143 = scmp.ne.s32.totalorder %s126, %s142
      %p144 = scmp.eq.s32.totalorder %s15, 0
      %p145 = por %p143, %p144
      %p146 = scmp.le.s32.totalorder 1, %s9
      %p147 = scmp.lt.s32.totalorder %s9, 3
      %p148 = pnand %p146, %p147
      %p149 = pneg %p148
      // Predicated region
      $region9: #{rnn_forward.7} parent=5 // pred_check
        _
      $region10: #{rnn_forward.7} parent=5 // pred_check_branch
        %151 = sbr.rel (%p148) target = $region12
      $region11: #{rnn_forward.7} parent=5 // pred_region
        %s152 = ssub.s32 %s9, 1
        // Predicated region
        $region13: #{rnn_forward.7} parent=11 // pred_check
          %p153 = pneg %p56
        $region14: #{rnn_forward.7} parent=11 // pred_check_branch
          %155 = sbr.rel (%p153) target = $region16
        $region15: #{rnn_forward.7} parent=11 // pred_region
          %s156 = smul.u32 8, %s19
          %p157 = scmp.lt.s32.totalorder %s156, 7
          %s158 = scalar_select %p157, %s156, 7
          %p159 = scmp.lt.s32.totalorder %s21, 0
          %s160 = scalar_select %p159, %s21, 0
          %s161 = sadd.s32 %s160, %s158
          %s162 = smul.addr %s161, 8
          %s163 = scalar_lea.vmem %s0, %s162
          %s164 = smul.u32 8, %s19
        $region16: #{rnn_forward.7} parent=11 // pred_fallthru
          _
      $region12: #{rnn_forward.7} parent=5 // pred_fallthru
        _
      %p165 = scmp.lt.s32.totalorder %s9, 2
      // Predicated region
      $region17: #{rnn_forward.7} parent=5 // pred_check
        %p166 = pneg %p165
      $region18: #{rnn_forward.7} parent=5 // pred_check_branch
        %168 = sbr.rel (%p166) target = $region20
      $region19: #{rnn_forward.7} parent=5 // pred_region
        // Predicated region
        $region21: #{rnn_forward.7} parent=19 // pred_check
          %p169 = pneg %p78
        $region22: #{rnn_forward.7} parent=19 // pred_check_branch
          %171 = sbr.rel (%p169) target = $region24
        $region23: #{rnn_forward.7} parent=19 // pred_region
          %s172 = sand.u32 %s68, 1
          %s173 = sand.u32 %s68, 1
          %s174 = smul.addr %s173, 256
          %s175 = scalar_lea.vmem [#allocation3], %s174
          %s176 = smul.u32 16, %s18
          %s177 = smul.u32 2, %s17
          %s178 = smul.addr %s176, 4
          %s179 = sadd.s32 %s177, %s178
          %s180 = smul.addr %s179, 8
          %s181 = scalar_lea.vmem %s1, %s180
          // Predicated region
          $region25: #{rnn_forward.7} parent=23 // pred_check
            _
          $region26: #{rnn_forward.7} parent=23 // pred_check_branch
            %183 = sbr.rel (0) target = $region28
          $region27: #{rnn_forward.7} parent=23 // pred_region
            // Predicated region
            $region29: #{rnn_forward.7} parent=27 // pred_check
              _
            $region30: #{rnn_forward.7} parent=27 // pred_check_branch
              %185 = sbr.rel (0) target = $region32
            $region31: #{rnn_forward.7} parent=27 // pred_region
              loop: start=0, step=1, limit=1
              $region33: #{rnn_forward.7} parent=31 // loop_pre_header
                _
              $region34: #{rnn_forward.7} parent=31 // loop_header
                %s187 = sphi 0, %s191
                %p188 = scmp.ge.s32.totalorder %s187, 1
                %s192 = sphi %s181, %s181
                %s193 = sphi %s175, %s175
              $region35: #{rnn_forward.7} parent=31 // loop_header_branch
                %190 = sbr.rel (%p188) target = $region39
              $region36: #{rnn_forward.7} parent=31 // loop_body
                %v194 = vld [vmem:[%s192] sm:$0xff]
                %195 = vst [vmem:[%s193] sm:$0xff] %v194
                %v196 = vld [vmem:[%s192 + $0x8] sm:$0xff]
                %197 = vst [vmem:[%s193 + $0x8] sm:$0xff] %v196
                %v198 = vld [vmem:[%s192 + $0x20] sm:$0xff]
                %199 = vst [vmem:[%s193 + $0x10] sm:$0xff] %v198
                %v200 = vld [vmem:[%s192 + $0x28] sm:$0xff]
                %201 = vst [vmem:[%s193 + $0x18] sm:$0xff] %v200
                %v202 = vld [vmem:[%s192 + $0x40] sm:$0xff]
                %203 = vst [vmem:[%s193 + $0x20] sm:$0xff] %v202
                %v204 = vld [vmem:[%s192 + $0x48] sm:$0xff]
                %205 = vst [vmem:[%s193 + $0x28] sm:$0xff] %v204
                %v206 = vld [vmem:[%s192 + $0x60] sm:$0xff]
                %207 = vst [vmem:[%s193 + $0x30] sm:$0xff] %v206
                %v208 = vld [vmem:[%s192 + $0x68] sm:$0xff]
                %209 = vst [vmem:[%s193 + $0x38] sm:$0xff] %v208
                %v210 = vld [vmem:[%s192 + $0x80] sm:$0xff]
                %211 = vst [vmem:[%s193 + $0x40] sm:$0xff] %v210
                %v212 = vld [vmem:[%s192 + $0x88] sm:$0xff]
                %213 = vst [vmem:[%s193 + $0x48] sm:$0xff] %v212
                %v214 = vld [vmem:[%s192 + $0xa0] sm:$0xff]
                %215 = vst [vmem:[%s193 + $0x50] sm:$0xff] %v214
                %v216 = vld [vmem:[%s192 + $0xa8] sm:$0xff]
                %217 = vst [vmem:[%s193 + $0x58] sm:$0xff] %v216
                %v218 = vld [vmem:[%s192 + $0xc0] sm:$0xff]
                %219 = vst [vmem:[%s193 + $0x60] sm:$0xff] %v218
                %v220 = vld [vmem:[%s192 + $0xc8] sm:$0xff]
                %221 = vst [vmem:[%s193 + $0x68] sm:$0xff] %v220
                %v222 = vld [vmem:[%s192 + $0xe0] sm:$0xff]
                %223 = vst [vmem:[%s193 + $0x70] sm:$0xff] %v222
                %v224 = vld [vmem:[%s192 + $0xe8] sm:$0xff]
                %225 = vst [vmem:[%s193 + $0x78] sm:$0xff] %v224
                %v226 = vld [vmem:[%s192 + $0x100] sm:$0xff]
                %227 = vst [vmem:[%s193 + $0x80] sm:$0xff] %v226
                %v228 = vld [vmem:[%s192 + $0x108] sm:$0xff]
                %229 = vst [vmem:[%s193 + $0x88] sm:$0xff] %v228
                %v230 = vld [vmem:[%s192 + $0x120] sm:$0xff]
                %231 = vst [vmem:[%s193 + $0x90] sm:$0xff] %v230
                %v232 = vld [vmem:[%s192 + $0x128] sm:$0xff]
                %233 = vst [vmem:[%s193 + $0x98] sm:$0xff] %v232
                %v234 = vld [vmem:[%s192 + $0x140] sm:$0xff]
                %235 = vst [vmem:[%s193 + $0xa0] sm:$0xff] %v234
                %v236 = vld [vmem:[%s192 + $0x148] sm:$0xff]
                %237 = vst [vmem:[%s193 + $0xa8] sm:$0xff] %v236
                %v238 = vld [vmem:[%s192 + $0x160] sm:$0xff]
                %239 = vst [vmem:[%s193 + $0xb0] sm:$0xff] %v238
                %v240 = vld [vmem:[%s192 + $0x168] sm:$0xff]
                %241 = vst [vmem:[%s193 + $0xb8] sm:$0xff] %v240
                %v242 = vld [vmem:[%s192 + $0x180] sm:$0xff]
                %243 = vst [vmem:[%s193 + $0xc0] sm:$0xff] %v242
                %v244 = vld [vmem:[%s192 + $0x188] sm:$0xff]
                %245 = vst [vmem:[%s193 + $0xc8] sm:$0xff] %v244
                %v246 = vld [vmem:[%s192 + $0x1a0] sm:$0xff]
                %247 = vst [vmem:[%s193 + $0xd0] sm:$0xff] %v246
                %v248 = vld [vmem:[%s192 + $0x1a8] sm:$0xff]
                %249 = vst [vmem:[%s193 + $0xd8] sm:$0xff] %v248
                %v250 = vld [vmem:[%s192 + $0x1c0] sm:$0xff]
                %251 = vst [vmem:[%s193 + $0xe0] sm:$0xff] %v250
                %v252 = vld [vmem:[%s192 + $0x1c8] sm:$0xff]
                %253 = vst [vmem:[%s193 + $0xe8] sm:$0xff] %v252
                %v254 = vld [vmem:[%s192 + $0x1e0] sm:$0xff]
                %255 = vst [vmem:[%s193 + $0xf0] sm:$0xff] %v254
                %v256 = vld [vmem:[%s192 + $0x1e8] sm:$0xff]
                %257 = vst [vmem:[%s193 + $0xf8] sm:$0xff] %v256
              $region37: #{rnn_forward.7} parent=31 // loop_footer
                %s191 = sadd.s32 1, %s187
              $region38: #{rnn_forward.7} parent=31 // loop_footer_branch
                %186 = sbr.rel target = $region34
              $region39: #{rnn_forward.7} parent=31 // loop_exit
                _
            $region32: #{rnn_forward.7} parent=27 // pred_fallthru
              _
            // Predicated region
            $region40: #{rnn_forward.7} parent=27 // pred_check
              _
            $region41: #{rnn_forward.7} parent=27 // pred_check_branch
              %259 = sbr.rel target = $region43
            $region42: #{rnn_forward.7} parent=27 // pred_region
              _
            $region43: #{rnn_forward.7} parent=27 // pred_fallthru
              _
          $region28: #{rnn_forward.7} parent=23 // pred_fallthru
            _
          %260 = vnop
        $region24: #{rnn_forward.7} parent=19 // pred_fallthru
          _
        // Predicated region
        $region44: #{rnn_forward.7} parent=19 // pred_check
          %p261 = pneg %p104
        $region45: #{rnn_forward.7} parent=19 // pred_check_branch
          %263 = sbr.rel (%p261) target = $region47
        $region46: #{rnn_forward.7} parent=19 // pred_region
          %s264 = smul.u32 2, %s17
          %p265 = scmp.lt.s32.totalorder %s264, 3
          %s266 = scalar_select %p265, %s264, 3
          %s267 = scalar_lea.vmem %s2, %s266
          %s268 = smul.u32 2, %s17
        $region47: #{rnn_forward.7} parent=19 // pred_fallthru
          _
      $region20: #{rnn_forward.7} parent=5 // pred_fallthru
        _
      %p269 = scmp.le.s32.totalorder 1, %s9
      %p270 = scmp.lt.s32.totalorder %s9, 3
      %p271 = pnand %p269, %p270
      %p272 = pneg %p271
      // Predicated region
      $region48: #{rnn_forward.7} parent=5 // pred_check
        _
      $region49: #{rnn_forward.7} parent=5 // pred_check_branch
        %274 = sbr.rel (%p271) target = $region51
      $region50: #{rnn_forward.7} parent=5 // pred_region
        %s275 = ssub.s32 %s9, 1
        %s276 = sand.u32 %s71, 1
        %s277 = sand.u32 %s71, 1
        %s278 = smul.addr %s277, 256
        %s279 = scalar_lea.vmem [#allocation3], %s278
        // Predicated region
        $region52: #{rnn_forward.7} parent=50 // pred_check
          %p280 = pneg %p84
        $region53: #{rnn_forward.7} parent=50 // pred_check_branch
          %282 = sbr.rel (%p280) target = $region55
        $region54: #{rnn_forward.7} parent=50 // pred_region
          _
        $region55: #{rnn_forward.7} parent=50 // pred_fallthru
          _
        %s283 = smul.u32 8, %s19
        %p284 = scmp.lt.s32.totalorder %s283, 7
        %s285 = scalar_select %p284, %s283, 7
        %p286 = scmp.lt.s32.totalorder %s21, 0
        %s287 = scalar_select %p286, %s21, 0
        %s288 = sadd.s32 %s287, %s285
        %s289 = smul.addr %s288, 8
        %s290 = scalar_lea.vmem %s0, %s289
        %p291 = pneg %p56
        %p292 = pneg %p53
        %s293 = sand.u32 %s71, 1
        %s294 = sand.u32 %s71, 1
        %s295 = smul.addr %s294, 256
        %s296 = scalar_lea.vmem [#allocation3], %s295
        %p297 = pneg %p84
        %p298 = pneg %p81
        %s299 = smul.u32 2, %s20
        %p300 = scmp.lt.s32.totalorder %s299, 3
        %s301 = scalar_select %p300, %s299, 3
        %s302 = scalar_lea.vmem %s2, %s301
        %p303 = pneg %p110
        %p304 = pneg %p107
        %p305 = pneg %p138
        %p306 = pneg %p135
        %s307 = sand.u32 %s125, 1
        %s308 = sand.u32 %s125, 1
        %s309 = smul.addr %s308, 128
        %s310 = scalar_lea.vmem [#allocation4], %s309
        %s311 = smul.u32 8, %s19
        %p312 = scmp.lt.s32.totalorder %s311, 7
        %s313 = scalar_select %p312, %s311, 7
        %p314 = scmp.lt.s32.totalorder %s21, 0
        %s315 = scalar_select %p314, %s21, 0
        %s316 = sadd.s32 %s315, %s313
        %s317 = smul.addr %s316, 8
        %s318 = scalar_lea.vmem %s0, %s317
        %s319 = smul.u32 8, %s19
        %s320 = smul.u32 16, %s21
        %s321 = smul.u32 2, %s20
        %s322 = smul.u32 2, %s20
        %p323 = scmp.lt.s32.totalorder %s322, 3
        %s324 = scalar_select %p323, %s322, 3
        %s325 = scalar_lea.vmem %s2, %s324
        %s326 = smul.u32 2, %s20
        %s327 = smul.u32 8, %s19
        %s328 = smul.u32 2, %s20
        %p329 = scmp.eq.s32.totalorder %s21, 0
        // Predicated region
        $region56: #{rnn_forward.7} parent=50 // pred_check
          %p330 = pneg %p329
        $region57: #{rnn_forward.7} parent=50 // pred_check_branch
          %332 = sbr.rel (%p330) target = $region59
        $region58: #{rnn_forward.7} parent=50 // pred_region
          %333 = vst [vmem:[#allocation2] sm:$0xff] 0.0
          %334 = vst [vmem:[#allocation2 + $0x8] sm:$0xff] 0.0
          %335 = vst [vmem:[#allocation2 + $0x10] sm:$0xff] 0.0
          %336 = vst [vmem:[#allocation2 + $0x18] sm:$0xff] 0.0
          %337 = vst [vmem:[#allocation2 + $0x20] sm:$0xff] 0.0
          %338 = vst [vmem:[#allocation2 + $0x28] sm:$0xff] 0.0
          %339 = vst [vmem:[#allocation2 + $0x30] sm:$0xff] 0.0
          %340 = vst [vmem:[#allocation2 + $0x38] sm:$0xff] 0.0
          %341 = vst [vmem:[#allocation2 + $0x40] sm:$0xff] 0.0
          %342 = vst [vmem:[#allocation2 + $0x48] sm:$0xff] 0.0
          %343 = vst [vmem:[#allocation2 + $0x50] sm:$0xff] 0.0
          %344 = vst [vmem:[#allocation2 + $0x58] sm:$0xff] 0.0
          %345 = vst [vmem:[#allocation2 + $0x60] sm:$0xff] 0.0
          %346 = vst [vmem:[#allocation2 + $0x68] sm:$0xff] 0.0
          %347 = vst [vmem:[#allocation2 + $0x70] sm:$0xff] 0.0
          %348 = vst [vmem:[#allocation2 + $0x78] sm:$0xff] 0.0
        $region59: #{rnn_forward.7} parent=50 // pred_fallthru
          _
        %v349 = vld [vmem:[#allocation2] sm:$0xff]
        %v350 = vld [vmem:[#allocation2 + $0x8] sm:$0xff]
        %v351 = vld [vmem:[#allocation2 + $0x10] sm:$0xff]
        %v352 = vld [vmem:[#allocation2 + $0x18] sm:$0xff]
        %v353 = vld [vmem:[#allocation2 + $0x20] sm:$0xff]
        %v354 = vld [vmem:[#allocation2 + $0x28] sm:$0xff]
        %v355 = vld [vmem:[#allocation2 + $0x30] sm:$0xff]
        %v356 = vld [vmem:[#allocation2 + $0x38] sm:$0xff]
        %v357 = vld [vmem:[#allocation2 + $0x40] sm:$0xff]
        %v358 = vld [vmem:[#allocation2 + $0x48] sm:$0xff]
        %v359 = vld [vmem:[#allocation2 + $0x50] sm:$0xff]
        %v360 = vld [vmem:[#allocation2 + $0x58] sm:$0xff]
        %v361 = vld [vmem:[#allocation2 + $0x60] sm:$0xff]
        %v362 = vld [vmem:[#allocation2 + $0x68] sm:$0xff]
        %v363 = vld [vmem:[#allocation2 + $0x70] sm:$0xff]
        %v364 = vld [vmem:[#allocation2 + $0x78] sm:$0xff]
        %v365 = vld [vmem:[%s318] sm:$0xff]
        %v366 = vld [vmem:[%s318 + $0x8] sm:$0xff]
        %v367 = vld [vmem:[%s318 + $0x10] sm:$0xff]
        %v368 = vld [vmem:[%s318 + $0x18] sm:$0xff]
        %v369 = vld [vmem:[%s318 + $0x20] sm:$0xff]
        %v370 = vld [vmem:[%s318 + $0x28] sm:$0xff]
        %v371 = vld [vmem:[%s318 + $0x30] sm:$0xff]
        %v372 = vld [vmem:[%s318 + $0x38] sm:$0xff]
        %v373 = vld [vmem:[%s279] sm:$0xff]
        %v374 = vld [vmem:[%s279 + $0x8] sm:$0xff]
        %v375 = vld [vmem:[%s279 + $0x10] sm:$0xff]
        %v376 = vld [vmem:[%s279 + $0x18] sm:$0xff]
        %v377 = vld [vmem:[%s279 + $0x20] sm:$0xff]
        %v378 = vld [vmem:[%s279 + $0x28] sm:$0xff]
        %v379 = vld [vmem:[%s279 + $0x30] sm:$0xff]
        %v380 = vld [vmem:[%s279 + $0x38] sm:$0xff]
        %v381 = vld [vmem:[%s279 + $0x40] sm:$0xff]
        %v382 = vld [vmem:[%s279 + $0x48] sm:$0xff]
        %v383 = vld [vmem:[%s279 + $0x50] sm:$0xff]
        %v384 = vld [vmem:[%s279 + $0x58] sm:$0xff]
        %v385 = vld [vmem:[%s279 + $0x60] sm:$0xff]
        %v386 = vld [vmem:[%s279 + $0x68] sm:$0xff]
        %v387 = vld [vmem:[%s279 + $0x70] sm:$0xff]
        %v388 = vld [vmem:[%s279 + $0x78] sm:$0xff]
        %v389 = vld [vmem:[%s279 + $0x80] sm:$0xff]
        %v390 = vld [vmem:[%s279 + $0x88] sm:$0xff]
        %v391 = vld [vmem:[%s279 + $0x90] sm:$0xff]
        %v392 = vld [vmem:[%s279 + $0x98] sm:$0xff]
        %v393 = vld [vmem:[%s279 + $0xa0] sm:$0xff]
        %v394 = vld [vmem:[%s279 + $0xa8] sm:$0xff]
        %v395 = vld [vmem:[%s279 + $0xb0] sm:$0xff]
        %v396 = vld [vmem:[%s279 + $0xb8] sm:$0xff]
        %v397 = vld [vmem:[%s279 + $0xc0] sm:$0xff]
        %v398 = vld [vmem:[%s279 + $0xc8] sm:$0xff]
        %v399 = vld [vmem:[%s279 + $0xd0] sm:$0xff]
        %v400 = vld [vmem:[%s279 + $0xd8] sm:$0xff]
        %v401 = vld [vmem:[%s279 + $0xe0] sm:$0xff]
        %v402 = vld [vmem:[%s279 + $0xe8] sm:$0xff]
        %v403 = vld [vmem:[%s279 + $0xf0] sm:$0xff]
        %v404 = vld [vmem:[%s279 + $0xf8] sm:$0xff]
        %405 = vmatprep.subr.mxu0 %v404
        %406 = vmatpush1.msra.mxu0 %v403
        %407 = vmatprep.subr.mxu0 %v402
        %408 = vmatpush1.msra.mxu0 %v401
        %409 = vmatprep.subr.mxu0 %v400
        %410 = vmatpush1.msra.mxu0 %v399
        %411 = vmatprep.subr.mxu0 %v398
        %412 = vmatpush1.msra.mxu0 %v397
        %413 = vmatprep.subr.mxu0 %v396
        %414 = vmatpush1.msra.mxu0 %v395
        %415 = vmatprep.subr.mxu0 %v394
        %416 = vmatpush1.msra.mxu0 %v393
        %417 = vmatprep.subr.mxu0 %v392
        %418 = vmatpush1.msra.mxu0 %v391
        %419 = vmatprep.subr.mxu0 %v390
        %420 = vmatpush1.msra.mxu0 %v389
        %421 = vmatprep.subr.mxu0 %v388
        %422 = vmatpush1.msra.mxu0 %v387
        %423 = vmatprep.subr.mxu0 %v386
        %424 = vmatpush1.msra.mxu0 %v385
        %425 = vmatprep.subr.mxu0 %v384
        %426 = vmatpush1.msra.mxu0 %v383
        %427 = vmatprep.subr.mxu0 %v382
        %428 = vmatpush1.msra.mxu0 %v381
        %429 = vmatprep.subr.mxu0 %v380
        %430 = vmatpush1.msra.mxu0 %v379
        %431 = vmatprep.subr.mxu0 %v378
        %432 = vmatpush1.msra.mxu0 %v377
        %433 = vmatprep.subr.mxu0 %v376
        %434 = vmatpush1.msra.mxu0 %v375
        %435 = vmatprep.subr.mxu0 %v374
        %436 = vmatpush1.msra.mxu0 %v373
        %437 = vmatprep.subr.mxu0 0.0
        %438 = vmatpush2.msra.mxu0 0.0
        %439 = vmatprep.subr.mxu0 0.0
        %440 = vmatpush2.msra.mxu0 0.0
        %441 = vmatprep.subr.mxu0 0.0
        %442 = vmatpush2.msra.mxu0 0.0
        %443 = vmatprep.subr.mxu0 0.0
        %444 = vmatpush2.msra.mxu0 0.0
        %445 = vmatprep.subr.mxu0 0.0
        %446 = vmatpush2.msra.mxu0 0.0
        %447 = vmatprep.subr.mxu0 0.0
        %448 = vmatpush2.msra.mxu0 0.0
        %449 = vmatprep.subr.mxu0 0.0
        %450 = vmatpush2.msra.mxu0 0.0
        %451 = vmatprep.subr.mxu0 0.0
        %452 = vmatpush2.msra.mxu0 0.0
        %453 = vmatprep.subr.mxu0 0.0
        %454 = vmatpush2.msra.mxu0 0.0
        %455 = vmatprep.subr.mxu0 0.0
        %456 = vmatpush2.msra.mxu0 0.0
        %457 = vmatprep.subr.mxu0 0.0
        %458 = vmatpush2.msra.mxu0 0.0
        %459 = vmatprep.subr.mxu0 0.0
        %460 = vmatpush2.msra.mxu0 0.0
        %461 = vmatprep.subr.mxu0 0.0
        %462 = vmatpush2.msra.mxu0 0.0
        %463 = vmatprep.subr.mxu0 0.0
        %464 = vmatpush2.msra.mxu0 0.0
        %465 = vmatprep.subr.mxu0 0.0
        %466 = vmatpush2.msra.mxu0 0.0
        %467 = vmatprep.subr.mxu0 0.0
        %468 = vmatpush2.msra.mxu0 0.0
        %469 = vmatprep.mubr.f32.mxu0 0.0
        %470 = vmatmul.mubr.f32.gmra.mxu0 %v365
        %v471 = vpop.f32.mrf.mxu0
        %v472 = vadd.f32 0.0, %v471
        %v473 = vpop.f32.mrf.mxu0
        %v474 = vadd.f32 0.0, %v473
        %475 = vmatprep.mubr.f32.mxu0 0.0
        %476 = vmatmul.mubr.f32.gmra.mxu0 %v366
        %v477 = vpop.f32.mrf.mxu0
        %v478 = vadd.f32 0.0, %v477
        %v479 = vpop.f32.mrf.mxu0
        %v480 = vadd.f32 0.0, %v479
        %481 = vmatprep.mubr.f32.mxu0 0.0
        %482 = vmatmul.mubr.f32.gmra.mxu0 %v367
        %v483 = vpop.f32.mrf.mxu0
        %v484 = vadd.f32 0.0, %v483
        %v485 = vpop.f32.mrf.mxu0
        %v486 = vadd.f32 0.0, %v485
        %487 = vmatprep.mubr.f32.mxu0 0.0
        %488 = vmatmul.mubr.f32.gmra.mxu0 %v368
        %v489 = vpop.f32.mrf.mxu0
        %v490 = vadd.f32 0.0, %v489
        %v491 = vpop.f32.mrf.mxu0
        %v492 = vadd.f32 0.0, %v491
        %493 = vmatprep.mubr.f32.mxu0 0.0
        %494 = vmatmul.mubr.f32.gmra.mxu0 %v369
        %v495 = vpop.f32.mrf.mxu0
        %v496 = vadd.f32 0.0, %v495
        %v497 = vpop.f32.mrf.mxu0
        %v498 = vadd.f32 0.0, %v497
        %499 = vmatprep.mubr.f32.mxu0 0.0
        %500 = vmatmul.mubr.f32.gmra.mxu0 %v370
        %v501 = vpop.f32.mrf.mxu0
        %v502 = vadd.f32 0.0, %v501
        %v503 = vpop.f32.mrf.mxu0
        %v504 = vadd.f32 0.0, %v503
        %505 = vmatprep.mubr.f32.mxu0 0.0
        %506 = vmatmul.mubr.f32.gmra.mxu0 %v371
        %v507 = vpop.f32.mrf.mxu0
        %v508 = vadd.f32 0.0, %v507
        %v509 = vpop.f32.mrf.mxu0
        %v510 = vadd.f32 0.0, %v509
        %511 = vmatprep.mubr.f32.mxu0 0.0
        %512 = vmatmul.mubr.f32.gmra.mxu0 %v372
        %v513 = vpop.f32.mrf.mxu0
        %v514 = vadd.f32 0.0, %v513
        %v515 = vpop.f32.mrf.mxu0
        %v516 = vadd.f32 0.0, %v515
        %517 = vdwg.mxu0
        %v518 = vadd.f32 %v349, %v472
        %v519 = vadd.f32 %v350, %v474
        %v520 = vadd.f32 %v351, %v478
        %v521 = vadd.f32 %v352, %v480
        %v522 = vadd.f32 %v353, %v484
        %v523 = vadd.f32 %v354, %v486
        %v524 = vadd.f32 %v355, %v490
        %v525 = vadd.f32 %v356, %v492
        %v526 = vadd.f32 %v357, %v496
        %v527 = vadd.f32 %v358, %v498
        %v528 = vadd.f32 %v359, %v502
        %v529 = vadd.f32 %v360, %v504
        %v530 = vadd.f32 %v361, %v508
        %v531 = vadd.f32 %v362, %v510
        %v532 = vadd.f32 %v363, %v514
        %v533 = vadd.f32 %v364, %v516
        %534 = vst [vmem:[#allocation2] sm:$0xff] %v518
        %535 = vst [vmem:[#allocation2 + $0x8] sm:$0xff] %v519
        %536 = vst [vmem:[#allocation2 + $0x10] sm:$0xff] %v520
        %537 = vst [vmem:[#allocation2 + $0x18] sm:$0xff] %v521
        %538 = vst [vmem:[#allocation2 + $0x20] sm:$0xff] %v522
        %539 = vst [vmem:[#allocation2 + $0x28] sm:$0xff] %v523
        %540 = vst [vmem:[#allocation2 + $0x30] sm:$0xff] %v524
        %541 = vst [vmem:[#allocation2 + $0x38] sm:$0xff] %v525
        %542 = vst [vmem:[#allocation2 + $0x40] sm:$0xff] %v526
        %543 = vst [vmem:[#allocation2 + $0x48] sm:$0xff] %v527
        %544 = vst [vmem:[#allocation2 + $0x50] sm:$0xff] %v528
        %545 = vst [vmem:[#allocation2 + $0x58] sm:$0xff] %v529
        %546 = vst [vmem:[#allocation2 + $0x60] sm:$0xff] %v530
        %547 = vst [vmem:[#allocation2 + $0x68] sm:$0xff] %v531
        %548 = vst [vmem:[#allocation2 + $0x70] sm:$0xff] %v532
        %549 = vst [vmem:[#allocation2 + $0x78] sm:$0xff] %v533
        // Predicated region
        $region60: #{rnn_forward.7} parent=50 // pred_check
          %p550 = pneg %p329
        $region61: #{rnn_forward.7} parent=50 // pred_check_branch
          %552 = sbr.rel (%p550) target = $region63
        $region62: #{rnn_forward.7} parent=50 // pred_region
          %v553 = vld [vmem:[#allocation2] sm:$0xff]
          %v554 = vld [vmem:[#allocation2 + $0x8] sm:$0xff]
          %v555 = vld [vmem:[#allocation2 + $0x10] sm:$0xff]
          %v556 = vld [vmem:[#allocation2 + $0x18] sm:$0xff]
          %v557 = vld [vmem:[#allocation2 + $0x20] sm:$0xff]
          %v558 = vld [vmem:[#allocation2 + $0x28] sm:$0xff]
          %v559 = vld [vmem:[#allocation2 + $0x30] sm:$0xff]
          %v560 = vld [vmem:[#allocation2 + $0x38] sm:$0xff]
          %v561 = vld [vmem:[#allocation2 + $0x40] sm:$0xff]
          %v562 = vld [vmem:[#allocation2 + $0x48] sm:$0xff]
          %v563 = vld [vmem:[#allocation2 + $0x50] sm:$0xff]
          %v564 = vld [vmem:[#allocation2 + $0x58] sm:$0xff]
          %v565 = vld [vmem:[#allocation2 + $0x60] sm:$0xff]
          %v566 = vld [vmem:[#allocation2 + $0x68] sm:$0xff]
          %v567 = vld [vmem:[#allocation2 + $0x70] sm:$0xff]
          %v568 = vld [vmem:[#allocation2 + $0x78] sm:$0xff]
          %v569 = vld [vmem:[%s325] sm:$0x3]
          %v571 = vlaneseq
          %v572 = vshrl.u32 %v571, 7
          %v573 = vsub.s32 0, %v572
          %v574 = vrot.slane %v569, %v573
          %v575 = vlaneseq
          %v576 = vshrl.u32 %v575, 7
          %v577 = vsub.s32 1, %v576
          %v578 = vrot.slane %v569, %v577
          %v581 = vadd.f32 %v553, %v574
          %v582 = vadd.f32 %v554, %v578
          %v583 = vadd.f32 %v555, %v574
          %v584 = vadd.f32 %v556, %v578
          %v585 = vadd.f32 %v557, %v574
          %v586 = vadd.f32 %v558, %v578
          %v587 = vadd.f32 %v559, %v574
          %v588 = vadd.f32 %v560, %v578
          %v589 = vadd.f32 %v561, %v574
          %v590 = vadd.f32 %v562, %v578
          %v591 = vadd.f32 %v563, %v574
          %v592 = vadd.f32 %v564, %v578
          %v593 = vadd.f32 %v565, %v574
          %v594 = vadd.f32 %v566, %v578
          %v595 = vadd.f32 %v567, %v574
          %v596 = vadd.f32 %v568, %v578
          %597 = vst [vmem:[%s310] sm:$0xff] %v581
          %598 = vst [vmem:[%s310 + $0x8] sm:$0xff] %v582
          %599 = vst [vmem:[%s310 + $0x10] sm:$0xff] %v583
          %600 = vst [vmem:[%s310 + $0x18] sm:$0xff] %v584
          %601 = vst [vmem:[%s310 + $0x20] sm:$0xff] %v585
          %602 = vst [vmem:[%s310 + $0x28] sm:$0xff] %v586
          %603 = vst [vmem:[%s310 + $0x30] sm:$0xff] %v587
          %604 = vst [vmem:[%s310 + $0x38] sm:$0xff] %v588
          %605 = vst [vmem:[%s310 + $0x40] sm:$0xff] %v589
          %606 = vst [vmem:[%s310 + $0x48] sm:$0xff] %v590
          %607 = vst [vmem:[%s310 + $0x50] sm:$0xff] %v591
          %608 = vst [vmem:[%s310 + $0x58] sm:$0xff] %v592
          %609 = vst [vmem:[%s310 + $0x60] sm:$0xff] %v593
          %610 = vst [vmem:[%s310 + $0x68] sm:$0xff] %v594
          %611 = vst [vmem:[%s310 + $0x70] sm:$0xff] %v595
          %612 = vst [vmem:[%s310 + $0x78] sm:$0xff] %v596
        $region63: #{rnn_forward.7} parent=50 // pred_fallthru
          _
        %s613 = sand.u32 %s125, 1
        %s614 = sand.u32 %s125, 1
        %s615 = smul.addr %s614, 128
        %s616 = scalar_lea.vmem [#allocation4], %s615
        // Predicated region
        $region64: #{rnn_forward.7} parent=50 // pred_check
          %p617 = pneg %p135
        $region65: #{rnn_forward.7} parent=50 // pred_check_branch
          %619 = sbr.rel (%p617) target = $region67
        $region66: #{rnn_forward.7} parent=50 // pred_region
          %s620 = smul.u32 8, %s19
          %s621 = smul.u32 2, %s20
          %s622 = smul.addr %s620, 4
          %s623 = sadd.s32 %s621, %s622
          %s624 = smul.addr %s623, 8
          %s625 = scalar_lea.vmem %s3, %s624
          // Predicated region
          $region68: #{rnn_forward.7} parent=66 // pred_check
            _
          $region69: #{rnn_forward.7} parent=66 // pred_check_branch
            %627 = sbr.rel (0) target = $region71
          $region70: #{rnn_forward.7} parent=66 // pred_region
            // Predicated region
            $region72: #{rnn_forward.7} parent=70 // pred_check
              _
            $region73: #{rnn_forward.7} parent=70 // pred_check_branch
              %629 = sbr.rel (0) target = $region75
            $region74: #{rnn_forward.7} parent=70 // pred_region
              loop: start=0, step=1, limit=1
              $region76: #{rnn_forward.7} parent=74 // loop_pre_header
                _
              $region77: #{rnn_forward.7} parent=74 // loop_header
                %s631 = sphi 0, %s635
                %p632 = scmp.ge.s32.totalorder %s631, 1
                %s636 = sphi %s616, %s616
                %s637 = sphi %s625, %s625
              $region78: #{rnn_forward.7} parent=74 // loop_header_branch
                %634 = sbr.rel (%p632) target = $region82
              $region79: #{rnn_forward.7} parent=74 // loop_body
                %v638 = vld [vmem:[%s636] sm:$0xff]
                %639 = vst [vmem:[%s637] sm:$0xff] %v638
                %v640 = vld [vmem:[%s636 + $0x8] sm:$0xff]
                %641 = vst [vmem:[%s637 + $0x8] sm:$0xff] %v640
                %v642 = vld [vmem:[%s636 + $0x10] sm:$0xff]
                %643 = vst [vmem:[%s637 + $0x20] sm:$0xff] %v642
                %v644 = vld [vmem:[%s636 + $0x18] sm:$0xff]
                %645 = vst [vmem:[%s637 + $0x28] sm:$0xff] %v644
                %v646 = vld [vmem:[%s636 + $0x20] sm:$0xff]
                %647 = vst [vmem:[%s637 + $0x40] sm:$0xff] %v646
                %v648 = vld [vmem:[%s636 + $0x28] sm:$0xff]
                %649 = vst [vmem:[%s637 + $0x48] sm:$0xff] %v648
                %v650 = vld [vmem:[%s636 + $0x30] sm:$0xff]
                %651 = vst [vmem:[%s637 + $0x60] sm:$0xff] %v650
                %v652 = vld [vmem:[%s636 + $0x38] sm:$0xff]
                %653 = vst [vmem:[%s637 + $0x68] sm:$0xff] %v652
                %v654 = vld [vmem:[%s636 + $0x40] sm:$0xff]
                %655 = vst [vmem:[%s637 + $0x80] sm:$0xff] %v654
                %v656 = vld [vmem:[%s636 + $0x48] sm:$0xff]
                %657 = vst [vmem:[%s637 + $0x88] sm:$0xff] %v656
                %v658 = vld [vmem:[%s636 + $0x50] sm:$0xff]
                %659 = vst [vmem:[%s637 + $0xa0] sm:$0xff] %v658
                %v660 = vld [vmem:[%s636 + $0x58] sm:$0xff]
                %661 = vst [vmem:[%s637 + $0xa8] sm:$0xff] %v660
                %v662 = vld [vmem:[%s636 + $0x60] sm:$0xff]
                %663 = vst [vmem:[%s637 + $0xc0] sm:$0xff] %v662
                %v664 = vld [vmem:[%s636 + $0x68] sm:$0xff]
                %665 = vst [vmem:[%s637 + $0xc8] sm:$0xff] %v664
                %v666 = vld [vmem:[%s636 + $0x70] sm:$0xff]
                %667 = vst [vmem:[%s637 + $0xe0] sm:$0xff] %v666
                %v668 = vld [vmem:[%s636 + $0x78] sm:$0xff]
                %669 = vst [vmem:[%s637 + $0xe8] sm:$0xff] %v668
              $region80: #{rnn_forward.7} parent=74 // loop_footer
                %s635 = sadd.s32 1, %s631
              $region81: #{rnn_forward.7} parent=74 // loop_footer_branch
                %630 = sbr.rel target = $region77
              $region82: #{rnn_forward.7} parent=74 // loop_exit
                _
            $region75: #{rnn_forward.7} parent=70 // pred_fallthru
              _
            // Predicated region
            $region83: #{rnn_forward.7} parent=70 // pred_check
              _
            $region84: #{rnn_forward.7} parent=70 // pred_check_branch
              %671 = sbr.rel target = $region86
            $region85: #{rnn_forward.7} parent=70 // pred_region
              _
            $region86: #{rnn_forward.7} parent=70 // pred_fallthru
              _
          $region71: #{rnn_forward.7} parent=66 // pred_fallthru
            _
          %672 = vnop
        $region67: #{rnn_forward.7} parent=50 // pred_fallthru
          _
      $region51: #{rnn_forward.7} parent=5 // pred_fallthru
        _
      %p673 = scmp.le.s32.totalorder 2, %s9
      // Predicated region
      $region87: #{rnn_forward.7} parent=5 // pred_check
        %p674 = pneg %p673
      $region88: #{rnn_forward.7} parent=5 // pred_check_branch
        %676 = sbr.rel (%p674) target = $region90
      $region89: #{rnn_forward.7} parent=5 // pred_region
        %s677 = ssub.s32 %s9, 2
        // Predicated region
        $region91: #{rnn_forward.7} parent=89 // pred_check
          %p678 = pneg %p141
        $region92: #{rnn_forward.7} parent=89 // pred_check_branch
          %680 = sbr.rel (%p678) target = $region94
        $region93: #{rnn_forward.7} parent=89 // pred_region
          %s681 = sand.u32 %s126, 1
          %s682 = sand.u32 %s126, 1
          %s683 = smul.addr %s682, 128
          %s684 = scalar_lea.vmem [#allocation4], %s683
        $region94: #{rnn_forward.7} parent=89 // pred_fallthru
          _
      $region90: #{rnn_forward.7} parent=5 // pred_fallthru
        _
    $region6: #{rnn_forward.7} parent=1 // loop_footer
      %s13 = sadd.s32 1, %s9
    $region7: #{rnn_forward.7} parent=1 // loop_footer_branch
      %8 = sbr.rel target = $region3
    $region8: #{rnn_forward.7} parent=1 // loop_exit
      _

// kernel: rnn_forward.5
$region0: #{rnn_forward.5}
  #allocation0 [shape = 'u32[]', space=smem, size = 0x4, offset = 0x4, fixed_abs, tag = 'smem constant byte address 0x4 - core index']
  #allocation1 [shape = 'u32[144,128]{1,0:T(1,128)}', space=vmem, size = 0x12000, scoped, tag = 'internal scratch']
  #allocation2 [shape = 'f32[64,256]{1,0:T(8,128)}', space=vmem, size = 0x10000, scoped, tag = 'scratch operand']
  %s0 = inlined_call_operand.vmem [shape: f32[64,16], index: 0, kind: input, shape index: {}]
  %s1 = inlined_call_operand.vmem [shape: f32[16,512], index: 1, kind: input, shape index: {}]
  %s2 = inlined_call_operand.vmem [shape: f32[1,512], index: 2, kind: input, shape index: {}]
  %s3 = inlined_call_operand.vmem [shape: f32[64,512], index: 3, kind: output, shape index: {}]
  %s4 = sld [smem:[#allocation0]]
  $region95: #{rnn_forward.5} parent=0
    _
  %s6 = ssub.s32 1, %s4
  %s7 = scalar_select 0, %s6, %s4
  $region1: #{rnn_forward.5} parent=0
    #allocation3 [shape = 'u8[32768]{0}', space=vmem, size = 0x8000, scoped, tag = 'input window, operand 1']
    #allocation4 [shape = 'u8[131072]{0}', space=vmem, size = 0x20000, scoped, tag = 'output window, operand 0']
    loop: start=0, step=1, limit=4
    $region2: #{rnn_forward.5} parent=1 // loop_pre_header
      _
    $region3: #{rnn_forward.5} parent=1 // loop_header
      %s9 = sphi 0, %s13
      %p10 = scmp.ge.s32.totalorder %s9, 4
      %s16 = sphi 0, %s35
      %s17 = sphi 0, %s31
      %s18 = sphi 0, %s27
      %s19 = sphi 0, %s16
      %s20 = sphi 0, %s17
      %s21 = sphi 0, %s18
      %s22 = sphi 0, %s19
      %s23 = sphi 0, %s20
      %s24 = sphi 0, %s21
      %s40 = sphi 0, %s42
      %s43 = sphi 0, %s40
      %s44 = sphi 0, %s43
      %s60 = sphi 0, %s44
      %s68 = sphi 0, %s70
      %s71 = sphi 0, %s68
      %s72 = sphi 0, %s71
      %s88 = sphi 0, %s72
      %s94 = sphi 0, %s96
      %s97 = sphi 0, %s94
      %s98 = sphi 0, %s97
      %s114 = sphi 0, %s98
      %s122 = sphi 0, %s124
      %s125 = sphi 0, %s122
      %s126 = sphi 0, %s125
      %s142 = sphi 0, %s126
    $region4: #{rnn_forward.5} parent=1 // loop_header_branch
      %12 = sbr.rel (%p10) target = $region8
    $region5: #{rnn_forward.5} parent=1 // loop_body
      %s14 = ssub.s32 %s9, 1
      %s15 = ssub.s32 %s9, 2
      %s25 = sadd.s32 1, %s18
      %p26 = scmp.ge.s32.totalorder %s25, 1
      %s27 = scalar_select %p26, 0, %s25
      %s28 = sadd.s32 1, %s17
      %s29 = scalar_select %p26, %s28, %s17
      %p30 = scmp.ge.s32.totalorder %s29, 2
      %s31 = scalar_select %p30, 0, %s29
      %s32 = sadd.s32 1, %s16
      %s33 = scalar_select %p30, %s32, %s16
      %p34 = scmp.ge.s32.totalorder %s33, 1
      %s35 = scalar_select %p34, 0, %s33
      %s36 = ssub.s32 %s16, %s35
      %s37 = ssub.s32 %s18, %s27
      %s38 = sor.u32 %s36, %s37
      %p39 = scmp.eq.s32.totalorder %s38, 0
      %s41 = sadd.s32 %s40, 1
      %s42 = scalar_select %p39, %s40, %s41
      %p45 = pneg %p39
      %p46 = scmp.eq.s32.totalorder %s9, 1
      %p47 = por %p45, %p46
      %p48 = scmp.ne.s32.totalorder %s40, %s43
      %p49 = scmp.eq.s32.totalorder %s9, 0
      %p50 = por %p48, %p49
      %p51 = scmp.ne.s32.totalorder %s40, %s43
      %p52 = scmp.eq.s32.totalorder %s14, 1
      %p53 = por %p51, %p52
      %p54 = scmp.ne.s32.totalorder %s43, %s44
      %p55 = scmp.eq.s32.totalorder %s14, 0
      %p56 = por %p54, %p55
      %p57 = scmp.ne.s32.totalorder %s43, %s44
      %p58 = scmp.eq.s32.totalorder %s15, 1
      %p59 = por %p57, %p58
      %p61 = scmp.ne.s32.totalorder %s44, %s60
      %p62 = scmp.eq.s32.totalorder %s15, 0
      %p63 = por %p61, %p62
      %s64 = ssub.s32 %s18, %s27
      %s65 = ssub.s32 %s17, %s31
      %s66 = sor.u32 %s64, %s65
      %p67 = scmp.eq.s32.totalorder %s66, 0
      %s69 = sadd.s32 %s68, 1
      %s70 = scalar_select %p67, %s68, %s69
      %p73 = pneg %p67
      %p74 = scmp.eq.s32.totalorder %s9, 1
      %p75 = por %p73, %p74
      %p76 = scmp.ne.s32.totalorder %s68, %s71
      %p77 = scmp.eq.s32.totalorder %s9, 0
      %p78 = por %p76, %p77
      %p79 = scmp.ne.s32.totalorder %s68, %s71
      %p80 = scmp.eq.s32.totalorder %s14, 1
      %p81 = por %p79, %p80
      %p82 = scmp.ne.s32.totalorder %s71, %s72
      %p83 = scmp.eq.s32.totalorder %s14, 0
      %p84 = por %p82, %p83
      %p85 = scmp.ne.s32.totalorder %s71, %s72
      %p86 = scmp.eq.s32.totalorder %s15, 1
      %p87 = por %p85, %p86
      %p89 = scmp.ne.s32.totalorder %s72, %s88
      %p90 = scmp.eq.s32.totalorder %s15, 0
      %p91 = por %p89, %p90
      %s92 = ssub.s32 %s17, %s31
      %p93 = scmp.eq.s32.totalorder %s92, 0
      %s95 = sadd.s32 %s94, 1
      %s96 = scalar_select %p93, %s94, %s95
      %p99 = pneg %p93
      %p100 = scmp.eq.s32.totalorder %s9, 1
      %p101 = por %p99, %p100
      %p102 = scmp.ne.s32.totalorder %s94, %s97
      %p103 = scmp.eq.s32.totalorder %s9, 0
      %p104 = por %p102, %p103
      %p105 = scmp.ne.s32.totalorder %s94, %s97
      %p106 = scmp.eq.s32.totalorder %s14, 1
      %p107 = por %p105, %p106
      %p108 = scmp.ne.s32.totalorder %s97, %s98
      %p109 = scmp.eq.s32.totalorder %s14, 0
      %p110 = por %p108, %p109
      %p111 = scmp.ne.s32.totalorder %s97, %s98
      %p112 = scmp.eq.s32.totalorder %s15, 1
      %p113 = por %p111, %p112
      %p115 = scmp.ne.s32.totalorder %s98, %s114
      %p116 = scmp.eq.s32.totalorder %s15, 0
      %p117 = por %p115, %p116
      %s118 = ssub.s32 %s16, %s35
      %s119 = ssub.s32 %s17, %s31
      %s120 = sor.u32 %s118, %s119
      %p121 = scmp.eq.s32.totalorder %s120, 0
      %s123 = sadd.s32 %s122, 1
      %s124 = scalar_select %p121, %s122, %s123
      %p127 = pneg %p121
      %p128 = scmp.eq.s32.totalorder %s9, 1
      %p129 = por %p127, %p128
      %p130 = scmp.ne.s32.totalorder %s122, %s125
      %p131 = scmp.eq.s32.totalorder %s9, 0
      %p132 = por %p130, %p131
      %p133 = scmp.ne.s32.totalorder %s122, %s125
      %p134 = scmp.eq.s32.totalorder %s14, 1
      %p135 = por %p133, %p134
      %p136 = scmp.ne.s32.totalorder %s125, %s126
      %p137 = scmp.eq.s32.totalorder %s14, 0
      %p138 = por %p136, %p137
      %p139 = scmp.ne.s32.totalorder %s125, %s126
      %p140 = scmp.eq.s32.totalorder %s15, 1
      %p141 = por %p139, %p140
      %p143 = scmp.ne.s32.totalorder %s126, %s142
      %p144 = scmp.eq.s32.totalorder %s15, 0
      %p145 = por %p143, %p144
      %p146 = scmp.le.s32.totalorder 1, %s9
      %p147 = scmp.lt.s32.totalorder %s9, 3
      %p148 = pnand %p146, %p147
      %p149 = pneg %p148
      // Predicated region
      $region9: #{rnn_forward.5} parent=5 // pred_check
        _
      $region10: #{rnn_forward.5} parent=5 // pred_check_branch
        %151 = sbr.rel (%p148) target = $region12
      $region11: #{rnn_forward.5} parent=5 // pred_region
        %s152 = ssub.s32 %s9, 1
        // Predicated region
        $region13: #{rnn_forward.5} parent=11 // pred_check
          %p153 = pneg %p56
        $region14: #{rnn_forward.5} parent=11 // pred_check_branch
          %155 = sbr.rel (%p153) target = $region16
        $region15: #{rnn_forward.5} parent=11 // pred_region
          %s156 = smul.u32 8, %s19
          %p157 = scmp.lt.s32.totalorder %s156, 7
          %s158 = scalar_select %p157, %s156, 7
          %p159 = scmp.lt.s32.totalorder %s21, 0
          %s160 = scalar_select %p159, %s21, 0
          %s161 = sadd.s32 %s160, %s158
          %s162 = smul.addr %s161, 8
          %s163 = scalar_lea.vmem %s0, %s162
          %s164 = smul.u32 8, %s19
        $region16: #{rnn_forward.5} parent=11 // pred_fallthru
          _
      $region12: #{rnn_forward.5} parent=5 // pred_fallthru
        _
      %p165 = scmp.lt.s32.totalorder %s9, 2
      // Predicated region
      $region17: #{rnn_forward.5} parent=5 // pred_check
        %p166 = pneg %p165
      $region18: #{rnn_forward.5} parent=5 // pred_check_branch
        %168 = sbr.rel (%p166) target = $region20
      $region19: #{rnn_forward.5} parent=5 // pred_region
        // Predicated region
        $region21: #{rnn_forward.5} parent=19 // pred_check
          %p169 = pneg %p78
        $region22: #{rnn_forward.5} parent=19 // pred_check_branch
          %171 = sbr.rel (%p169) target = $region24
        $region23: #{rnn_forward.5} parent=19 // pred_region
          %s172 = sand.u32 %s68, 1
          %s173 = sand.u32 %s68, 1
          %s174 = smul.addr %s173, 32
          %s175 = scalar_lea.vmem [#allocation3], %s174
          %s176 = smul.u32 2, %s18
          %s177 = smul.u32 2, %s17
          %s178 = smul.addr %s176, 4
          %s179 = sadd.s32 %s177, %s178
          %s180 = smul.addr %s179, 8
          %s181 = scalar_lea.vmem %s1, %s180
          // Predicated region
          $region25: #{rnn_forward.5} parent=23 // pred_check
            _
          $region26: #{rnn_forward.5} parent=23 // pred_check_branch
            %183 = sbr.rel (0) target = $region28
          $region27: #{rnn_forward.5} parent=23 // pred_region
            // Predicated region
            $region29: #{rnn_forward.5} parent=27 // pred_check
              _
            $region30: #{rnn_forward.5} parent=27 // pred_check_branch
              %185 = sbr.rel (0) target = $region32
            $region31: #{rnn_forward.5} parent=27 // pred_region
              loop: start=0, step=1, limit=1
              $region33: #{rnn_forward.5} parent=31 // loop_pre_header
                _
              $region34: #{rnn_forward.5} parent=31 // loop_header
                %s187 = sphi 0, %s191
                %p188 = scmp.ge.s32.totalorder %s187, 1
                %s192 = sphi %s181, %s181
                %s193 = sphi %s175, %s175
              $region35: #{rnn_forward.5} parent=31 // loop_header_branch
                %190 = sbr.rel (%p188) target = $region39
              $region36: #{rnn_forward.5} parent=31 // loop_body
                %v194 = vld [vmem:[%s192] sm:$0xff]
                %195 = vst [vmem:[%s193] sm:$0xff] %v194
                %v196 = vld [vmem:[%s192 + $0x8] sm:$0xff]
                %197 = vst [vmem:[%s193 + $0x8] sm:$0xff] %v196
                %v198 = vld [vmem:[%s192 + $0x20] sm:$0xff]
                %199 = vst [vmem:[%s193 + $0x10] sm:$0xff] %v198
                %v200 = vld [vmem:[%s192 + $0x28] sm:$0xff]
                %201 = vst [vmem:[%s193 + $0x18] sm:$0xff] %v200
              $region37: #{rnn_forward.5} parent=31 // loop_footer
                %s191 = sadd.s32 1, %s187
              $region38: #{rnn_forward.5} parent=31 // loop_footer_branch
                %186 = sbr.rel target = $region34
              $region39: #{rnn_forward.5} parent=31 // loop_exit
                _
            $region32: #{rnn_forward.5} parent=27 // pred_fallthru
              _
            // Predicated region
            $region40: #{rnn_forward.5} parent=27 // pred_check
              _
            $region41: #{rnn_forward.5} parent=27 // pred_check_branch
              %203 = sbr.rel target = $region43
            $region42: #{rnn_forward.5} parent=27 // pred_region
              _
            $region43: #{rnn_forward.5} parent=27 // pred_fallthru
              _
          $region28: #{rnn_forward.5} parent=23 // pred_fallthru
            _
          %204 = vnop
        $region24: #{rnn_forward.5} parent=19 // pred_fallthru
          _
        // Predicated region
        $region44: #{rnn_forward.5} parent=19 // pred_check
          %p205 = pneg %p104
        $region45: #{rnn_forward.5} parent=19 // pred_check_branch
          %207 = sbr.rel (%p205) target = $region47
        $region46: #{rnn_forward.5} parent=19 // pred_region
          %s208 = smul.u32 2, %s17
          %p209 = scmp.lt.s32.totalorder %s208, 3
          %s210 = scalar_select %p209, %s208, 3
          %s211 = scalar_lea.vmem %s2, %s210
          %s212 = smul.u32 2, %s17
        $region47: #{rnn_forward.5} parent=19 // pred_fallthru
          _
      $region20: #{rnn_forward.5} parent=5 // pred_fallthru
        _
      %p213 = scmp.le.s32.totalorder 1, %s9
      %p214 = scmp.lt.s32.totalorder %s9, 3
      %p215 = pnand %p213, %p214
      %p216 = pneg %p215
      // Predicated region
      $region48: #{rnn_forward.5} parent=5 // pred_check
        _
      $region49: #{rnn_forward.5} parent=5 // pred_check_branch
        %218 = sbr.rel (%p215) target = $region51
      $region50: #{rnn_forward.5} parent=5 // pred_region
        %s219 = ssub.s32 %s9, 1
        %s220 = sand.u32 %s71, 1
        %s221 = sand.u32 %s71, 1
        %s222 = smul.addr %s221, 32
        %s223 = scalar_lea.vmem [#allocation3], %s222
        // Predicated region
        $region52: #{rnn_forward.5} parent=50 // pred_check
          %p224 = pneg %p84
        $region53: #{rnn_forward.5} parent=50 // pred_check_branch
          %226 = sbr.rel (%p224) target = $region55
        $region54: #{rnn_forward.5} parent=50 // pred_region
          _
        $region55: #{rnn_forward.5} parent=50 // pred_fallthru
          _
        %s227 = smul.u32 8, %s19
        %p228 = scmp.lt.s32.totalorder %s227, 7
        %s229 = scalar_select %p228, %s227, 7
        %p230 = scmp.lt.s32.totalorder %s21, 0
        %s231 = scalar_select %p230, %s21, 0
        %s232 = sadd.s32 %s231, %s229
        %s233 = smul.addr %s232, 8
        %s234 = scalar_lea.vmem %s0, %s233
        %p235 = pneg %p56
        %p236 = pneg %p53
        %s237 = sand.u32 %s71, 1
        %s238 = sand.u32 %s71, 1
        %s239 = smul.addr %s238, 32
        %s240 = scalar_lea.vmem [#allocation3], %s239
        %p241 = pneg %p84
        %p242 = pneg %p81
        %s243 = smul.u32 2, %s20
        %p244 = scmp.lt.s32.totalorder %s243, 3
        %s245 = scalar_select %p244, %s243, 3
        %s246 = scalar_lea.vmem %s2, %s245
        %p247 = pneg %p110
        %p248 = pneg %p107
        %p249 = pneg %p138
        %p250 = pneg %p135
        %s251 = sand.u32 %s125, 1
        %s252 = sand.u32 %s125, 1
        %s253 = smul.addr %s252, 128
        %s254 = scalar_lea.vmem [#allocation4], %s253
        %s255 = smul.u32 8, %s19
        %p256 = scmp.lt.s32.totalorder %s255, 7
        %s257 = scalar_select %p256, %s255, 7
        %p258 = scmp.lt.s32.totalorder %s21, 0
        %s259 = scalar_select %p258, %s21, 0
        %s260 = sadd.s32 %s259, %s257
        %s261 = smul.addr %s260, 8
        %s262 = scalar_lea.vmem %s0, %s261
        %s263 = smul.u32 8, %s19
        %s264 = smul.u32 2, %s21
        %s265 = smul.u32 2, %s20
        %s266 = smul.u32 2, %s20
        %p267 = scmp.lt.s32.totalorder %s266, 3
        %s268 = scalar_select %p267, %s266, 3
        %s269 = scalar_lea.vmem %s2, %s268
        %s270 = smul.u32 2, %s20
        %s271 = smul.u32 8, %s19
        %s272 = smul.u32 2, %s20
        %p273 = scmp.eq.s32.totalorder %s21, 0
        // Predicated region
        $region56: #{rnn_forward.5} parent=50 // pred_check
          %p274 = pneg %p273
        $region57: #{rnn_forward.5} parent=50 // pred_check_branch
          %276 = sbr.rel (%p274) target = $region59
        $region58: #{rnn_forward.5} parent=50 // pred_region
          %277 = vst [vmem:[#allocation2] sm:$0xff] 0.0
          %278 = vst [vmem:[#allocation2 + $0x8] sm:$0xff] 0.0
          %279 = vst [vmem:[#allocation2 + $0x10] sm:$0xff] 0.0
          %280 = vst [vmem:[#allocation2 + $0x18] sm:$0xff] 0.0
          %281 = vst [vmem:[#allocation2 + $0x20] sm:$0xff] 0.0
          %282 = vst [vmem:[#allocation2 + $0x28] sm:$0xff] 0.0
          %283 = vst [vmem:[#allocation2 + $0x30] sm:$0xff] 0.0
          %284 = vst [vmem:[#allocation2 + $0x38] sm:$0xff] 0.0
          %285 = vst [vmem:[#allocation2 + $0x40] sm:$0xff] 0.0
          %286 = vst [vmem:[#allocation2 + $0x48] sm:$0xff] 0.0
          %287 = vst [vmem:[#allocation2 + $0x50] sm:$0xff] 0.0
          %288 = vst [vmem:[#allocation2 + $0x58] sm:$0xff] 0.0
          %289 = vst [vmem:[#allocation2 + $0x60] sm:$0xff] 0.0
          %290 = vst [vmem:[#allocation2 + $0x68] sm:$0xff] 0.0
          %291 = vst [vmem:[#allocation2 + $0x70] sm:$0xff] 0.0
          %292 = vst [vmem:[#allocation2 + $0x78] sm:$0xff] 0.0
        $region59: #{rnn_forward.5} parent=50 // pred_fallthru
          _
        %v293 = vld [vmem:[#allocation2] sm:$0xff]
        %v294 = vld [vmem:[#allocation2 + $0x8] sm:$0xff]
        %v295 = vld [vmem:[#allocation2 + $0x10] sm:$0xff]
        %v296 = vld [vmem:[#allocation2 + $0x18] sm:$0xff]
        %v297 = vld [vmem:[#allocation2 + $0x20] sm:$0xff]
        %v298 = vld [vmem:[#allocation2 + $0x28] sm:$0xff]
        %v299 = vld [vmem:[#allocation2 + $0x30] sm:$0xff]
        %v300 = vld [vmem:[#allocation2 + $0x38] sm:$0xff]
        %v301 = vld [vmem:[#allocation2 + $0x40] sm:$0xff]
        %v302 = vld [vmem:[#allocation2 + $0x48] sm:$0xff]
        %v303 = vld [vmem:[#allocation2 + $0x50] sm:$0xff]
        %v304 = vld [vmem:[#allocation2 + $0x58] sm:$0xff]
        %v305 = vld [vmem:[#allocation2 + $0x60] sm:$0xff]
        %v306 = vld [vmem:[#allocation2 + $0x68] sm:$0xff]
        %v307 = vld [vmem:[#allocation2 + $0x70] sm:$0xff]
        %v308 = vld [vmem:[#allocation2 + $0x78] sm:$0xff]
        %v309 = vld [vmem:[%s262] sm:$0xff]
        %v310 = vld [vmem:[%s262 + $0x8] sm:$0xff]
        %v311 = vld [vmem:[%s262 + $0x10] sm:$0xff]
        %v312 = vld [vmem:[%s262 + $0x18] sm:$0xff]
        %v313 = vld [vmem:[%s262 + $0x20] sm:$0xff]
        %v314 = vld [vmem:[%s262 + $0x28] sm:$0xff]
        %v315 = vld [vmem:[%s262 + $0x30] sm:$0xff]
        %v316 = vld [vmem:[%s262 + $0x38] sm:$0xff]
        %v317 = vld [vmem:[%s223] sm:$0xff]
        %v318 = vld [vmem:[%s223 + $0x8] sm:$0xff]
        %v319 = vld [vmem:[%s223 + $0x10] sm:$0xff]
        %v320 = vld [vmem:[%s223 + $0x18] sm:$0xff]
        %vm321 = vcmask 130048
        %v323 = vsel %vm321, %v309, 0
        %v326 = vsel %vm321, %v310, 0
        %v329 = vsel %vm321, %v311, 0
        %v332 = vsel %vm321, %v312, 0
        %v335 = vsel %vm321, %v313, 0
        %v338 = vsel %vm321, %v314, 0
        %v341 = vsel %vm321, %v315, 0
        %v344 = vsel %vm321, %v316, 0
        %346 = vmatprep.subr.mxu0 0.0
        %347 = vmatpush1.msra.mxu0 0.0
        %348 = vmatprep.subr.mxu0 0.0
        %349 = vmatpush1.msra.mxu0 0.0
        %350 = vmatprep.subr.mxu0 0.0
        %351 = vmatpush1.msra.mxu0 0.0
        %352 = vmatprep.subr.mxu0 0.0
        %353 = vmatpush1.msra.mxu0 0.0
        %354 = vmatprep.subr.mxu0 0.0
        %355 = vmatpush1.msra.mxu0 0.0
        %356 = vmatprep.subr.mxu0 0.0
        %357 = vmatpush1.msra.mxu0 0.0
        %358 = vmatprep.subr.mxu0 0.0
        %359 = vmatpush1.msra.mxu0 0.0
        %360 = vmatprep.subr.mxu0 0.0
        %361 = vmatpush1.msra.mxu0 0.0
        %362 = vmatprep.subr.mxu0 0.0
        %363 = vmatpush1.msra.mxu0 0.0
        %364 = vmatprep.subr.mxu0 0.0
        %365 = vmatpush1.msra.mxu0 0.0
        %366 = vmatprep.subr.mxu0 0.0
        %367 = vmatpush1.msra.mxu0 0.0
        %368 = vmatprep.subr.mxu0 0.0
        %369 = vmatpush1.msra.mxu0 0.0
        %370 = vmatprep.subr.mxu0 0.0
        %371 = vmatpush1.msra.mxu0 0.0
        %372 = vmatprep.subr.mxu0 0.0
        %373 = vmatpush1.msra.mxu0 0.0
        %374 = vmatprep.subr.mxu0 %v320
        %375 = vmatpush1.msra.mxu0 %v319
        %376 = vmatprep.subr.mxu0 %v318
        %377 = vmatpush1.msra.mxu0 %v317
        %378 = vmatprep.subr.mxu0 0.0
        %379 = vmatpush2.msra.mxu0 0.0
        %380 = vmatprep.subr.mxu0 0.0
        %381 = vmatpush2.msra.mxu0 0.0
        %382 = vmatprep.subr.mxu0 0.0
        %383 = vmatpush2.msra.mxu0 0.0
        %384 = vmatprep.subr.mxu0 0.0
        %385 = vmatpush2.msra.mxu0 0.0
        %386 = vmatprep.subr.mxu0 0.0
        %387 = vmatpush2.msra.mxu0 0.0
        %388 = vmatprep.subr.mxu0 0.0
        %389 = vmatpush2.msra.mxu0 0.0
        %390 = vmatprep.subr.mxu0 0.0
        %391 = vmatpush2.msra.mxu0 0.0
        %392 = vmatprep.subr.mxu0 0.0
        %393 = vmatpush2.msra.mxu0 0.0
        %394 = vmatprep.subr.mxu0 0.0
        %395 = vmatpush2.msra.mxu0 0.0
        %396 = vmatprep.subr.mxu0 0.0
        %397 = vmatpush2.msra.mxu0 0.0
        %398 = vmatprep.subr.mxu0 0.0
        %399 = vmatpush2.msra.mxu0 0.0
        %400 = vmatprep.subr.mxu0 0.0
        %401 = vmatpush2.msra.mxu0 0.0
        %402 = vmatprep.subr.mxu0 0.0
        %403 = vmatpush2.msra.mxu0 0.0
        %404 = vmatprep.subr.mxu0 0.0
        %405 = vmatpush2.msra.mxu0 0.0
        %406 = vmatprep.subr.mxu0 0.0
        %407 = vmatpush2.msra.mxu0 0.0
        %408 = vmatprep.subr.mxu0 0.0
        %409 = vmatpush2.msra.mxu0 0.0
        %410 = vmatprep.mubr.f32.mxu0 0.0
        %411 = vmatmul.mubr.f32.gmra.mxu0 %v323
        %v412 = vpop.f32.mrf.mxu0
        %v413 = vadd.f32 0.0, %v412
        %v414 = vpop.f32.mrf.mxu0
        %v415 = vadd.f32 0.0, %v414
        %416 = vmatprep.mubr.f32.mxu0 0.0
        %417 = vmatmul.mubr.f32.gmra.mxu0 %v326
        %v418 = vpop.f32.mrf.mxu0
        %v419 = vadd.f32 0.0, %v418
        %v420 = vpop.f32.mrf.mxu0
        %v421 = vadd.f32 0.0, %v420
        %422 = vmatprep.mubr.f32.mxu0 0.0
        %423 = vmatmul.mubr.f32.gmra.mxu0 %v329
        %v424 = vpop.f32.mrf.mxu0
        %v425 = vadd.f32 0.0, %v424
        %v426 = vpop.f32.mrf.mxu0
        %v427 = vadd.f32 0.0, %v426
        %428 = vmatprep.mubr.f32.mxu0 0.0
        %429 = vmatmul.mubr.f32.gmra.mxu0 %v332
        %v430 = vpop.f32.mrf.mxu0
        %v431 = vadd.f32 0.0, %v430
        %v432 = vpop.f32.mrf.mxu0
        %v433 = vadd.f32 0.0, %v432
        %434 = vmatprep.mubr.f32.mxu0 0.0
        %435 = vmatmul.mubr.f32.gmra.mxu0 %v335
        %v436 = vpop.f32.mrf.mxu0
        %v437 = vadd.f32 0.0, %v436
        %v438 = vpop.f32.mrf.mxu0
        %v439 = vadd.f32 0.0, %v438
        %440 = vmatprep.mubr.f32.mxu0 0.0
        %441 = vmatmul.mubr.f32.gmra.mxu0 %v338
        %v442 = vpop.f32.mrf.mxu0
        %v443 = vadd.f32 0.0, %v442
        %v444 = vpop.f32.mrf.mxu0
        %v445 = vadd.f32 0.0, %v444
        %446 = vmatprep.mubr.f32.mxu0 0.0
        %447 = vmatmul.mubr.f32.gmra.mxu0 %v341
        %v448 = vpop.f32.mrf.mxu0
        %v449 = vadd.f32 0.0, %v448
        %v450 = vpop.f32.mrf.mxu0
        %v451 = vadd.f32 0.0, %v450
        %452 = vmatprep.mubr.f32.mxu0 0.0
        %453 = vmatmul.mubr.f32.gmra.mxu0 %v344
        %v454 = vpop.f32.mrf.mxu0
        %v455 = vadd.f32 0.0, %v454
        %v456 = vpop.f32.mrf.mxu0
        %v457 = vadd.f32 0.0, %v456
        %458 = vdwg.mxu0
        %v459 = vadd.f32 %v293, %v413
        %v460 = vadd.f32 %v294, %v415
        %v461 = vadd.f32 %v295, %v419
        %v462 = vadd.f32 %v296, %v421
        %v463 = vadd.f32 %v297, %v425
        %v464 = vadd.f32 %v298, %v427
        %v465 = vadd.f32 %v299, %v431
        %v466 = vadd.f32 %v300, %v433
        %v467 = vadd.f32 %v301, %v437
        %v468 = vadd.f32 %v302, %v439
        %v469 = vadd.f32 %v303, %v443
        %v470 = vadd.f32 %v304, %v445
        %v471 = vadd.f32 %v305, %v449
        %v472 = vadd.f32 %v306, %v451
        %v473 = vadd.f32 %v307, %v455
        %v474 = vadd.f32 %v308, %v457
        %475 = vst [vmem:[#allocation2] sm:$0xff] %v459
        %476 = vst [vmem:[#allocation2 + $0x8] sm:$0xff] %v460
        %477 = vst [vmem:[#allocation2 + $0x10] sm:$0xff] %v461
        %478 = vst [vmem:[#allocation2 + $0x18] sm:$0xff] %v462
        %479 = vst [vmem:[#allocation2 + $0x20] sm:$0xff] %v463
        %480 = vst [vmem:[#allocation2 + $0x28] sm:$0xff] %v464
        %481 = vst [vmem:[#allocation2 + $0x30] sm:$0xff] %v465
        %482 = vst [vmem:[#allocation2 + $0x38] sm:$0xff] %v466
        %483 = vst [vmem:[#allocation2 + $0x40] sm:$0xff] %v467
        %484 = vst [vmem:[#allocation2 + $0x48] sm:$0xff] %v468
        %485 = vst [vmem:[#allocation2 + $0x50] sm:$0xff] %v469
        %486 = vst [vmem:[#allocation2 + $0x58] sm:$0xff] %v470
        %487 = vst [vmem:[#allocation2 + $0x60] sm:$0xff] %v471
        %488 = vst [vmem:[#allocation2 + $0x68] sm:$0xff] %v472
        %489 = vst [vmem:[#allocation2 + $0x70] sm:$0xff] %v473
        %490 = vst [vmem:[#allocation2 + $0x78] sm:$0xff] %v474
        // Predicated region
        $region60: #{rnn_forward.5} parent=50 // pred_check
          %p491 = pneg %p273
        $region61: #{rnn_forward.5} parent=50 // pred_check_branch
          %493 = sbr.rel (%p491) target = $region63
        $region62: #{rnn_forward.5} parent=50 // pred_region
          %v494 = vld [vmem:[#allocation2] sm:$0xff]
          %v495 = vld [vmem:[#allocation2 + $0x8] sm:$0xff]
          %v496 = vld [vmem:[#allocation2 + $0x10] sm:$0xff]
          %v497 = vld [vmem:[#allocation2 + $0x18] sm:$0xff]
          %v498 = vld [vmem:[#allocation2 + $0x20] sm:$0xff]
          %v499 = vld [vmem:[#allocation2 + $0x28] sm:$0xff]
          %v500 = vld [vmem:[#allocation2 + $0x30] sm:$0xff]
          %v501 = vld [vmem:[#allocation2 + $0x38] sm:$0xff]
          %v502 = vld [vmem:[#allocation2 + $0x40] sm:$0xff]
          %v503 = vld [vmem:[#allocation2 + $0x48] sm:$0xff]
          %v504 = vld [vmem:[#allocation2 + $0x50] sm:$0xff]
          %v505 = vld [vmem:[#allocation2 + $0x58] sm:$0xff]
          %v506 = vld [vmem:[#allocation2 + $0x60] sm:$0xff]
          %v507 = vld [vmem:[#allocation2 + $0x68] sm:$0xff]
          %v508 = vld [vmem:[#allocation2 + $0x70] sm:$0xff]
          %v509 = vld [vmem:[#allocation2 + $0x78] sm:$0xff]
          %v510 = vld [vmem:[%s269] sm:$0x3]
          %v512 = vlaneseq
          %v513 = vshrl.u32 %v512, 7
          %v514 = vsub.s32 0, %v513
          %v515 = vrot.slane %v510, %v514
          %v516 = vlaneseq
          %v517 = vshrl.u32 %v516, 7
          %v518 = vsub.s32 1, %v517
          %v519 = vrot.slane %v510, %v518
          %v522 = vadd.f32 %v494, %v515
          %v523 = vadd.f32 %v495, %v519
          %v524 = vadd.f32 %v496, %v515
          %v525 = vadd.f32 %v497, %v519
          %v526 = vadd.f32 %v498, %v515
          %v527 = vadd.f32 %v499, %v519
          %v528 = vadd.f32 %v500, %v515
          %v529 = vadd.f32 %v501, %v519
          %v530 = vadd.f32 %v502, %v515
          %v531 = vadd.f32 %v503, %v519
          %v532 = vadd.f32 %v504, %v515
          %v533 = vadd.f32 %v505, %v519
          %v534 = vadd.f32 %v506, %v515
          %v535 = vadd.f32 %v507, %v519
          %v536 = vadd.f32 %v508, %v515
          %v537 = vadd.f32 %v509, %v519
          %538 = vst [vmem:[%s254] sm:$0xff] %v522
          %539 = vst [vmem:[%s254 + $0x8] sm:$0xff] %v523
          %540 = vst [vmem:[%s254 + $0x10] sm:$0xff] %v524
          %541 = vst [vmem:[%s254 + $0x18] sm:$0xff] %v525
          %542 = vst [vmem:[%s254 + $0x20] sm:$0xff] %v526
          %543 = vst [vmem:[%s254 + $0x28] sm:$0xff] %v527
          %544 = vst [vmem:[%s254 + $0x30] sm:$0xff] %v528
          %545 = vst [vmem:[%s254 + $0x38] sm:$0xff] %v529
          %546 = vst [vmem:[%s254 + $0x40] sm:$0xff] %v530
          %547 = vst [vmem:[%s254 + $0x48] sm:$0xff] %v531
          %548 = vst [vmem:[%s254 + $0x50] sm:$0xff] %v532
          %549 = vst [vmem:[%s254 + $0x58] sm:$0xff] %v533
          %550 = vst [vmem:[%s254 + $0x60] sm:$0xff] %v534
          %551 = vst [vmem:[%s254 + $0x68] sm:$0xff] %v535
          %552 = vst [vmem:[%s254 + $0x70] sm:$0xff] %v536
          %553 = vst [vmem:[%s254 + $0x78] sm:$0xff] %v537
        $region63: #{rnn_forward.5} parent=50 // pred_fallthru
          _
        %s554 = sand.u32 %s125, 1
        %s555 = sand.u32 %s125, 1
        %s556 = smul.addr %s555, 128
        %s557 = scalar_lea.vmem [#allocation4], %s556
        // Predicated region
        $region64: #{rnn_forward.5} parent=50 // pred_check
          %p558 = pneg %p135
        $region65: #{rnn_forward.5} parent=50 // pred_check_branch
          %560 = sbr.rel (%p558) target = $region67
        $region66: #{rnn_forward.5} parent=50 // pred_region
          %s561 = smul.u32 8, %s19
          %s562 = smul.u32 2, %s20
          %s563 = smul.addr %s561, 4
          %s564 = sadd.s32 %s562, %s563
          %s565 = smul.addr %s564, 8
          %s566 = scalar_lea.vmem %s3, %s565
          // Predicated region
          $region68: #{rnn_forward.5} parent=66 // pred_check
            _
          $region69: #{rnn_forward.5} parent=66 // pred_check_branch
            %568 = sbr.rel (0) target = $region71
          $region70: #{rnn_forward.5} parent=66 // pred_region
            // Predicated region
            $region72: #{rnn_forward.5} parent=70 // pred_check
              _
            $region73: #{rnn_forward.5} parent=70 // pred_check_branch
              %570 = sbr.rel (0) target = $region75
            $region74: #{rnn_forward.5} parent=70 // pred_region
              loop: start=0, step=1, limit=1
              $region76: #{rnn_forward.5} parent=74 // loop_pre_header
                _
              $region77: #{rnn_forward.5} parent=74 // loop_header
                %s572 = sphi 0, %s576
                %p573 = scmp.ge.s32.totalorder %s572, 1
                %s577 = sphi %s557, %s557
                %s578 = sphi %s566, %s566
              $region78: #{rnn_forward.5} parent=74 // loop_header_branch
                %575 = sbr.rel (%p573) target = $region82
              $region79: #{rnn_forward.5} parent=74 // loop_body
                %v579 = vld [vmem:[%s577] sm:$0xff]
                %580 = vst [vmem:[%s578] sm:$0xff] %v579
                %v581 = vld [vmem:[%s577 + $0x8] sm:$0xff]
                %582 = vst [vmem:[%s578 + $0x8] sm:$0xff] %v581
                %v583 = vld [vmem:[%s577 + $0x10] sm:$0xff]
                %584 = vst [vmem:[%s578 + $0x20] sm:$0xff] %v583
                %v585 = vld [vmem:[%s577 + $0x18] sm:$0xff]
                %586 = vst [vmem:[%s578 + $0x28] sm:$0xff] %v585
                %v587 = vld [vmem:[%s577 + $0x20] sm:$0xff]
                %588 = vst [vmem:[%s578 + $0x40] sm:$0xff] %v587
                %v589 = vld [vmem:[%s577 + $0x28] sm:$0xff]
                %590 = vst [vmem:[%s578 + $0x48] sm:$0xff] %v589
                %v591 = vld [vmem:[%s577 + $0x30] sm:$0xff]
                %592 = vst [vmem:[%s578 + $0x60] sm:$0xff] %v591
                %v593 = vld [vmem:[%s577 + $0x38] sm:$0xff]
                %594 = vst [vmem:[%s578 + $0x68] sm:$0xff] %v593
                %v595 = vld [vmem:[%s577 + $0x40] sm:$0xff]
                %596 = vst [vmem:[%s578 + $0x80] sm:$0xff] %v595
                %v597 = vld [vmem:[%s577 + $0x48] sm:$0xff]
                %598 = vst [vmem:[%s578 + $0x88] sm:$0xff] %v597
                %v599 = vld [vmem:[%s577 + $0x50] sm:$0xff]
                %600 = vst [vmem:[%s578 + $0xa0] sm:$0xff] %v599
                %v601 = vld [vmem:[%s577 + $0x58] sm:$0xff]
                %602 = vst [vmem:[%s578 + $0xa8] sm:$0xff] %v601
                %v603 = vld [vmem:[%s577 + $0x60] sm:$0xff]
                %604 = vst [vmem:[%s578 + $0xc0] sm:$0xff] %v603
                %v605 = vld [vmem:[%s577 + $0x68] sm:$0xff]
                %606 = vst [vmem:[%s578 + $0xc8] sm:$0xff] %v605
                %v607 = vld [vmem:[%s577 + $0x70] sm:$0xff]
                %608 = vst [vmem:[%s578 + $0xe0] sm:$0xff] %v607
                %v609 = vld [vmem:[%s577 + $0x78] sm:$0xff]
                %610 = vst [vmem:[%s578 + $0xe8] sm:$0xff] %v609
              $region80: #{rnn_forward.5} parent=74 // loop_footer
                %s576 = sadd.s32 1, %s572
              $region81: #{rnn_forward.5} parent=74 // loop_footer_branch
                %571 = sbr.rel target = $region77
              $region82: #{rnn_forward.5} parent=74 // loop_exit
                _
            $region75: #{rnn_forward.5} parent=70 // pred_fallthru
              _
            // Predicated region
            $region83: #{rnn_forward.5} parent=70 // pred_check
              _
            $region84: #{rnn_forward.5} parent=70 // pred_check_branch
              %612 = sbr.rel target = $region86
            $region85: #{rnn_forward.5} parent=70 // pred_region
              _
            $region86: #{rnn_forward.5} parent=70 // pred_fallthru
              _
          $region71: #{rnn_forward.5} parent=66 // pred_fallthru
            _
          %613 = vnop
        $region67: #{rnn_forward.5} parent=50 // pred_fallthru
          _
      $region51: #{rnn_forward.5} parent=5 // pred_fallthru
        _
      %p614 = scmp.le.s32.totalorder 2, %s9
      // Predicated region
      $region87: #{rnn_forward.5} parent=5 // pred_check
        %p615 = pneg %p614
      $region88: #{rnn_forward.5} parent=5 // pred_check_branch
        %617 = sbr.rel (%p615) target = $region90
      $region89: #{rnn_forward.5} parent=5 // pred_region
        %s618 = ssub.s32 %s9, 2
        // Predicated region
        $region91: #{rnn_forward.5} parent=89 // pred_check
          %p619 = pneg %p141
        $region92: #{rnn_forward.5} parent=89 // pred_check_branch
          %621 = sbr.rel (%p619) target = $region94
        $region93: #{rnn_forward.5} parent=89 // pred_region
          %s622 = sand.u32 %s126, 1
          %s623 = sand.u32 %s126, 1
          %s624 = smul.addr %s623, 128
          %s625 = scalar_lea.vmem [#allocation4], %s624
        $region94: #{rnn_forward.5} parent=89 // pred_fallthru
          _
      $region90: #{rnn_forward.5} parent=5 // pred_fallthru
        _
    $region6: #{rnn_forward.5} parent=1 // loop_footer
      %s13 = sadd.s32 1, %s9
    $region7: #{rnn_forward.5} parent=1 // loop_footer_branch
      %8 = sbr.rel target = $region3
    $region8: #{rnn_forward.5} parent=1 // loop_exit
      _

// kernel: rnn_forward.6
$region0: #{rnn_forward.6}
  #allocation0 [shape = 'u32[]', space=smem, size = 0x4, offset = 0x4, fixed_abs, tag = 'smem constant byte address 0x4 - core index']
  #allocation1 [shape = 'u32[144,128]{1,0:T(1,128)}', space=vmem, size = 0x12000, scoped, tag = 'internal scratch']
  %s0 = inlined_call_operand.vmem [shape: f32[8,8,512], index: 0, kind: input, shape index: {}]
  %s1 = inlined_call_operand.vmem [shape: f32[8,128], index: 1, kind: input, shape index: {}]
  %s2 = inlined_call_operand.vmem [shape: f32[8,128], index: 2, kind: input, shape index: {}]
  %s3 = inlined_call_operand.vmem [shape: f32[128,512], index: 3, kind: input, shape index: {}]
  %s4 = inlined_call_operand.vmem [shape: f32[8,8,128], index: 4, kind: output, shape index: {0}]
  %s5 = inlined_call_operand.vmem [shape: f32[8,128], index: 5, kind: output, shape index: {1}]
  %s6 = inlined_call_operand.vmem [shape: f32[8,128], index: 6, kind: output, shape index: {2}]
  %7 = xla_tuple %s4, %s5, %s6
  %s8 = sld [smem:[#allocation0]]
  $region46: #{rnn_forward.6} parent=0
    _
  %s10 = ssub.s32 1, %s8
  %s11 = scalar_select 0, %s10, %s8
  // Predicated region
  $region2: #{rnn_forward.6} parent=0 // pred_check
    _
  $region3: #{rnn_forward.6} parent=0 // pred_check_branch
    %13 = sbr.rel (0) target = $region5
  $region4: #{rnn_forward.6} parent=0 // pred_region
    _
  $region5: #{rnn_forward.6} parent=0 // pred_fallthru
    _
  // Predicated region
  $region6: #{rnn_forward.6} parent=0 // pred_check
    _
  $region7: #{rnn_forward.6} parent=0 // pred_check_branch
    %15 = sbr.rel (0) target = $region9
  $region8: #{rnn_forward.6} parent=0 // pred_region
    _
  $region9: #{rnn_forward.6} parent=0 // pred_fallthru
    _
  // Predicated region
  $region10: #{rnn_forward.6} parent=0 // pred_check
    _
  $region11: #{rnn_forward.6} parent=0 // pred_check_branch
    %17 = sbr.rel (0) target = $region13
  $region12: #{rnn_forward.6} parent=0 // pred_region
    _
  $region13: #{rnn_forward.6} parent=0 // pred_fallthru
    _
  // Predicated region
  $region14: #{rnn_forward.6} parent=0 // pred_check
    _
  $region15: #{rnn_forward.6} parent=0 // pred_check_branch
    %19 = sbr.rel (0) target = $region17
  $region16: #{rnn_forward.6} parent=0 // pred_region
    _
  $region17: #{rnn_forward.6} parent=0 // pred_fallthru
    _
  %p20 = scmp.eq.s32.totalorder 0, 0
  // Predicated region
  $region18: #{rnn_forward.6} parent=0 // pred_check
    %p21 = pneg %p20
  $region19: #{rnn_forward.6} parent=0 // pred_check_branch
    %23 = sbr.rel (%p21) target = $region21
  $region20: #{rnn_forward.6} parent=0 // pred_region
    %v24 = vld [vmem:[%s1] sm:$0xff]
    %25 = vst [vmem:[%s5] sm:$0xff] %v24
    %v26 = vld [vmem:[%s2] sm:$0xff]
    %27 = vst [vmem:[%s6] sm:$0xff] %v26
  $region21: #{rnn_forward.6} parent=0 // pred_fallthru
    _
  %v28 = vld [vmem:[%s3] sm:$0xff]
  %v29 = vld [vmem:[%s3 + $0x8] sm:$0xff]
  %v30 = vld [vmem:[%s3 + $0x10] sm:$0xff]
  %v31 = vld [vmem:[%s3 + $0x18] sm:$0xff]
  %v32 = vld [vmem:[%s3 + $0x20] sm:$0xff]
  %v33 = vld [vmem:[%s3 + $0x28] sm:$0xff]
  %v34 = vld [vmem:[%s3 + $0x30] sm:$0xff]
  %v35 = vld [vmem:[%s3 + $0x38] sm:$0xff]
  %v36 = vld [vmem:[%s3 + $0x40] sm:$0xff]
  %v37 = vld [vmem:[%s3 + $0x48] sm:$0xff]
  %v38 = vld [vmem:[%s3 + $0x50] sm:$0xff]
  %v39 = vld [vmem:[%s3 + $0x58] sm:$0xff]
  %v40 = vld [vmem:[%s3 + $0x60] sm:$0xff]
  %v41 = vld [vmem:[%s3 + $0x68] sm:$0xff]
  %v42 = vld [vmem:[%s3 + $0x70] sm:$0xff]
  %v43 = vld [vmem:[%s3 + $0x78] sm:$0xff]
  %v44 = vld [vmem:[%s3 + $0x80] sm:$0xff]
  %v45 = vld [vmem:[%s3 + $0x88] sm:$0xff]
  %v46 = vld [vmem:[%s3 + $0x90] sm:$0xff]
  %v47 = vld [vmem:[%s3 + $0x98] sm:$0xff]
  %v48 = vld [vmem:[%s3 + $0xa0] sm:$0xff]
  %v49 = vld [vmem:[%s3 + $0xa8] sm:$0xff]
  %v50 = vld [vmem:[%s3 + $0xb0] sm:$0xff]
  %v51 = vld [vmem:[%s3 + $0xb8] sm:$0xff]
  %v52 = vld [vmem:[%s3 + $0xc0] sm:$0xff]
  %v53 = vld [vmem:[%s3 + $0xc8] sm:$0xff]
  %v54 = vld [vmem:[%s3 + $0xd0] sm:$0xff]
  %v55 = vld [vmem:[%s3 + $0xd8] sm:$0xff]
  %v56 = vld [vmem:[%s3 + $0xe0] sm:$0xff]
  %v57 = vld [vmem:[%s3 + $0xe8] sm:$0xff]
  %v58 = vld [vmem:[%s3 + $0xf0] sm:$0xff]
  %v59 = vld [vmem:[%s3 + $0xf8] sm:$0xff]
  %v60 = vld [vmem:[%s3 + $0x100] sm:$0xff]
  %v61 = vld [vmem:[%s3 + $0x108] sm:$0xff]
  %v62 = vld [vmem:[%s3 + $0x110] sm:$0xff]
  %v63 = vld [vmem:[%s3 + $0x118] sm:$0xff]
  %v64 = vld [vmem:[%s3 + $0x120] sm:$0xff]
  %v65 = vld [vmem:[%s3 + $0x128] sm:$0xff]
  %v66 = vld [vmem:[%s3 + $0x130] sm:$0xff]
  %v67 = vld [vmem:[%s3 + $0x138] sm:$0xff]
  %v68 = vld [vmem:[%s3 + $0x140] sm:$0xff]
  %v69 = vld [vmem:[%s3 + $0x148] sm:$0xff]
  %v70 = vld [vmem:[%s3 + $0x150] sm:$0xff]
  %v71 = vld [vmem:[%s3 + $0x158] sm:$0xff]
  %v72 = vld [vmem:[%s3 + $0x160] sm:$0xff]
  %v73 = vld [vmem:[%s3 + $0x168] sm:$0xff]
  %v74 = vld [vmem:[%s3 + $0x170] sm:$0xff]
  %v75 = vld [vmem:[%s3 + $0x178] sm:$0xff]
  %v76 = vld [vmem:[%s3 + $0x180] sm:$0xff]
  %v77 = vld [vmem:[%s3 + $0x188] sm:$0xff]
  %v78 = vld [vmem:[%s3 + $0x190] sm:$0xff]
  %v79 = vld [vmem:[%s3 + $0x198] sm:$0xff]
  %v80 = vld [vmem:[%s3 + $0x1a0] sm:$0xff]
  %v81 = vld [vmem:[%s3 + $0x1a8] sm:$0xff]
  %v82 = vld [vmem:[%s3 + $0x1b0] sm:$0xff]
  %v83 = vld [vmem:[%s3 + $0x1b8] sm:$0xff]
  %v84 = vld [vmem:[%s3 + $0x1c0] sm:$0xff]
  %v85 = vld [vmem:[%s3 + $0x1c8] sm:$0xff]
  %v86 = vld [vmem:[%s3 + $0x1d0] sm:$0xff]
  %v87 = vld [vmem:[%s3 + $0x1d8] sm:$0xff]
  %v88 = vld [vmem:[%s3 + $0x1e0] sm:$0xff]
  %v89 = vld [vmem:[%s3 + $0x1e8] sm:$0xff]
  %v90 = vld [vmem:[%s3 + $0x1f0] sm:$0xff]
  %v91 = vld [vmem:[%s3 + $0x1f8] sm:$0xff]
  %v92 = vld [vmem:[%s5] sm:$0xff]
  %v93 = vld [vmem:[%s6] sm:$0xff]
  %v94 = vld [vmem:[%s0] sm:$0xff]
  %v95 = vld [vmem:[%s0 + $0x8] sm:$0xff]
  %v96 = vld [vmem:[%s0 + $0x10] sm:$0xff]
  %v97 = vld [vmem:[%s0 + $0x18] sm:$0xff]
  %98 = vmatprep.subr.mxu0 %v89
  %99 = vmatpush1.msra.mxu0 %v88
  %100 = vmatprep.subr.mxu0 %v85
  %101 = vmatpush1.msra.mxu0 %v84
  %102 = vmatprep.subr.mxu0 %v81
  %103 = vmatpush1.msra.mxu0 %v80
  %104 = vmatprep.subr.mxu0 %v77
  %105 = vmatpush1.msra.mxu0 %v76
  %106 = vmatprep.subr.mxu0 %v73
  %107 = vmatpush1.msra.mxu0 %v72
  %108 = vmatprep.subr.mxu0 %v69
  %109 = vmatpush1.msra.mxu0 %v68
  %110 = vmatprep.subr.mxu0 %v65
  %111 = vmatpush1.msra.mxu0 %v64
  %112 = vmatprep.subr.mxu0 %v61
  %113 = vmatpush1.msra.mxu0 %v60
  %114 = vmatprep.subr.mxu0 %v57
  %115 = vmatpush1.msra.mxu0 %v56
  %116 = vmatprep.subr.mxu0 %v53
  %117 = vmatpush1.msra.mxu0 %v52
  %118 = vmatprep.subr.mxu0 %v49
  %119 = vmatpush1.msra.mxu0 %v48
  %120 = vmatprep.subr.mxu0 %v45
  %121 = vmatpush1.msra.mxu0 %v44
  %122 = vmatprep.subr.mxu0 %v41
  %123 = vmatpush1.msra.mxu0 %v40
  %124 = vmatprep.subr.mxu0 %v37
  %125 = vmatpush1.msra.mxu0 %v36
  %126 = vmatprep.subr.mxu0 %v33
  %127 = vmatpush1.msra.mxu0 %v32
  %128 = vmatprep.subr.mxu0 %v29
  %129 = vmatpush1.msra.mxu0 %v28
  %130 = vmatprep.subr.mxu0 0.0
  %131 = vmatpush2.msra.mxu0 0.0
  %132 = vmatprep.subr.mxu0 0.0
  %133 = vmatpush2.msra.mxu0 0.0
  %134 = vmatprep.subr.mxu0 0.0
  %135 = vmatpush2.msra.mxu0 0.0
  %136 = vmatprep.subr.mxu0 0.0
  %137 = vmatpush2.msra.mxu0 0.0
  %138 = vmatprep.subr.mxu0 0.0
  %139 = vmatpush2.msra.mxu0 0.0
  %140 = vmatprep.subr.mxu0 0.0
  %141 = vmatpush2.msra.mxu0 0.0
  %142 = vmatprep.subr.mxu0 0.0
  %143 = vmatpush2.msra.mxu0 0.0
  %144 = vmatprep.subr.mxu0 0.0
  %145 = vmatpush2.msra.mxu0 0.0
  %146 = vmatprep.subr.mxu0 0.0
  %147 = vmatpush2.msra.mxu0 0.0
  %148 = vmatprep.subr.mxu0 0.0
  %149 = vmatpush2.msra.mxu0 0.0
  %150 = vmatprep.subr.mxu0 0.0
  %151 = vmatpush2.msra.mxu0 0.0
  %152 = vmatprep.subr.mxu0 0.0
  %153 = vmatpush2.msra.mxu0 0.0
  %154 = vmatprep.subr.mxu0 0.0
  %155 = vmatpush2.msra.mxu0 0.0
  %156 = vmatprep.subr.mxu0 0.0
  %157 = vmatpush2.msra.mxu0 0.0
  %158 = vmatprep.subr.mxu0 0.0
  %159 = vmatpush2.msra.mxu0 0.0
  %160 = vmatprep.subr.mxu0 0.0
  %161 = vmatpush2.msra.mxu0 0.0
  %162 = vmatprep.mubr.f32.mxu0 0.0
  %163 = vmatmul.mubr.f32.gmra.mxu0 %v92
  %v164 = vpop.f32.mrf.mxu0
  %v165 = vadd.f32 0.0, %v164
  %v166 = vpop.f32.mrf.mxu0
  %v167 = vadd.f32 0.0, %v166
  %168 = vdwg.mxu0
  %169 = vmatprep.subr.mxu0 %v91
  %170 = vmatpush1.msra.mxu0 %v90
  %171 = vmatprep.subr.mxu0 %v87
  %172 = vmatpush1.msra.mxu0 %v86
  %173 = vmatprep.subr.mxu0 %v83
  %174 = vmatpush1.msra.mxu0 %v82
  %175 = vmatprep.subr.mxu0 %v79
  %176 = vmatpush1.msra.mxu0 %v78
  %177 = vmatprep.subr.mxu0 %v75
  %178 = vmatpush1.msra.mxu0 %v74
  %179 = vmatprep.subr.mxu0 %v71
  %180 = vmatpush1.msra.mxu0 %v70
  %181 = vmatprep.subr.mxu0 %v67
  %182 = vmatpush1.msra.mxu0 %v66
  %183 = vmatprep.subr.mxu0 %v63
  %184 = vmatpush1.msra.mxu0 %v62
  %185 = vmatprep.subr.mxu0 %v59
  %186 = vmatpush1.msra.mxu0 %v58
  %187 = vmatprep.subr.mxu0 %v55
  %188 = vmatpush1.msra.mxu0 %v54
  %189 = vmatprep.subr.mxu0 %v51
  %190 = vmatpush1.msra.mxu0 %v50
  %191 = vmatprep.subr.mxu0 %v47
  %192 = vmatpush1.msra.mxu0 %v46
  %193 = vmatprep.subr.mxu0 %v43
  %194 = vmatpush1.msra.mxu0 %v42
  %195 = vmatprep.subr.mxu0 %v39
  %196 = vmatpush1.msra.mxu0 %v38
  %197 = vmatprep.subr.mxu0 %v35
  %198 = vmatpush1.msra.mxu0 %v34
  %199 = vmatprep.subr.mxu0 %v31
  %200 = vmatpush1.msra.mxu0 %v30
  %201 = vmatprep.subr.mxu0 0.0
  %202 = vmatpush2.msra.mxu0 0.0
  %203 = vmatprep.subr.mxu0 0.0
  %204 = vmatpush2.msra.mxu0 0.0
  %205 = vmatprep.subr.mxu0 0.0
  %206 = vmatpush2.msra.mxu0 0.0
  %207 = vmatprep.subr.mxu0 0.0
  %208 = vmatpush2.msra.mxu0 0.0
  %209 = vmatprep.subr.mxu0 0.0
  %210 = vmatpush2.msra.mxu0 0.0
  %211 = vmatprep.subr.mxu0 0.0
  %212 = vmatpush2.msra.mxu0 0.0
  %213 = vmatprep.subr.mxu0 0.0
  %214 = vmatpush2.msra.mxu0 0.0
  %215 = vmatprep.subr.mxu0 0.0
  %216 = vmatpush2.msra.mxu0 0.0
  %217 = vmatprep.subr.mxu0 0.0
  %218 = vmatpush2.msra.mxu0 0.0
  %219 = vmatprep.subr.mxu0 0.0
  %220 = vmatpush2.msra.mxu0 0.0
  %221 = vmatprep.subr.mxu0 0.0
  %222 = vmatpush2.msra.mxu0 0.0
  %223 = vmatprep.subr.mxu0 0.0
  %224 = vmatpush2.msra.mxu0 0.0
  %225 = vmatprep.subr.mxu0 0.0
  %226 = vmatpush2.msra.mxu0 0.0
  %227 = vmatprep.subr.mxu0 0.0
  %228 = vmatpush2.msra.mxu0 0.0
  %229 = vmatprep.subr.mxu0 0.0
  %230 = vmatpush2.msra.mxu0 0.0
  %231 = vmatprep.subr.mxu0 0.0
  %232 = vmatpush2.msra.mxu0 0.0
  %233 = vmatprep.mubr.f32.mxu0 0.0
  %234 = vmatmul.mubr.f32.gmra.mxu0 %v92
  %v235 = vpop.f32.mrf.mxu0
  %v236 = vadd.f32 0.0, %v235
  %v237 = vpop.f32.mrf.mxu0
  %v238 = vadd.f32 0.0, %v237
  %239 = vdwg.mxu0
  %v240 = vadd.f32 %v94, %v165
  %v241 = vadd.f32 %v95, %v167
  %v242 = vadd.f32 %v96, %v236
  %v243 = vadd.f32 %v97, %v238
  %v244 = vxor.u32 %v240, 2147483648
  %v245 = vmul.f32 %v244, 1.442695
  %v246 = vpow.pop %v245
  %v247 = vadd.f32 %v246, 1.0
  %v248 = vrcp.pop %v247
  %v249 = vmul.f32 1.0, %v248
  %v250 = vxor.u32 %v241, 2147483648
  %v251 = vmul.f32 %v250, 1.442695
  %v252 = vpow.pop %v251
  %v253 = vadd.f32 %v252, 1.0
  %v254 = vrcp.pop %v253
  %v255 = vmul.f32 1.0, %v254
  %v256 = vtanh.pop %v242
  %v257 = vxor.u32 %v243, 2147483648
  %v258 = vmul.f32 %v257, 1.442695
  %v259 = vpow.pop %v258
  %v260 = vadd.f32 %v259, 1.0
  %v261 = vrcp.pop %v260
  %v262 = vmul.f32 1.0, %v261
  %v263 = vmul.f32 %v255, %v93
  %v264 = vmul.f32 %v249, %v256
  %v265 = vadd.f32 %v263, %v264
  %v266 = vtanh.pop %v265
  %v267 = vmul.f32 %v262, %v266
  %268 = vst [vmem:[%s4] sm:$0xff] %v267
  %s269 = scalar_lea.vmem %s0, 32
  %v270 = vld [vmem:[%s269] sm:$0xff]
  %v271 = vld [vmem:[%s269 + $0x8] sm:$0xff]
  %v272 = vld [vmem:[%s269 + $0x10] sm:$0xff]
  %v273 = vld [vmem:[%s269 + $0x18] sm:$0xff]
  %274 = vmatprep.subr.mxu0 %v89
  %275 = vmatpush1.msra.mxu0 %v88
  %276 = vmatprep.subr.mxu0 %v85
  %277 = vmatpush1.msra.mxu0 %v84
  %278 = vmatprep.subr.mxu0 %v81
  %279 = vmatpush1.msra.mxu0 %v80
  %280 = vmatprep.subr.mxu0 %v77
  %281 = vmatpush1.msra.mxu0 %v76
  %282 = vmatprep.subr.mxu0 %v73
  %283 = vmatpush1.msra.mxu0 %v72
  %284 = vmatprep.subr.mxu0 %v69
  %285 = vmatpush1.msra.mxu0 %v68
  %286 = vmatprep.subr.mxu0 %v65
  %287 = vmatpush1.msra.mxu0 %v64
  %288 = vmatprep.subr.mxu0 %v61
  %289 = vmatpush1.msra.mxu0 %v60
  %290 = vmatprep.subr.mxu0 %v57
  %291 = vmatpush1.msra.mxu0 %v56
  %292 = vmatprep.subr.mxu0 %v53
  %293 = vmatpush1.msra.mxu0 %v52
  %294 = vmatprep.subr.mxu0 %v49
  %295 = vmatpush1.msra.mxu0 %v48
  %296 = vmatprep.subr.mxu0 %v45
  %297 = vmatpush1.msra.mxu0 %v44
  %298 = vmatprep.subr.mxu0 %v41
  %299 = vmatpush1.msra.mxu0 %v40
  %300 = vmatprep.subr.mxu0 %v37
  %301 = vmatpush1.msra.mxu0 %v36
  %302 = vmatprep.subr.mxu0 %v33
  %303 = vmatpush1.msra.mxu0 %v32
  %304 = vmatprep.subr.mxu0 %v29
  %305 = vmatpush1.msra.mxu0 %v28
  %306 = vmatprep.subr.mxu0 0.0
  %307 = vmatpush2.msra.mxu0 0.0
  %308 = vmatprep.subr.mxu0 0.0
  %309 = vmatpush2.msra.mxu0 0.0
  %310 = vmatprep.subr.mxu0 0.0
  %311 = vmatpush2.msra.mxu0 0.0
  %312 = vmatprep.subr.mxu0 0.0
  %313 = vmatpush2.msra.mxu0 0.0
  %314 = vmatprep.subr.mxu0 0.0
  %315 = vmatpush2.msra.mxu0 0.0
  %316 = vmatprep.subr.mxu0 0.0
  %317 = vmatpush2.msra.mxu0 0.0
  %318 = vmatprep.subr.mxu0 0.0
  %319 = vmatpush2.msra.mxu0 0.0
  %320 = vmatprep.subr.mxu0 0.0
  %321 = vmatpush2.msra.mxu0 0.0
  %322 = vmatprep.subr.mxu0 0.0
  %323 = vmatpush2.msra.mxu0 0.0
  %324 = vmatprep.subr.mxu0 0.0
  %325 = vmatpush2.msra.mxu0 0.0
  %326 = vmatprep.subr.mxu0 0.0
  %327 = vmatpush2.msra.mxu0 0.0
  %328 = vmatprep.subr.mxu0 0.0
  %329 = vmatpush2.msra.mxu0 0.0
  %330 = vmatprep.subr.mxu0 0.0
  %331 = vmatpush2.msra.mxu0 0.0
  %332 = vmatprep.subr.mxu0 0.0
  %333 = vmatpush2.msra.mxu0 0.0
  %334 = vmatprep.subr.mxu0 0.0
  %335 = vmatpush2.msra.mxu0 0.0
  %336 = vmatprep.subr.mxu0 0.0
  %337 = vmatpush2.msra.mxu0 0.0
  %338 = vmatprep.mubr.f32.mxu0 0.0
  %339 = vmatmul.mubr.f32.gmra.mxu0 %v267
  %v340 = vpop.f32.mrf.mxu0
  %v341 = vadd.f32 0.0, %v340
  %v342 = vpop.f32.mrf.mxu0
  %v343 = vadd.f32 0.0, %v342
  %344 = vdwg.mxu0
  %345 = vmatprep.subr.mxu0 %v91
  %346 = vmatpush1.msra.mxu0 %v90
  %347 = vmatprep.subr.mxu0 %v87
  %348 = vmatpush1.msra.mxu0 %v86
  %349 = vmatprep.subr.mxu0 %v83
  %350 = vmatpush1.msra.mxu0 %v82
  %351 = vmatprep.subr.mxu0 %v79
  %352 = vmatpush1.msra.mxu0 %v78
  %353 = vmatprep.subr.mxu0 %v75
  %354 = vmatpush1.msra.mxu0 %v74
  %355 = vmatprep.subr.mxu0 %v71
  %356 = vmatpush1.msra.mxu0 %v70
  %357 = vmatprep.subr.mxu0 %v67
  %358 = vmatpush1.msra.mxu0 %v66
  %359 = vmatprep.subr.mxu0 %v63
  %360 = vmatpush1.msra.mxu0 %v62
  %361 = vmatprep.subr.mxu0 %v59
  %362 = vmatpush1.msra.mxu0 %v58
  %363 = vmatprep.subr.mxu0 %v55
  %364 = vmatpush1.msra.mxu0 %v54
  %365 = vmatprep.subr.mxu0 %v51
  %366 = vmatpush1.msra.mxu0 %v50
  %367 = vmatprep.subr.mxu0 %v47
  %368 = vmatpush1.msra.mxu0 %v46
  %369 = vmatprep.subr.mxu0 %v43
  %370 = vmatpush1.msra.mxu0 %v42
  %371 = vmatprep.subr.mxu0 %v39
  %372 = vmatpush1.msra.mxu0 %v38
  %373 = vmatprep.subr.mxu0 %v35
  %374 = vmatpush1.msra.mxu0 %v34
  %375 = vmatprep.subr.mxu0 %v31
  %376 = vmatpush1.msra.mxu0 %v30
  %377 = vmatprep.subr.mxu0 0.0
  %378 = vmatpush2.msra.mxu0 0.0
  %379 = vmatprep.subr.mxu0 0.0
  %380 = vmatpush2.msra.mxu0 0.0
  %381 = vmatprep.subr.mxu0 0.0
  %382 = vmatpush2.msra.mxu0 0.0
  %383 = vmatprep.subr.mxu0 0.0
  %384 = vmatpush2.msra.mxu0 0.0
  %385 = vmatprep.subr.mxu0 0.0
  %386 = vmatpush2.msra.mxu0 0.0
  %387 = vmatprep.subr.mxu0 0.0
  %388 = vmatpush2.msra.mxu0 0.0
  %389 = vmatprep.subr.mxu0 0.0
  %390 = vmatpush2.msra.mxu0 0.0
  %391 = vmatprep.subr.mxu0 0.0
  %392 = vmatpush2.msra.mxu0 0.0
  %393 = vmatprep.subr.mxu0 0.0
  %394 = vmatpush2.msra.mxu0 0.0
  %395 = vmatprep.subr.mxu0 0.0
  %396 = vmatpush2.msra.mxu0 0.0
  %397 = vmatprep.subr.mxu0 0.0
  %398 = vmatpush2.msra.mxu0 0.0
  %399 = vmatprep.subr.mxu0 0.0
  %400 = vmatpush2.msra.mxu0 0.0
  %401 = vmatprep.subr.mxu0 0.0
  %402 = vmatpush2.msra.mxu0 0.0
  %403 = vmatprep.subr.mxu0 0.0
  %404 = vmatpush2.msra.mxu0 0.0
  %405 = vmatprep.subr.mxu0 0.0
  %406 = vmatpush2.msra.mxu0 0.0
  %407 = vmatprep.subr.mxu0 0.0
  %408 = vmatpush2.msra.mxu0 0.0
  %409 = vmatprep.mubr.f32.mxu0 0.0
  %410 = vmatmul.mubr.f32.gmra.mxu0 %v267
  %v411 = vpop.f32.mrf.mxu0
  %v412 = vadd.f32 0.0, %v411
  %v413 = vpop.f32.mrf.mxu0
  %v414 = vadd.f32 0.0, %v413
  %415 = vdwg.mxu0
  %v416 = vadd.f32 %v270, %v341
  %v417 = vadd.f32 %v271, %v343
  %v418 = vadd.f32 %v272, %v412
  %v419 = vadd.f32 %v273, %v414
  %v420 = vxor.u32 %v416, 2147483648
  %v421 = vmul.f32 %v420, 1.442695
  %v422 = vpow.pop %v421
  %v423 = vadd.f32 %v422, 1.0
  %v424 = vrcp.pop %v423
  %v425 = vmul.f32 1.0, %v424
  %v426 = vxor.u32 %v417, 2147483648
  %v427 = vmul.f32 %v426, 1.442695
  %v428 = vpow.pop %v427
  %v429 = vadd.f32 %v428, 1.0
  %v430 = vrcp.pop %v429
  %v431 = vmul.f32 1.0, %v430
  %v432 = vtanh.pop %v418
  %v433 = vxor.u32 %v419, 2147483648
  %v434 = vmul.f32 %v433, 1.442695
  %v435 = vpow.pop %v434
  %v436 = vadd.f32 %v435, 1.0
  %v437 = vrcp.pop %v436
  %v438 = vmul.f32 1.0, %v437
  %v439 = vmul.f32 %v431, %v265
  %v440 = vmul.f32 %v425, %v432
  %v441 = vadd.f32 %v439, %v440
  %v442 = vtanh.pop %v441
  %v443 = vmul.f32 %v438, %v442
  %s444 = scalar_lea.vmem %s4, 8
  %445 = vst [vmem:[%s444] sm:$0xff] %v443
  %s446 = scalar_lea.vmem %s0, 64
  %v447 = vld [vmem:[%s446] sm:$0xff]
  %v448 = vld [vmem:[%s446 + $0x8] sm:$0xff]
  %v449 = vld [vmem:[%s446 + $0x10] sm:$0xff]
  %v450 = vld [vmem:[%s446 + $0x18] sm:$0xff]
  %451 = vmatprep.subr.mxu0 %v89
  %452 = vmatpush1.msra.mxu0 %v88
  %453 = vmatprep.subr.mxu0 %v85
  %454 = vmatpush1.msra.mxu0 %v84
  %455 = vmatprep.subr.mxu0 %v81
  %456 = vmatpush1.msra.mxu0 %v80
  %457 = vmatprep.subr.mxu0 %v77
  %458 = vmatpush1.msra.mxu0 %v76
  %459 = vmatprep.subr.mxu0 %v73
  %460 = vmatpush1.msra.mxu0 %v72
  %461 = vmatprep.subr.mxu0 %v69
  %462 = vmatpush1.msra.mxu0 %v68
  %463 = vmatprep.subr.mxu0 %v65
  %464 = vmatpush1.msra.mxu0 %v64
  %465 = vmatprep.subr.mxu0 %v61
  %466 = vmatpush1.msra.mxu0 %v60
  %467 = vmatprep.subr.mxu0 %v57
  %468 = vmatpush1.msra.mxu0 %v56
  %469 = vmatprep.subr.mxu0 %v53
  %470 = vmatpush1.msra.mxu0 %v52
  %471 = vmatprep.subr.mxu0 %v49
  %472 = vmatpush1.msra.mxu0 %v48
  %473 = vmatprep.subr.mxu0 %v45
  %474 = vmatpush1.msra.mxu0 %v44
  %475 = vmatprep.subr.mxu0 %v41
  %476 = vmatpush1.msra.mxu0 %v40
  %477 = vmatprep.subr.mxu0 %v37
  %478 = vmatpush1.msra.mxu0 %v36
  %479 = vmatprep.subr.mxu0 %v33
  %480 = vmatpush1.msra.mxu0 %v32
  %481 = vmatprep.subr.mxu0 %v29
  %482 = vmatpush1.msra.mxu0 %v28
  %483 = vmatprep.subr.mxu0 0.0
  %484 = vmatpush2.msra.mxu0 0.0
  %485 = vmatprep.subr.mxu0 0.0
  %486 = vmatpush2.msra.mxu0 0.0
  %487 = vmatprep.subr.mxu0 0.0
  %488 = vmatpush2.msra.mxu0 0.0
  %489 = vmatprep.subr.mxu0 0.0
  %490 = vmatpush2.msra.mxu0 0.0
  %491 = vmatprep.subr.mxu0 0.0
  %492 = vmatpush2.msra.mxu0 0.0
  %493 = vmatprep.subr.mxu0 0.0
  %494 = vmatpush2.msra.mxu0 0.0
  %495 = vmatprep.subr.mxu0 0.0
  %496 = vmatpush2.msra.mxu0 0.0
  %497 = vmatprep.subr.mxu0 0.0
  %498 = vmatpush2.msra.mxu0 0.0
  %499 = vmatprep.subr.mxu0 0.0
  %500 = vmatpush2.msra.mxu0 0.0
  %501 = vmatprep.subr.mxu0 0.0
  %502 = vmatpush2.msra.mxu0 0.0
  %503 = vmatprep.subr.mxu0 0.0
  %504 = vmatpush2.msra.mxu0 0.0
  %505 = vmatprep.subr.mxu0 0.0
  %506 = vmatpush2.msra.mxu0 0.0
  %507 = vmatprep.subr.mxu0 0.0
  %508 = vmatpush2.msra.mxu0 0.0
  %509 = vmatprep.subr.mxu0 0.0
  %510 = vmatpush2.msra.mxu0 0.0
  %511 = vmatprep.subr.mxu0 0.0
  %512 = vmatpush2.msra.mxu0 0.0
  %513 = vmatprep.subr.mxu0 0.0
  %514 = vmatpush2.msra.mxu0 0.0
  %515 = vmatprep.mubr.f32.mxu0 0.0
  %516 = vmatmul.mubr.f32.gmra.mxu0 %v443
  %v517 = vpop.f32.mrf.mxu0
  %v518 = vadd.f32 0.0, %v517
  %v519 = vpop.f32.mrf.mxu0
  %v520 = vadd.f32 0.0, %v519
  %521 = vdwg.mxu0
  %522 = vmatprep.subr.mxu0 %v91
  %523 = vmatpush1.msra.mxu0 %v90
  %524 = vmatprep.subr.mxu0 %v87
  %525 = vmatpush1.msra.mxu0 %v86
  %526 = vmatprep.subr.mxu0 %v83
  %527 = vmatpush1.msra.mxu0 %v82
  %528 = vmatprep.subr.mxu0 %v79
  %529 = vmatpush1.msra.mxu0 %v78
  %530 = vmatprep.subr.mxu0 %v75
  %531 = vmatpush1.msra.mxu0 %v74
  %532 = vmatprep.subr.mxu0 %v71
  %533 = vmatpush1.msra.mxu0 %v70
  %534 = vmatprep.subr.mxu0 %v67
  %535 = vmatpush1.msra.mxu0 %v66
  %536 = vmatprep.subr.mxu0 %v63
  %537 = vmatpush1.msra.mxu0 %v62
  %538 = vmatprep.subr.mxu0 %v59
  %539 = vmatpush1.msra.mxu0 %v58
  %540 = vmatprep.subr.mxu0 %v55
  %541 = vmatpush1.msra.mxu0 %v54
  %542 = vmatprep.subr.mxu0 %v51
  %543 = vmatpush1.msra.mxu0 %v50
  %544 = vmatprep.subr.mxu0 %v47
  %545 = vmatpush1.msra.mxu0 %v46
  %546 = vmatprep.subr.mxu0 %v43
  %547 = vmatpush1.msra.mxu0 %v42
  %548 = vmatprep.subr.mxu0 %v39
  %549 = vmatpush1.msra.mxu0 %v38
  %550 = vmatprep.subr.mxu0 %v35
  %551 = vmatpush1.msra.mxu0 %v34
  %552 = vmatprep.subr.mxu0 %v31
  %553 = vmatpush1.msra.mxu0 %v30
  %554 = vmatprep.subr.mxu0 0.0
  %555 = vmatpush2.msra.mxu0 0.0
  %556 = vmatprep.subr.mxu0 0.0
  %557 = vmatpush2.msra.mxu0 0.0
  %558 = vmatprep.subr.mxu0 0.0
  %559 = vmatpush2.msra.mxu0 0.0
  %560 = vmatprep.subr.mxu0 0.0
  %561 = vmatpush2.msra.mxu0 0.0
  %562 = vmatprep.subr.mxu0 0.0
  %563 = vmatpush2.msra.mxu0 0.0
  %564 = vmatprep.subr.mxu0 0.0
  %565 = vmatpush2.msra.mxu0 0.0
  %566 = vmatprep.subr.mxu0 0.0
  %567 = vmatpush2.msra.mxu0 0.0
  %568 = vmatprep.subr.mxu0 0.0
  %569 = vmatpush2.msra.mxu0 0.0
  %570 = vmatprep.subr.mxu0 0.0
  %571 = vmatpush2.msra.mxu0 0.0
  %572 = vmatprep.subr.mxu0 0.0
  %573 = vmatpush2.msra.mxu0 0.0
  %574 = vmatprep.subr.mxu0 0.0
  %575 = vmatpush2.msra.mxu0 0.0
  %576 = vmatprep.subr.mxu0 0.0
  %577 = vmatpush2.msra.mxu0 0.0
  %578 = vmatprep.subr.mxu0 0.0
  %579 = vmatpush2.msra.mxu0 0.0
  %580 = vmatprep.subr.mxu0 0.0
  %581 = vmatpush2.msra.mxu0 0.0
  %582 = vmatprep.subr.mxu0 0.0
  %583 = vmatpush2.msra.mxu0 0.0
  %584 = vmatprep.subr.mxu0 0.0
  %585 = vmatpush2.msra.mxu0 0.0
  %586 = vmatprep.mubr.f32.mxu0 0.0
  %587 = vmatmul.mubr.f32.gmra.mxu0 %v443
  %v588 = vpop.f32.mrf.mxu0
  %v589 = vadd.f32 0.0, %v588
  %v590 = vpop.f32.mrf.mxu0
  %v591 = vadd.f32 0.0, %v590
  %592 = vdwg.mxu0
  %v593 = vadd.f32 %v447, %v518
  %v594 = vadd.f32 %v448, %v520
  %v595 = vadd.f32 %v449, %v589
  %v596 = vadd.f32 %v450, %v591
  %v597 = vxor.u32 %v593, 2147483648
  %v598 = vmul.f32 %v597, 1.442695
  %v599 = vpow.pop %v598
  %v600 = vadd.f32 %v599, 1.0
  %v601 = vrcp.pop %v600
  %v602 = vmul.f32 1.0, %v601
  %v603 = vxor.u32 %v594, 2147483648
  %v604 = vmul.f32 %v603, 1.442695
  %v605 = vpow.pop %v604
  %v606 = vadd.f32 %v605, 1.0
  %v607 = vrcp.pop %v606
  %v608 = vmul.f32 1.0, %v607
  %v609 = vtanh.pop %v595
  %v610 = vxor.u32 %v596, 2147483648
  %v611 = vmul.f32 %v610, 1.442695
  %v612 = vpow.pop %v611
  %v613 = vadd.f32 %v612, 1.0
  %v614 = vrcp.pop %v613
  %v615 = vmul.f32 1.0, %v614
  %v616 = vmul.f32 %v608, %v441
  %v617 = vmul.f32 %v602, %v609
  %v618 = vadd.f32 %v616, %v617
  %v619 = vtanh.pop %v618
  %v620 = vmul.f32 %v615, %v619
  %s621 = scalar_lea.vmem %s4, 16
  %622 = vst [vmem:[%s621] sm:$0xff] %v620
  %s623 = scalar_lea.vmem %s0, 96
  %v624 = vld [vmem:[%s623] sm:$0xff]
  %v625 = vld [vmem:[%s623 + $0x8] sm:$0xff]
  %v626 = vld [vmem:[%s623 + $0x10] sm:$0xff]
  %v627 = vld [vmem:[%s623 + $0x18] sm:$0xff]
  %628 = vmatprep.subr.mxu0 %v89
  %629 = vmatpush1.msra.mxu0 %v88
  %630 = vmatprep.subr.mxu0 %v85
  %631 = vmatpush1.msra.mxu0 %v84
  %632 = vmatprep.subr.mxu0 %v81
  %633 = vmatpush1.msra.mxu0 %v80
  %634 = vmatprep.subr.mxu0 %v77
  %635 = vmatpush1.msra.mxu0 %v76
  %636 = vmatprep.subr.mxu0 %v73
  %637 = vmatpush1.msra.mxu0 %v72
  %638 = vmatprep.subr.mxu0 %v69
  %639 = vmatpush1.msra.mxu0 %v68
  %640 = vmatprep.subr.mxu0 %v65
  %641 = vmatpush1.msra.mxu0 %v64
  %642 = vmatprep.subr.mxu0 %v61
  %643 = vmatpush1.msra.mxu0 %v60
  %644 = vmatprep.subr.mxu0 %v57
  %645 = vmatpush1.msra.mxu0 %v56
  %646 = vmatprep.subr.mxu0 %v53
  %647 = vmatpush1.msra.mxu0 %v52
  %648 = vmatprep.subr.mxu0 %v49
  %649 = vmatpush1.msra.mxu0 %v48
  %650 = vmatprep.subr.mxu0 %v45
  %651 = vmatpush1.msra.mxu0 %v44
  %652 = vmatprep.subr.mxu0 %v41
  %653 = vmatpush1.msra.mxu0 %v40
  %654 = vmatprep.subr.mxu0 %v37
  %655 = vmatpush1.msra.mxu0 %v36
  %656 = vmatprep.subr.mxu0 %v33
  %657 = vmatpush1.msra.mxu0 %v32
  %658 = vmatprep.subr.mxu0 %v29
  %659 = vmatpush1.msra.mxu0 %v28
  %660 = vmatprep.subr.mxu0 0.0
  %661 = vmatpush2.msra.mxu0 0.0
  %662 = vmatprep.subr.mxu0 0.0
  %663 = vmatpush2.msra.mxu0 0.0
  %664 = vmatprep.subr.mxu0 0.0
  %665 = vmatpush2.msra.mxu0 0.0
  %666 = vmatprep.subr.mxu0 0.0
  %667 = vmatpush2.msra.mxu0 0.0
  %668 = vmatprep.subr.mxu0 0.0
  %669 = vmatpush2.msra.mxu0 0.0
  %670 = vmatprep.subr.mxu0 0.0
  %671 = vmatpush2.msra.mxu0 0.0
  %672 = vmatprep.subr.mxu0 0.0
  %673 = vmatpush2.msra.mxu0 0.0
  %674 = vmatprep.subr.mxu0 0.0
  %675 = vmatpush2.msra.mxu0 0.0
  %676 = vmatprep.subr.mxu0 0.0
  %677 = vmatpush2.msra.mxu0 0.0
  %678 = vmatprep.subr.mxu0 0.0
  %679 = vmatpush2.msra.mxu0 0.0
  %680 = vmatprep.subr.mxu0 0.0
  %681 = vmatpush2.msra.mxu0 0.0
  %682 = vmatprep.subr.mxu0 0.0
  %683 = vmatpush2.msra.mxu0 0.0
  %684 = vmatprep.subr.mxu0 0.0
  %685 = vmatpush2.msra.mxu0 0.0
  %686 = vmatprep.subr.mxu0 0.0
  %687 = vmatpush2.msra.mxu0 0.0
  %688 = vmatprep.subr.mxu0 0.0
  %689 = vmatpush2.msra.mxu0 0.0
  %690 = vmatprep.subr.mxu0 0.0
  %691 = vmatpush2.msra.mxu0 0.0
  %692 = vmatprep.mubr.f32.mxu0 0.0
  %693 = vmatmul.mubr.f32.gmra.mxu0 %v620
  %v694 = vpop.f32.mrf.mxu0
  %v695 = vadd.f32 0.0, %v694
  %v696 = vpop.f32.mrf.mxu0
  %v697 = vadd.f32 0.0, %v696
  %698 = vdwg.mxu0
  %699 = vmatprep.subr.mxu0 %v91
  %700 = vmatpush1.msra.mxu0 %v90
  %701 = vmatprep.subr.mxu0 %v87
  %702 = vmatpush1.msra.mxu0 %v86
  %703 = vmatprep.subr.mxu0 %v83
  %704 = vmatpush1.msra.mxu0 %v82
  %705 = vmatprep.subr.mxu0 %v79
  %706 = vmatpush1.msra.mxu0 %v78
  %707 = vmatprep.subr.mxu0 %v75
  %708 = vmatpush1.msra.mxu0 %v74
  %709 = vmatprep.subr.mxu0 %v71
  %710 = vmatpush1.msra.mxu0 %v70
  %711 = vmatprep.subr.mxu0 %v67
  %712 = vmatpush1.msra.mxu0 %v66
  %713 = vmatprep.subr.mxu0 %v63
  %714 = vmatpush1.msra.mxu0 %v62
  %715 = vmatprep.subr.mxu0 %v59
  %716 = vmatpush1.msra.mxu0 %v58
  %717 = vmatprep.subr.mxu0 %v55
  %718 = vmatpush1.msra.mxu0 %v54
  %719 = vmatprep.subr.mxu0 %v51
  %720 = vmatpush1.msra.mxu0 %v50
  %721 = vmatprep.subr.mxu0 %v47
  %722 = vmatpush1.msra.mxu0 %v46
  %723 = vmatprep.subr.mxu0 %v43
  %724 = vmatpush1.msra.mxu0 %v42
  %725 = vmatprep.subr.mxu0 %v39
  %726 = vmatpush1.msra.mxu0 %v38
  %727 = vmatprep.subr.mxu0 %v35
  %728 = vmatpush1.msra.mxu0 %v34
  %729 = vmatprep.subr.mxu0 %v31
  %730 = vmatpush1.msra.mxu0 %v30
  %731 = vmatprep.subr.mxu0 0.0
  %732 = vmatpush2.msra.mxu0 0.0
  %733 = vmatprep.subr.mxu0 0.0
  %734 = vmatpush2.msra.mxu0 0.0
  %735 = vmatprep.subr.mxu0 0.0
  %736 = vmatpush2.msra.mxu0 0.0
  %737 = vmatprep.subr.mxu0 0.0
  %738 = vmatpush2.msra.mxu0 0.0
  %739 = vmatprep.subr.mxu0 0.0
  %740 = vmatpush2.msra.mxu0 0.0
  %741 = vmatprep.subr.mxu0 0.0
  %742 = vmatpush2.msra.mxu0 0.0
  %743 = vmatprep.subr.mxu0 0.0
  %744 = vmatpush2.msra.mxu0 0.0
  %745 = vmatprep.subr.mxu0 0.0
  %746 = vmatpush2.msra.mxu0 0.0
  %747 = vmatprep.subr.mxu0 0.0
  %748 = vmatpush2.msra.mxu0 0.0
  %749 = vmatprep.subr.mxu0 0.0
  %750 = vmatpush2.msra.mxu0 0.0
  %751 = vmatprep.subr.mxu0 0.0
  %752 = vmatpush2.msra.mxu0 0.0
  %753 = vmatprep.subr.mxu0 0.0
  %754 = vmatpush2.msra.mxu0 0.0
  %755 = vmatprep.subr.mxu0 0.0
  %756 = vmatpush2.msra.mxu0 0.0
  %757 = vmatprep.subr.mxu0 0.0
  %758 = vmatpush2.msra.mxu0 0.0
  %759 = vmatprep.subr.mxu0 0.0
  %760 = vmatpush2.msra.mxu0 0.0
  %761 = vmatprep.subr.mxu0 0.0
  %762 = vmatpush2.msra.mxu0 0.0
  %763 = vmatprep.mubr.f32.mxu0 0.0
  %764 = vmatmul.mubr.f32.gmra.mxu0 %v620
  %v765 = vpop.f32.mrf.mxu0
  %v766 = vadd.f32 0.0, %v765
  %v767 = vpop.f32.mrf.mxu0
  %v768 = vadd.f32 0.0, %v767
  %769 = vdwg.mxu0
  %v770 = vadd.f32 %v624, %v695
  %v771 = vadd.f32 %v625, %v697
  %v772 = vadd.f32 %v626, %v766
  %v773 = vadd.f32 %v627, %v768
  %v774 = vxor.u32 %v770, 2147483648
  %v775 = vmul.f32 %v774, 1.442695
  %v776 = vpow.pop %v775
  %v777 = vadd.f32 %v776, 1.0
  %v778 = vrcp.pop %v777
  %v779 = vmul.f32 1.0, %v778
  %v780 = vxor.u32 %v771, 2147483648
  %v781 = vmul.f32 %v780, 1.442695
  %v782 = vpow.pop %v781
  %v783 = vadd.f32 %v782, 1.0
  %v784 = vrcp.pop %v783
  %v785 = vmul.f32 1.0, %v784
  %v786 = vtanh.pop %v772
  %v787 = vxor.u32 %v773, 2147483648
  %v788 = vmul.f32 %v787, 1.442695
  %v789 = vpow.pop %v788
  %v790 = vadd.f32 %v789, 1.0
  %v791 = vrcp.pop %v790
  %v792 = vmul.f32 1.0, %v791
  %v793 = vmul.f32 %v785, %v618
  %v794 = vmul.f32 %v779, %v786
  %v795 = vadd.f32 %v793, %v794
  %v796 = vtanh.pop %v795
  %v797 = vmul.f32 %v792, %v796
  %s798 = scalar_lea.vmem %s4, 24
  %799 = vst [vmem:[%s798] sm:$0xff] %v797
  %s800 = scalar_lea.vmem %s0, 128
  %v801 = vld [vmem:[%s800] sm:$0xff]
  %v802 = vld [vmem:[%s800 + $0x8] sm:$0xff]
  %v803 = vld [vmem:[%s800 + $0x10] sm:$0xff]
  %v804 = vld [vmem:[%s800 + $0x18] sm:$0xff]
  %805 = vmatprep.subr.mxu0 %v89
  %806 = vmatpush1.msra.mxu0 %v88
  %807 = vmatprep.subr.mxu0 %v85
  %808 = vmatpush1.msra.mxu0 %v84
  %809 = vmatprep.subr.mxu0 %v81
  %810 = vmatpush1.msra.mxu0 %v80
  %811 = vmatprep.subr.mxu0 %v77
  %812 = vmatpush1.msra.mxu0 %v76
  %813 = vmatprep.subr.mxu0 %v73
  %814 = vmatpush1.msra.mxu0 %v72
  %815 = vmatprep.subr.mxu0 %v69
  %816 = vmatpush1.msra.mxu0 %v68
  %817 = vmatprep.subr.mxu0 %v65
  %818 = vmatpush1.msra.mxu0 %v64
  %819 = vmatprep.subr.mxu0 %v61
  %820 = vmatpush1.msra.mxu0 %v60
  %821 = vmatprep.subr.mxu0 %v57
  %822 = vmatpush1.msra.mxu0 %v56
  %823 = vmatprep.subr.mxu0 %v53
  %824 = vmatpush1.msra.mxu0 %v52
  %825 = vmatprep.subr.mxu0 %v49
  %826 = vmatpush1.msra.mxu0 %v48
  %827 = vmatprep.subr.mxu0 %v45
  %828 = vmatpush1.msra.mxu0 %v44
  %829 = vmatprep.subr.mxu0 %v41
  %830 = vmatpush1.msra.mxu0 %v40
  %831 = vmatprep.subr.mxu0 %v37
  %832 = vmatpush1.msra.mxu0 %v36
  %833 = vmatprep.subr.mxu0 %v33
  %834 = vmatpush1.msra.mxu0 %v32
  %835 = vmatprep.subr.mxu0 %v29
  %836 = vmatpush1.msra.mxu0 %v28
  %837 = vmatprep.subr.mxu0 0.0
  %838 = vmatpush2.msra.mxu0 0.0
  %839 = vmatprep.subr.mxu0 0.0
  %840 = vmatpush2.msra.mxu0 0.0
  %841 = vmatprep.subr.mxu0 0.0
  %842 = vmatpush2.msra.mxu0 0.0
  %843 = vmatprep.subr.mxu0 0.0
  %844 = vmatpush2.msra.mxu0 0.0
  %845 = vmatprep.subr.mxu0 0.0
  %846 = vmatpush2.msra.mxu0 0.0
  %847 = vmatprep.subr.mxu0 0.0
  %848 = vmatpush2.msra.mxu0 0.0
  %849 = vmatprep.subr.mxu0 0.0
  %850 = vmatpush2.msra.mxu0 0.0
  %851 = vmatprep.subr.mxu0 0.0
  %852 = vmatpush2.msra.mxu0 0.0
  %853 = vmatprep.subr.mxu0 0.0
  %854 = vmatpush2.msra.mxu0 0.0
  %855 = vmatprep.subr.mxu0 0.0
  %856 = vmatpush2.msra.mxu0 0.0
  %857 = vmatprep.subr.mxu0 0.0
  %858 = vmatpush2.msra.mxu0 0.0
  %859 = vmatprep.subr.mxu0 0.0
  %860 = vmatpush2.msra.mxu0 0.0
  %861 = vmatprep.subr.mxu0 0.0
  %862 = vmatpush2.msra.mxu0 0.0
  %863 = vmatprep.subr.mxu0 0.0
  %864 = vmatpush2.msra.mxu0 0.0
  %865 = vmatprep.subr.mxu0 0.0
  %866 = vmatpush2.msra.mxu0 0.0
  %867 = vmatprep.subr.mxu0 0.0
  %868 = vmatpush2.msra.mxu0 0.0
  %869 = vmatprep.mubr.f32.mxu0 0.0
  %870 = vmatmul.mubr.f32.gmra.mxu0 %v797
  %v871 = vpop.f32.mrf.mxu0
  %v872 = vadd.f32 0.0, %v871
  %v873 = vpop.f32.mrf.mxu0
  %v874 = vadd.f32 0.0, %v873
  %875 = vdwg.mxu0
  %876 = vmatprep.subr.mxu0 %v91
  %877 = vmatpush1.msra.mxu0 %v90
  %878 = vmatprep.subr.mxu0 %v87
  %879 = vmatpush1.msra.mxu0 %v86
  %880 = vmatprep.subr.mxu0 %v83
  %881 = vmatpush1.msra.mxu0 %v82
  %882 = vmatprep.subr.mxu0 %v79
  %883 = vmatpush1.msra.mxu0 %v78
  %884 = vmatprep.subr.mxu0 %v75
  %885 = vmatpush1.msra.mxu0 %v74
  %886 = vmatprep.subr.mxu0 %v71
  %887 = vmatpush1.msra.mxu0 %v70
  %888 = vmatprep.subr.mxu0 %v67
  %889 = vmatpush1.msra.mxu0 %v66
  %890 = vmatprep.subr.mxu0 %v63
  %891 = vmatpush1.msra.mxu0 %v62
  %892 = vmatprep.subr.mxu0 %v59
  %893 = vmatpush1.msra.mxu0 %v58
  %894 = vmatprep.subr.mxu0 %v55
  %895 = vmatpush1.msra.mxu0 %v54
  %896 = vmatprep.subr.mxu0 %v51
  %897 = vmatpush1.msra.mxu0 %v50
  %898 = vmatprep.subr.mxu0 %v47
  %899 = vmatpush1.msra.mxu0 %v46
  %900 = vmatprep.subr.mxu0 %v43
  %901 = vmatpush1.msra.mxu0 %v42
  %902 = vmatprep.subr.mxu0 %v39
  %903 = vmatpush1.msra.mxu0 %v38
  %904 = vmatprep.subr.mxu0 %v35
  %905 = vmatpush1.msra.mxu0 %v34
  %906 = vmatprep.subr.mxu0 %v31
  %907 = vmatpush1.msra.mxu0 %v30
  %908 = vmatprep.subr.mxu0 0.0
  %909 = vmatpush2.msra.mxu0 0.0
  %910 = vmatprep.subr.mxu0 0.0
  %911 = vmatpush2.msra.mxu0 0.0
  %912 = vmatprep.subr.mxu0 0.0
  %913 = vmatpush2.msra.mxu0 0.0
  %914 = vmatprep.subr.mxu0 0.0
  %915 = vmatpush2.msra.mxu0 0.0
  %916 = vmatprep.subr.mxu0 0.0
  %917 = vmatpush2.msra.mxu0 0.0
  %918 = vmatprep.subr.mxu0 0.0
  %919 = vmatpush2.msra.mxu0 0.0
  %920 = vmatprep.subr.mxu0 0.0
  %921 = vmatpush2.msra.mxu0 0.0
  %922 = vmatprep.subr.mxu0 0.0
  %923 = vmatpush2.msra.mxu0 0.0
  %924 = vmatprep.subr.mxu0 0.0
  %925 = vmatpush2.msra.mxu0 0.0
  %926 = vmatprep.subr.mxu0 0.0
  %927 = vmatpush2.msra.mxu0 0.0
  %928 = vmatprep.subr.mxu0 0.0
  %929 = vmatpush2.msra.mxu0 0.0
  %930 = vmatprep.subr.mxu0 0.0
  %931 = vmatpush2.msra.mxu0 0.0
  %932 = vmatprep.subr.mxu0 0.0
  %933 = vmatpush2.msra.mxu0 0.0
  %934 = vmatprep.subr.mxu0 0.0
  %935 = vmatpush2.msra.mxu0 0.0
  %936 = vmatprep.subr.mxu0 0.0
  %937 = vmatpush2.msra.mxu0 0.0
  %938 = vmatprep.subr.mxu0 0.0
  %939 = vmatpush2.msra.mxu0 0.0
  %940 = vmatprep.mubr.f32.mxu0 0.0
  %941 = vmatmul.mubr.f32.gmra.mxu0 %v797
  %v942 = vpop.f32.mrf.mxu0
  %v943 = vadd.f32 0.0, %v942
  %v944 = vpop.f32.mrf.mxu0
  %v945 = vadd.f32 0.0, %v944
  %946 = vdwg.mxu0
  %v947 = vadd.f32 %v801, %v872
  %v948 = vadd.f32 %v802, %v874
  %v949 = vadd.f32 %v803, %v943
  %v950 = vadd.f32 %v804, %v945
  %v951 = vxor.u32 %v947, 2147483648
  %v952 = vmul.f32 %v951, 1.442695
  %v953 = vpow.pop %v952
  %v954 = vadd.f32 %v953, 1.0
  %v955 = vrcp.pop %v954
  %v956 = vmul.f32 1.0, %v955
  %v957 = vxor.u32 %v948, 2147483648
  %v958 = vmul.f32 %v957, 1.442695
  %v959 = vpow.pop %v958
  %v960 = vadd.f32 %v959, 1.0
  %v961 = vrcp.pop %v960
  %v962 = vmul.f32 1.0, %v961
  %v963 = vtanh.pop %v949
  %v964 = vxor.u32 %v950, 2147483648
  %v965 = vmul.f32 %v964, 1.442695
  %v966 = vpow.pop %v965
  %v967 = vadd.f32 %v966, 1.0
  %v968 = vrcp.pop %v967
  %v969 = vmul.f32 1.0, %v968
  %v970 = vmul.f32 %v962, %v795
  %v971 = vmul.f32 %v956, %v963
  %v972 = vadd.f32 %v970, %v971
  %v973 = vtanh.pop %v972
  %v974 = vmul.f32 %v969, %v973
  %s975 = scalar_lea.vmem %s4, 32
  %976 = vst [vmem:[%s975] sm:$0xff] %v974
  %s977 = scalar_lea.vmem %s0, 160
  %v978 = vld [vmem:[%s977] sm:$0xff]
  %v979 = vld [vmem:[%s977 + $0x8] sm:$0xff]
  %v980 = vld [vmem:[%s977 + $0x10] sm:$0xff]
  %v981 = vld [vmem:[%s977 + $0x18] sm:$0xff]
  %982 = vmatprep.subr.mxu0 %v89
  %983 = vmatpush1.msra.mxu0 %v88
  %984 = vmatprep.subr.mxu0 %v85
  %985 = vmatpush1.msra.mxu0 %v84
  %986 = vmatprep.subr.mxu0 %v81
  %987 = vmatpush1.msra.mxu0 %v80
  %988 = vmatprep.subr.mxu0 %v77
  %989 = vmatpush1.msra.mxu0 %v76
  %990 = vmatprep.subr.mxu0 %v73
  %991 = vmatpush1.msra.mxu0 %v72
  %992 = vmatprep.subr.mxu0 %v69
  %993 = vmatpush1.msra.mxu0 %v68
  %994 = vmatprep.subr.mxu0 %v65
  %995 = vmatpush1.msra.mxu0 %v64
  %996 = vmatprep.subr.mxu0 %v61
  %997 = vmatpush1.msra.mxu0 %v60
  %998 = vmatprep.subr.mxu0 %v57
  %999 = vmatpush1.msra.mxu0 %v56
  %1000 = vmatprep.subr.mxu0 %v53
  %1001 = vmatpush1.msra.mxu0 %v52
  %1002 = vmatprep.subr.mxu0 %v49
  %1003 = vmatpush1.msra.mxu0 %v48
  %1004 = vmatprep.subr.mxu0 %v45
  %1005 = vmatpush1.msra.mxu0 %v44
  %1006 = vmatprep.subr.mxu0 %v41
  %1007 = vmatpush1.msra.mxu0 %v40
  %1008 = vmatprep.subr.mxu0 %v37
  %1009 = vmatpush1.msra.mxu0 %v36
  %1010 = vmatprep.subr.mxu0 %v33
  %1011 = vmatpush1.msra.mxu0 %v32
  %1012 = vmatprep.subr.mxu0 %v29
  %1013 = vmatpush1.msra.mxu0 %v28
  %1014 = vmatprep.subr.mxu0 0.0
  %1015 = vmatpush2.msra.mxu0 0.0
  %1016 = vmatprep.subr.mxu0 0.0
  %1017 = vmatpush2.msra.mxu0 0.0
  %1018 = vmatprep.subr.mxu0 0.0
  %1019 = vmatpush2.msra.mxu0 0.0
  %1020 = vmatprep.subr.mxu0 0.0
  %1021 = vmatpush2.msra.mxu0 0.0
  %1022 = vmatprep.subr.mxu0 0.0
  %1023 = vmatpush2.msra.mxu0 0.0
  %1024 = vmatprep.subr.mxu0 0.0
  %1025 = vmatpush2.msra.mxu0 0.0
  %1026 = vmatprep.subr.mxu0 0.0
  %1027 = vmatpush2.msra.mxu0 0.0
  %1028 = vmatprep.subr.mxu0 0.0
  %1029 = vmatpush2.msra.mxu0 0.0
  %1030 = vmatprep.subr.mxu0 0.0
  %1031 = vmatpush2.msra.mxu0 0.0
  %1032 = vmatprep.subr.mxu0 0.0
  %1033 = vmatpush2.msra.mxu0 0.0
  %1034 = vmatprep.subr.mxu0 0.0
  %1035 = vmatpush2.msra.mxu0 0.0
  %1036 = vmatprep.subr.mxu0 0.0
  %1037 = vmatpush2.msra.mxu0 0.0
  %1038 = vmatprep.subr.mxu0 0.0
  %1039 = vmatpush2.msra.mxu0 0.0
  %1040 = vmatprep.subr.mxu0 0.0
  %1041 = vmatpush2.msra.mxu0 0.0
  %1042 = vmatprep.subr.mxu0 0.0
  %1043 = vmatpush2.msra.mxu0 0.0
  %1044 = vmatprep.subr.mxu0 0.0
  %1045 = vmatpush2.msra.mxu0 0.0
  %1046 = vmatprep.mubr.f32.mxu0 0.0
  %1047 = vmatmul.mubr.f32.gmra.mxu0 %v974
  %v1048 = vpop.f32.mrf.mxu0
  %v1049 = vadd.f32 0.0, %v1048
  %v1050 = vpop.f32.mrf.mxu0
  %v1051 = vadd.f32 0.0, %v1050
  %1052 = vdwg.mxu0
  %1053 = vmatprep.subr.mxu0 %v91
  %1054 = vmatpush1.msra.mxu0 %v90
  %1055 = vmatprep.subr.mxu0 %v87
  %1056 = vmatpush1.msra.mxu0 %v86
  %1057 = vmatprep.subr.mxu0 %v83
  %1058 = vmatpush1.msra.mxu0 %v82
  %1059 = vmatprep.subr.mxu0 %v79
  %1060 = vmatpush1.msra.mxu0 %v78
  %1061 = vmatprep.subr.mxu0 %v75
  %1062 = vmatpush1.msra.mxu0 %v74
  %1063 = vmatprep.subr.mxu0 %v71
  %1064 = vmatpush1.msra.mxu0 %v70
  %1065 = vmatprep.subr.mxu0 %v67
  %1066 = vmatpush1.msra.mxu0 %v66
  %1067 = vmatprep.subr.mxu0 %v63
  %1068 = vmatpush1.msra.mxu0 %v62
  %1069 = vmatprep.subr.mxu0 %v59
  %1070 = vmatpush1.msra.mxu0 %v58
  %1071 = vmatprep.subr.mxu0 %v55
  %1072 = vmatpush1.msra.mxu0 %v54
  %1073 = vmatprep.subr.mxu0 %v51
  %1074 = vmatpush1.msra.mxu0 %v50
  %1075 = vmatprep.subr.mxu0 %v47
  %1076 = vmatpush1.msra.mxu0 %v46
  %1077 = vmatprep.subr.mxu0 %v43
  %1078 = vmatpush1.msra.mxu0 %v42
  %1079 = vmatprep.subr.mxu0 %v39
  %1080 = vmatpush1.msra.mxu0 %v38
  %1081 = vmatprep.subr.mxu0 %v35
  %1082 = vmatpush1.msra.mxu0 %v34
  %1083 = vmatprep.subr.mxu0 %v31
  %1084 = vmatpush1.msra.mxu0 %v30
  %1085 = vmatprep.subr.mxu0 0.0
  %1086 = vmatpush2.msra.mxu0 0.0
  %1087 = vmatprep.subr.mxu0 0.0
  %1088 = vmatpush2.msra.mxu0 0.0
  %1089 = vmatprep.subr.mxu0 0.0
  %1090 = vmatpush2.msra.mxu0 0.0
  %1091 = vmatprep.subr.mxu0 0.0
  %1092 = vmatpush2.msra.mxu0 0.0
  %1093 = vmatprep.subr.mxu0 0.0
  %1094 = vmatpush2.msra.mxu0 0.0
  %1095 = vmatprep.subr.mxu0 0.0
  %1096 = vmatpush2.msra.mxu0 0.0
  %1097 = vmatprep.subr.mxu0 0.0
  %1098 = vmatpush2.msra.mxu0 0.0
  %1099 = vmatprep.subr.mxu0 0.0
  %1100 = vmatpush2.msra.mxu0 0.0
  %1101 = vmatprep.subr.mxu0 0.0
  %1102 = vmatpush2.msra.mxu0 0.0
  %1103 = vmatprep.subr.mxu0 0.0
  %1104 = vmatpush2.msra.mxu0 0.0
  %1105 = vmatprep.subr.mxu0 0.0
  %1106 = vmatpush2.msra.mxu0 0.0
  %1107 = vmatprep.subr.mxu0 0.0
  %1108 = vmatpush2.msra.mxu0 0.0
  %1109 = vmatprep.subr.mxu0 0.0
  %1110 = vmatpush2.msra.mxu0 0.0
  %1111 = vmatprep.subr.mxu0 0.0
  %1112 = vmatpush2.msra.mxu0 0.0
  %1113 = vmatprep.subr.mxu0 0.0
  %1114 = vmatpush2.msra.mxu0 0.0
  %1115 = vmatprep.subr.mxu0 0.0
  %1116 = vmatpush2.msra.mxu0 0.0
  %1117 = vmatprep.mubr.f32.mxu0 0.0
  %1118 = vmatmul.mubr.f32.gmra.mxu0 %v974
  %v1119 = vpop.f32.mrf.mxu0
  %v1120 = vadd.f32 0.0, %v1119
  %v1121 = vpop.f32.mrf.mxu0
  %v1122 = vadd.f32 0.0, %v1121
  %1123 = vdwg.mxu0
  %v1124 = vadd.f32 %v978, %v1049
  %v1125 = vadd.f32 %v979, %v1051
  %v1126 = vadd.f32 %v980, %v1120
  %v1127 = vadd.f32 %v981, %v1122
  %v1128 = vxor.u32 %v1124, 2147483648
  %v1129 = vmul.f32 %v1128, 1.442695
  %v1130 = vpow.pop %v1129
  %v1131 = vadd.f32 %v1130, 1.0
  %v1132 = vrcp.pop %v1131
  %v1133 = vmul.f32 1.0, %v1132
  %v1134 = vxor.u32 %v1125, 2147483648
  %v1135 = vmul.f32 %v1134, 1.442695
  %v1136 = vpow.pop %v1135
  %v1137 = vadd.f32 %v1136, 1.0
  %v1138 = vrcp.pop %v1137
  %v1139 = vmul.f32 1.0, %v1138
  %v1140 = vtanh.pop %v1126
  %v1141 = vxor.u32 %v1127, 2147483648
  %v1142 = vmul.f32 %v1141, 1.442695
  %v1143 = vpow.pop %v1142
  %v1144 = vadd.f32 %v1143, 1.0
  %v1145 = vrcp.pop %v1144
  %v1146 = vmul.f32 1.0, %v1145
  %v1147 = vmul.f32 %v1139, %v972
  %v1148 = vmul.f32 %v1133, %v1140
  %v1149 = vadd.f32 %v1147, %v1148
  %v1150 = vtanh.pop %v1149
  %v1151 = vmul.f32 %v1146, %v1150
  %s1152 = scalar_lea.vmem %s4, 40
  %1153 = vst [vmem:[%s1152] sm:$0xff] %v1151
  %s1154 = scalar_lea.vmem %s0, 192
  %v1155 = vld [vmem:[%s1154] sm:$0xff]
  %v1156 = vld [vmem:[%s1154 + $0x8] sm:$0xff]
  %v1157 = vld [vmem:[%s1154 + $0x10] sm:$0xff]
  %v1158 = vld [vmem:[%s1154 + $0x18] sm:$0xff]
  %1159 = vmatprep.subr.mxu0 %v89
  %1160 = vmatpush1.msra.mxu0 %v88
  %1161 = vmatprep.subr.mxu0 %v85
  %1162 = vmatpush1.msra.mxu0 %v84
  %1163 = vmatprep.subr.mxu0 %v81
  %1164 = vmatpush1.msra.mxu0 %v80
  %1165 = vmatprep.subr.mxu0 %v77
  %1166 = vmatpush1.msra.mxu0 %v76
  %1167 = vmatprep.subr.mxu0 %v73
  %1168 = vmatpush1.msra.mxu0 %v72
  %1169 = vmatprep.subr.mxu0 %v69
  %1170 = vmatpush1.msra.mxu0 %v68
  %1171 = vmatprep.subr.mxu0 %v65
  %1172 = vmatpush1.msra.mxu0 %v64
  %1173 = vmatprep.subr.mxu0 %v61
  %1174 = vmatpush1.msra.mxu0 %v60
  %1175 = vmatprep.subr.mxu0 %v57
  %1176 = vmatpush1.msra.mxu0 %v56
  %1177 = vmatprep.subr.mxu0 %v53
  %1178 = vmatpush1.msra.mxu0 %v52
  %1179 = vmatprep.subr.mxu0 %v49
  %1180 = vmatpush1.msra.mxu0 %v48
  %1181 = vmatprep.subr.mxu0 %v45
  %1182 = vmatpush1.msra.mxu0 %v44
  %1183 = vmatprep.subr.mxu0 %v41
  %1184 = vmatpush1.msra.mxu0 %v40
  %1185 = vmatprep.subr.mxu0 %v37
  %1186 = vmatpush1.msra.mxu0 %v36
  %1187 = vmatprep.subr.mxu0 %v33
  %1188 = vmatpush1.msra.mxu0 %v32
  %1189 = vmatprep.subr.mxu0 %v29
  %1190 = vmatpush1.msra.mxu0 %v28
  %1191 = vmatprep.subr.mxu0 0.0
  %1192 = vmatpush2.msra.mxu0 0.0
  %1193 = vmatprep.subr.mxu0 0.0
  %1194 = vmatpush2.msra.mxu0 0.0
  %1195 = vmatprep.subr.mxu0 0.0
  %1196 = vmatpush2.msra.mxu0 0.0
  %1197 = vmatprep.subr.mxu0 0.0
  %1198 = vmatpush2.msra.mxu0 0.0
  %1199 = vmatprep.subr.mxu0 0.0
  %1200 = vmatpush2.msra.mxu0 0.0
  %1201 = vmatprep.subr.mxu0 0.0
  %1202 = vmatpush2.msra.mxu0 0.0
  %1203 = vmatprep.subr.mxu0 0.0
  %1204 = vmatpush2.msra.mxu0 0.0
  %1205 = vmatprep.subr.mxu0 0.0
  %1206 = vmatpush2.msra.mxu0 0.0
  %1207 = vmatprep.subr.mxu0 0.0
  %1208 = vmatpush2.msra.mxu0 0.0
  %1209 = vmatprep.subr.mxu0 0.0
  %1210 = vmatpush2.msra.mxu0 0.0
  %1211 = vmatprep.subr.mxu0 0.0
  %1212 = vmatpush2.msra.mxu0 0.0
  %1213 = vmatprep.subr.mxu0 0.0
  %1214 = vmatpush2.msra.mxu0 0.0
  %1215 = vmatprep.subr.mxu0 0.0
  %1216 = vmatpush2.msra.mxu0 0.0
  %1217 = vmatprep.subr.mxu0 0.0
  %1218 = vmatpush2.msra.mxu0 0.0
  %1219 = vmatprep.subr.mxu0 0.0
  %1220 = vmatpush2.msra.mxu0 0.0
  %1221 = vmatprep.subr.mxu0 0.0
  %1222 = vmatpush2.msra.mxu0 0.0
  %1223 = vmatprep.mubr.f32.mxu0 0.0
  %1224 = vmatmul.mubr.f32.gmra.mxu0 %v1151
  %v1225 = vpop.f32.mrf.mxu0
  %v1226 = vadd.f32 0.0, %v1225
  %v1227 = vpop.f32.mrf.mxu0
  %v1228 = vadd.f32 0.0, %v1227
  %1229 = vdwg.mxu0
  %1230 = vmatprep.subr.mxu0 %v91
  %1231 = vmatpush1.msra.mxu0 %v90
  %1232 = vmatprep.subr.mxu0 %v87
  %1233 = vmatpush1.msra.mxu0 %v86
  %1234 = vmatprep.subr.mxu0 %v83
  %1235 = vmatpush1.msra.mxu0 %v82
  %1236 = vmatprep.subr.mxu0 %v79
  %1237 = vmatpush1.msra.mxu0 %v78
  %1238 = vmatprep.subr.mxu0 %v75
  %1239 = vmatpush1.msra.mxu0 %v74
  %1240 = vmatprep.subr.mxu0 %v71
  %1241 = vmatpush1.msra.mxu0 %v70
  %1242 = vmatprep.subr.mxu0 %v67
  %1243 = vmatpush1.msra.mxu0 %v66
  %1244 = vmatprep.subr.mxu0 %v63
  %1245 = vmatpush1.msra.mxu0 %v62
  %1246 = vmatprep.subr.mxu0 %v59
  %1247 = vmatpush1.msra.mxu0 %v58
  %1248 = vmatprep.subr.mxu0 %v55
  %1249 = vmatpush1.msra.mxu0 %v54
  %1250 = vmatprep.subr.mxu0 %v51
  %1251 = vmatpush1.msra.mxu0 %v50
  %1252 = vmatprep.subr.mxu0 %v47
  %1253 = vmatpush1.msra.mxu0 %v46
  %1254 = vmatprep.subr.mxu0 %v43
  %1255 = vmatpush1.msra.mxu0 %v42
  %1256 = vmatprep.subr.mxu0 %v39
  %1257 = vmatpush1.msra.mxu0 %v38
  %1258 = vmatprep.subr.mxu0 %v35
  %1259 = vmatpush1.msra.mxu0 %v34
  %1260 = vmatprep.subr.mxu0 %v31
  %1261 = vmatpush1.msra.mxu0 %v30
  %1262 = vmatprep.subr.mxu0 0.0
  %1263 = vmatpush2.msra.mxu0 0.0
  %1264 = vmatprep.subr.mxu0 0.0
  %1265 = vmatpush2.msra.mxu0 0.0
  %1266 = vmatprep.subr.mxu0 0.0
  %1267 = vmatpush2.msra.mxu0 0.0
  %1268 = vmatprep.subr.mxu0 0.0
  %1269 = vmatpush2.msra.mxu0 0.0
  %1270 = vmatprep.subr.mxu0 0.0
  %1271 = vmatpush2.msra.mxu0 0.0
  %1272 = vmatprep.subr.mxu0 0.0
  %1273 = vmatpush2.msra.mxu0 0.0
  %1274 = vmatprep.subr.mxu0 0.0
  %1275 = vmatpush2.msra.mxu0 0.0
  %1276 = vmatprep.subr.mxu0 0.0
  %1277 = vmatpush2.msra.mxu0 0.0
  %1278 = vmatprep.subr.mxu0 0.0
  %1279 = vmatpush2.msra.mxu0 0.0
  %1280 = vmatprep.subr.mxu0 0.0
  %1281 = vmatpush2.msra.mxu0 0.0
  %1282 = vmatprep.subr.mxu0 0.0
  %1283 = vmatpush2.msra.mxu0 0.0
  %1284 = vmatprep.subr.mxu0 0.0
  %1285 = vmatpush2.msra.mxu0 0.0
  %1286 = vmatprep.subr.mxu0 0.0
  %1287 = vmatpush2.msra.mxu0 0.0
  %1288 = vmatprep.subr.mxu0 0.0
  %1289 = vmatpush2.msra.mxu0 0.0
  %1290 = vmatprep.subr.mxu0 0.0
  %1291 = vmatpush2.msra.mxu0 0.0
  %1292 = vmatprep.subr.mxu0 0.0
  %1293 = vmatpush2.msra.mxu0 0.0
  %1294 = vmatprep.mubr.f32.mxu0 0.0
  %1295 = vmatmul.mubr.f32.gmra.mxu0 %v1151
  %v1296 = vpop.f32.mrf.mxu0
  %v1297 = vadd.f32 0.0, %v1296
  %v1298 = vpop.f32.mrf.mxu0
  %v1299 = vadd.f32 0.0, %v1298
  %1300 = vdwg.mxu0
  %v1301 = vadd.f32 %v1155, %v1226
  %v1302 = vadd.f32 %v1156, %v1228
  %v1303 = vadd.f32 %v1157, %v1297
  %v1304 = vadd.f32 %v1158, %v1299
  %v1305 = vxor.u32 %v1301, 2147483648
  %v1306 = vmul.f32 %v1305, 1.442695
  %v1307 = vpow.pop %v1306
  %v1308 = vadd.f32 %v1307, 1.0
  %v1309 = vrcp.pop %v1308
  %v1310 = vmul.f32 1.0, %v1309
  %v1311 = vxor.u32 %v1302, 2147483648
  %v1312 = vmul.f32 %v1311, 1.442695
  %v1313 = vpow.pop %v1312
  %v1314 = vadd.f32 %v1313, 1.0
  %v1315 = vrcp.pop %v1314
  %v1316 = vmul.f32 1.0, %v1315
  %v1317 = vtanh.pop %v1303
  %v1318 = vxor.u32 %v1304, 2147483648
  %v1319 = vmul.f32 %v1318, 1.442695
  %v1320 = vpow.pop %v1319
  %v1321 = vadd.f32 %v1320, 1.0
  %v1322 = vrcp.pop %v1321
  %v1323 = vmul.f32 1.0, %v1322
  %v1324 = vmul.f32 %v1316, %v1149
  %v1325 = vmul.f32 %v1310, %v1317
  %v1326 = vadd.f32 %v1324, %v1325
  %v1327 = vtanh.pop %v1326
  %v1328 = vmul.f32 %v1323, %v1327
  %s1329 = scalar_lea.vmem %s4, 48
  %1330 = vst [vmem:[%s1329] sm:$0xff] %v1328
  %s1331 = scalar_lea.vmem %s0, 224
  %v1332 = vld [vmem:[%s1331] sm:$0xff]
  %v1333 = vld [vmem:[%s1331 + $0x8] sm:$0xff]
  %v1334 = vld [vmem:[%s1331 + $0x10] sm:$0xff]
  %v1335 = vld [vmem:[%s1331 + $0x18] sm:$0xff]
  %1336 = vmatprep.subr.mxu0 %v89
  %1337 = vmatpush1.msra.mxu0 %v88
  %1338 = vmatprep.subr.mxu0 %v85
  %1339 = vmatpush1.msra.mxu0 %v84
  %1340 = vmatprep.subr.mxu0 %v81
  %1341 = vmatpush1.msra.mxu0 %v80
  %1342 = vmatprep.subr.mxu0 %v77
  %1343 = vmatpush1.msra.mxu0 %v76
  %1344 = vmatprep.subr.mxu0 %v73
  %1345 = vmatpush1.msra.mxu0 %v72
  %1346 = vmatprep.subr.mxu0 %v69
  %1347 = vmatpush1.msra.mxu0 %v68
  %1348 = vmatprep.subr.mxu0 %v65
  %1349 = vmatpush1.msra.mxu0 %v64
  %1350 = vmatprep.subr.mxu0 %v61
  %1351 = vmatpush1.msra.mxu0 %v60
  %1352 = vmatprep.subr.mxu0 %v57
  %1353 = vmatpush1.msra.mxu0 %v56
  %1354 = vmatprep.subr.mxu0 %v53
  %1355 = vmatpush1.msra.mxu0 %v52
  %1356 = vmatprep.subr.mxu0 %v49
  %1357 = vmatpush1.msra.mxu0 %v48
  %1358 = vmatprep.subr.mxu0 %v45
  %1359 = vmatpush1.msra.mxu0 %v44
  %1360 = vmatprep.subr.mxu0 %v41
  %1361 = vmatpush1.msra.mxu0 %v40
  %1362 = vmatprep.subr.mxu0 %v37
  %1363 = vmatpush1.msra.mxu0 %v36
  %1364 = vmatprep.subr.mxu0 %v33
  %1365 = vmatpush1.msra.mxu0 %v32
  %1366 = vmatprep.subr.mxu0 %v29
  %1367 = vmatpush1.msra.mxu0 %v28
  %1368 = vmatprep.subr.mxu0 0.0
  %1369 = vmatpush2.msra.mxu0 0.0
  %1370 = vmatprep.subr.mxu0 0.0
  %1371 = vmatpush2.msra.mxu0 0.0
  %1372 = vmatprep.subr.mxu0 0.0
  %1373 = vmatpush2.msra.mxu0 0.0
  %1374 = vmatprep.subr.mxu0 0.0
  %1375 = vmatpush2.msra.mxu0 0.0
  %1376 = vmatprep.subr.mxu0 0.0
  %1377 = vmatpush2.msra.mxu0 0.0
  %1378 = vmatprep.subr.mxu0 0.0
  %1379 = vmatpush2.msra.mxu0 0.0
  %1380 = vmatprep.subr.mxu0 0.0
  %1381 = vmatpush2.msra.mxu0 0.0
  %1382 = vmatprep.subr.mxu0 0.0
  %1383 = vmatpush2.msra.mxu0 0.0
  %1384 = vmatprep.subr.mxu0 0.0
  %1385 = vmatpush2.msra.mxu0 0.0
  %1386 = vmatprep.subr.mxu0 0.0
  %1387 = vmatpush2.msra.mxu0 0.0
  %1388 = vmatprep.subr.mxu0 0.0
  %1389 = vmatpush2.msra.mxu0 0.0
  %1390 = vmatprep.subr.mxu0 0.0
  %1391 = vmatpush2.msra.mxu0 0.0
  %1392 = vmatprep.subr.mxu0 0.0
  %1393 = vmatpush2.msra.mxu0 0.0
  %1394 = vmatprep.subr.mxu0 0.0
  %1395 = vmatpush2.msra.mxu0 0.0
  %1396 = vmatprep.subr.mxu0 0.0
  %1397 = vmatpush2.msra.mxu0 0.0
  %1398 = vmatprep.subr.mxu0 0.0
  %1399 = vmatpush2.msra.mxu0 0.0
  %1400 = vmatprep.mubr.f32.mxu0 0.0
  %1401 = vmatmul.mubr.f32.gmra.mxu0 %v1328
  %v1402 = vpop.f32.mrf.mxu0
  %v1403 = vadd.f32 0.0, %v1402
  %v1404 = vpop.f32.mrf.mxu0
  %v1405 = vadd.f32 0.0, %v1404
  %1406 = vdwg.mxu0
  %1407 = vmatprep.subr.mxu0 %v91
  %1408 = vmatpush1.msra.mxu0 %v90
  %1409 = vmatprep.subr.mxu0 %v87
  %1410 = vmatpush1.msra.mxu0 %v86
  %1411 = vmatprep.subr.mxu0 %v83
  %1412 = vmatpush1.msra.mxu0 %v82
  %1413 = vmatprep.subr.mxu0 %v79
  %1414 = vmatpush1.msra.mxu0 %v78
  %1415 = vmatprep.subr.mxu0 %v75
  %1416 = vmatpush1.msra.mxu0 %v74
  %1417 = vmatprep.subr.mxu0 %v71
  %1418 = vmatpush1.msra.mxu0 %v70
  %1419 = vmatprep.subr.mxu0 %v67
  %1420 = vmatpush1.msra.mxu0 %v66
  %1421 = vmatprep.subr.mxu0 %v63
  %1422 = vmatpush1.msra.mxu0 %v62
  %1423 = vmatprep.subr.mxu0 %v59
  %1424 = vmatpush1.msra.mxu0 %v58
  %1425 = vmatprep.subr.mxu0 %v55
  %1426 = vmatpush1.msra.mxu0 %v54
  %1427 = vmatprep.subr.mxu0 %v51
  %1428 = vmatpush1.msra.mxu0 %v50
  %1429 = vmatprep.subr.mxu0 %v47
  %1430 = vmatpush1.msra.mxu0 %v46
  %1431 = vmatprep.subr.mxu0 %v43
  %1432 = vmatpush1.msra.mxu0 %v42
  %1433 = vmatprep.subr.mxu0 %v39
  %1434 = vmatpush1.msra.mxu0 %v38
  %1435 = vmatprep.subr.mxu0 %v35
  %1436 = vmatpush1.msra.mxu0 %v34
  %1437 = vmatprep.subr.mxu0 %v31
  %1438 = vmatpush1.msra.mxu0 %v30
  %1439 = vmatprep.subr.mxu0 0.0
  %1440 = vmatpush2.msra.mxu0 0.0
  %1441 = vmatprep.subr.mxu0 0.0
  %1442 = vmatpush2.msra.mxu0 0.0
  %1443 = vmatprep.subr.mxu0 0.0
  %1444 = vmatpush2.msra.mxu0 0.0
  %1445 = vmatprep.subr.mxu0 0.0
  %1446 = vmatpush2.msra.mxu0 0.0
  %1447 = vmatprep.subr.mxu0 0.0
  %1448 = vmatpush2.msra.mxu0 0.0
  %1449 = vmatprep.subr.mxu0 0.0
  %1450 = vmatpush2.msra.mxu0 0.0
  %1451 = vmatprep.subr.mxu0 0.0
  %1452 = vmatpush2.msra.mxu0 0.0
  %1453 = vmatprep.subr.mxu0 0.0
  %1454 = vmatpush2.msra.mxu0 0.0
  %1455 = vmatprep.subr.mxu0 0.0
  %1456 = vmatpush2.msra.mxu0 0.0
  %1457 = vmatprep.subr.mxu0 0.0
  %1458 = vmatpush2.msra.mxu0 0.0
  %1459 = vmatprep.subr.mxu0 0.0
  %1460 = vmatpush2.msra.mxu0 0.0
  %1461 = vmatprep.subr.mxu0 0.0
  %1462 = vmatpush2.msra.mxu0 0.0
  %1463 = vmatprep.subr.mxu0 0.0
  %1464 = vmatpush2.msra.mxu0 0.0
  %1465 = vmatprep.subr.mxu0 0.0
  %1466 = vmatpush2.msra.mxu0 0.0
  %1467 = vmatprep.subr.mxu0 0.0
  %1468 = vmatpush2.msra.mxu0 0.0
  %1469 = vmatprep.subr.mxu0 0.0
  %1470 = vmatpush2.msra.mxu0 0.0
  %1471 = vmatprep.mubr.f32.mxu0 0.0
  %1472 = vmatmul.mubr.f32.gmra.mxu0 %v1328
  %v1473 = vpop.f32.mrf.mxu0
  %v1474 = vadd.f32 0.0, %v1473
  %v1475 = vpop.f32.mrf.mxu0
  %v1476 = vadd.f32 0.0, %v1475
  %1477 = vdwg.mxu0
  %v1478 = vadd.f32 %v1332, %v1403
  %v1479 = vadd.f32 %v1333, %v1405
  %v1480 = vadd.f32 %v1334, %v1474
  %v1481 = vadd.f32 %v1335, %v1476
  %v1482 = vxor.u32 %v1478, 2147483648
  %v1483 = vmul.f32 %v1482, 1.442695
  %v1484 = vpow.pop %v1483
  %v1485 = vadd.f32 %v1484, 1.0
  %v1486 = vrcp.pop %v1485
  %v1487 = vmul.f32 1.0, %v1486
  %v1488 = vxor.u32 %v1479, 2147483648
  %v1489 = vmul.f32 %v1488, 1.442695
  %v1490 = vpow.pop %v1489
  %v1491 = vadd.f32 %v1490, 1.0
  %v1492 = vrcp.pop %v1491
  %v1493 = vmul.f32 1.0, %v1492
  %v1494 = vtanh.pop %v1480
  %v1495 = vxor.u32 %v1481, 2147483648
  %v1496 = vmul.f32 %v1495, 1.442695
  %v1497 = vpow.pop %v1496
  %v1498 = vadd.f32 %v1497, 1.0
  %v1499 = vrcp.pop %v1498
  %v1500 = vmul.f32 1.0, %v1499
  %v1501 = vmul.f32 %v1493, %v1326
  %v1502 = vmul.f32 %v1487, %v1494
  %v1503 = vadd.f32 %v1501, %v1502
  %v1504 = vtanh.pop %v1503
  %v1505 = vmul.f32 %v1500, %v1504
  %s1506 = scalar_lea.vmem %s4, 56
  %1507 = vst [vmem:[%s1506] sm:$0xff] %v1505
  %1508 = vst [vmem:[%s5] sm:$0xff] %v1505
  %1509 = vst [vmem:[%s6] sm:$0xff] %v1503
  // Predicated region
  $region22: #{rnn_forward.6} parent=0 // pred_check
    _
  $region23: #{rnn_forward.6} parent=0 // pred_check_branch
    %1511 = sbr.rel (0) target = $region25
  $region24: #{rnn_forward.6} parent=0 // pred_region
    _
  $region25: #{rnn_forward.6} parent=0 // pred_fallthru
    _
  // Predicated region
  $region26: #{rnn_forward.6} parent=0 // pred_check
    _
  $region27: #{rnn_forward.6} parent=0 // pred_check_branch
    %1513 = sbr.rel (0) target = $region29
  $region28: #{rnn_forward.6} parent=0 // pred_region
    _
  $region29: #{rnn_forward.6} parent=0 // pred_fallthru
    _
  // Predicated region
  $region30: #{rnn_forward.6} parent=0 // pred_check
    _
  $region31: #{rnn_forward.6} parent=0 // pred_check_branch
    %1515 = sbr.rel (0) target = $region33
  $region32: #{rnn_forward.6} parent=0 // pred_region
    _
  $region33: #{rnn_forward.6} parent=0 // pred_fallthru
    _
  // Predicated region
  $region34: #{rnn_forward.6} parent=0 // pred_check
    _
  $region35: #{rnn_forward.6} parent=0 // pred_check_branch
    %1517 = sbr.rel (0) target = $region37
  $region36: #{rnn_forward.6} parent=0 // pred_region
    _
  $region37: #{rnn_forward.6} parent=0 // pred_fallthru
    _
  // Predicated region
  $region38: #{rnn_forward.6} parent=0 // pred_check
    _
  $region39: #{rnn_forward.6} parent=0 // pred_check_branch
    %1519 = sbr.rel (0) target = $region41
  $region40: #{rnn_forward.6} parent=0 // pred_region
    _
  $region41: #{rnn_forward.6} parent=0 // pred_fallthru
    _
  // Predicated region
  $region42: #{rnn_forward.6} parent=0 // pred_check
    _
  $region43: #{rnn_forward.6} parent=0 // pred_check_branch
    %1521 = sbr.rel (0) target = $region45
  $region44: #{rnn_forward.6} parent=0 // pred_region
    _
  $region45: #{rnn_forward.6} parent=0 // pred_fallthru
    _

</llo_original>
